<compile_context>
chip_gen: v5e
topology: v5e:2x2
jax: 0.10.0
libtpu: 0.0.40
codegen_flags: <defaults>
</compile_context>

<pallas_src>
import math

import jax
import jax.numpy as jnp
from jax.experimental import pallas as pl
from jax.experimental.pallas import tpu as pltpu


# ----------------------------- model hyper-params -----------------------------
B            = 2     # batch
IN_CHANNELS  = 4
TIMESTEPS    = 16
PATCH_SIZE   = 4
EMBED_DIM    = 32
NUM_LAYERS   = 6
NUM_HEADS    = 8
FFN_DIM      = 128
NUM_CLASSES  = 2

NUM_PATCHES  = -(-TIMESTEPS // PATCH_SIZE)      # ceil div = 4
SEQ_LEN      = NUM_PATCHES + 1                  # +1 class token = 5
PATCH_FEAT   = PATCH_SIZE * IN_CHANNELS         # 16
HEAD_DIM     = EMBED_DIM // NUM_HEADS           # 4
LN_EPS       = 1e-5

PAD_SEQ      = 8                                # per-sample rows padded 5 -> 8 (sublane aligned)
ROWS         = B * PAD_SEQ                      # 16 fused token rows (all samples, padded)
HR           = NUM_HEADS * ROWS                 # 128 block-diagonal attention columns
NEG_BIG      = -1.0e30


# ------------------------ packed-parameter buffer layout ------------------------
def _layout(entries):
    offs, off = {}, 0
    for name, nrows in entries:
        offs[name] = off
        off += nrows
    return offs, off


# wide buffer: 128 lanes.  Every block starts on a multiple-of-8 row.
WIDE_OFF, WIDE_ROWS = _layout([
    ("kbd",  EMBED_DIM),                 # (E, HR)   block-diagonal K mask
    ("smp",  ROWS),                      # (ROWS,HR) additive attention-score bias
    ("wqkv", NUM_LAYERS * EMBED_DIM),    # per layer (E, 3E) in lanes 0:96 (Q pre-scaled)
    ("w1",   NUM_LAYERS * EMBED_DIM),    # per layer (E, F)
    ("lvec", NUM_LAYERS * 8),            # per layer 8 bias/LN rows (see pack_params)
    ("wff",  EMBED_DIM),                 # (E, F)
    ("hvec", 8),                         # row0 = bff (F lanes), row1 = bcls (2 lanes)
])
# narrow buffer: 32 lanes (= EMBED_DIM).
NARROW_OFF, NARROW_ROWS = _layout([
    ("patch_w",   PATCH_FEAT),           # (PATCH_FEAT, E)
    ("init_bias", ROWS),                 # (ROWS, E) cls + pos + patch_b, padded rows = 0
    ("vbd",       HR),                   # (HR, E)   block-diagonal V mask
    ("wo",        NUM_LAYERS * EMBED_DIM),   # per layer (E, E)
    ("w2",        NUM_LAYERS * FFN_DIM),     # per layer (F, E)
    ("wcls",      FFN_DIM),              # (F, E) lanes 0:NUM_CLASSES used
])

W_KBD, W_SMP, W_QKV, W_W1, W_LV, W_FF, W_HV = (
    WIDE_OFF[k] for k in ("kbd", "smp", "wqkv", "w1", "lvec", "wff", "hvec"))
N_PW, N_IB, N_VBD, N_WO, N_W2, N_WC = (
    NARROW_OFF[k] for k in ("patch_w", "init_bias", "vbd", "wo", "w2", "wcls"))


# ------------------------------- Pallas kernel --------------------------------
def _layernorm(x, gamma, beta):
    mu = jnp.mean(x, axis=-1, keepdims=True)
    xc = x - mu
    var = jnp.mean(xc * xc, axis=-1, keepdims=True)
    inv = jax.lax.rsqrt(var + LN_EPS)
    return xc * inv * gamma + beta


def transformer_kernel(patches_ref, wide_ref, nar_ref, out_ref):
    f32 = jnp.float32
    E, F3, F = EMBED_DIM, 3 * EMBED_DIM, FFN_DIM

    # ---- patch embedding + class token + positional encoding: 1 matmul + 1 add ----
    patch_w = nar_ref[N_PW:N_PW + PATCH_FEAT, :]          # (PATCH_FEAT, E)
    init_b  = nar_ref[N_IB:N_IB + ROWS, :]                # (ROWS, E)
    x = jnp.dot(patches_ref[...], patch_w, preferred_element_type=f32) + init_b   # (ROWS, E)

    # ---- transformer encoder layers (statically unrolled; post-norm, ReLU FFN) ----
    for l in range(NUM_LAYERS):
        # masks reloaded per layer (vld is cheap; keeps vreg live-ranges short)
        kbd      = wide_ref[W_KBD:W_KBD + E, :]           # (E, HR)
        smp_bias = wide_ref[W_SMP:W_SMP + ROWS, :]        # (ROWS, HR)
        vbd      = nar_ref[N_VBD:N_VBD + HR, :]           # (HR, E)

        wqkv = wide_ref[W_QKV + l * E:W_QKV + (l + 1) * E, 0:F3]       # (E, 3E), Q pre-scaled
        w1   = wide_ref[W_W1 + l * E:W_W1 + (l + 1) * E, :]            # (E, F)
        lv   = wide_ref[W_LV + l * 8:W_LV + (l + 1) * 8, :]            # (8, 128)
        wo   = nar_ref[N_WO + l * E:N_WO + (l + 1) * E, :]             # (E, E)
        w2   = nar_ref[N_W2 + l * F:N_W2 + (l + 1) * F, :]             # (F, E)

        bqkv, bo   = lv[0:1, 0:F3], lv[1:2, 0:E]
        ln1g, ln1b = lv[2:3, 0:E], lv[3:4, 0:E]
        b1, b2     = lv[4:5, :],   lv[5:6, 0:E]
        ln2g, ln2b = lv[6:7, 0:E], lv[7:8, 0:E]

        # fused QKV projection (1/sqrt(head_dim) folded into Q weights/bias)
        qkv = jnp.dot(x, wqkv, preferred_element_type=f32) + bqkv      # (ROWS, 3E)
        q, k, v = qkv[:, 0:E], qkv[:, E:2 * E], qkv[:, 2 * E:F3]

        # all heads & all samples in two MXU matmuls via block-diagonal K / V
        k_bd = jnp.tile(k.T, (1, NUM_HEADS)) * kbd                     # (E, HR)
        s = jnp.dot(q, k_bd, preferred_element_type=f32) + smp_bias    # (ROWS, HR)
        # per-row max cancels inside each per-(head,sample) normalization block
        p = jnp.exp(s - jnp.max(s, axis=-1, keepdims=True))

        v_bd = jnp.tile(v, (NUM_HEADS, 1)) * vbd                       # (HR, E)
        pv = jnp.dot(p, jnp.concatenate([v_bd, vbd], axis=1),          # fused attn + denom
                     preferred_element_type=f32)                       # (ROWS, 2E)
        attn = pv[:, 0:E] / pv[:, E:2 * E]                             # exact softmax normalization

        attn = jnp.dot(attn, wo, preferred_element_type=f32) + bo
        # TODO(synk): dropout omitted (inference / eval semantics of nn.Dropout)
        x = _layernorm(x + attn, ln1g, ln1b)

        # --- feed-forward block ---
        h = jnp.maximum(jnp.dot(x, w1, preferred_element_type=f32) + b1, 0.0)
        h = jnp.dot(h, w2, preferred_element_type=f32) + b2
        x = _layernorm(x + h, ln2g, ln2b)

    # ---- MLP head on ALL rows (lane-dense, no in-kernel row gather) ----
    wff  = wide_ref[W_FF:W_FF + E, :]                                   # (E, F)
    hv   = wide_ref[W_HV:W_HV + 8, :]                                   # (8, 128)
    wcls = nar_ref[N_WC:N_WC + FFN_DIM, :]                              # (F, E) lanes 0:2 used

    hid = jnp.dot(x, wff, preferred_element_type=f32) + hv[0:1, :]      # (ROWS, F)
    logits = jnp.dot(hid, wcls, preferred_element_type=f32) + hv[1:2, 0:E]   # (ROWS, E)
    out_ref[...] = logits[:, 0:NUM_CLASSES]


# ---------------------------------- wrapper ------------------------------------
@jax.jit
def time_series_transformer(x, wide, narrow):
    # x: (B, in_channels, timesteps) float32
    b, c, t = x.shape
    assert (b, c, t) == (B, IN_CHANNELS, TIMESTEPS)

    # layout glue: non-overlapping patches, flattened (channel, within-patch time), placed
    # into the 8-row-per-sample padded layout (row 0 = class token slot, rows 1..4 =
    # patches, rows 5..7 = padding that is excluded from attention by the score bias).
    # NOTE: must match Conv1d weight.reshape(E, C*K).T if real PyTorch weights are loaded.
    patches = (x.reshape(b, c, NUM_PATCHES, PATCH_SIZE)
                 .transpose(0, 2, 1, 3)
                 .reshape(b, NUM_PATCHES, PATCH_FEAT))
    patches_pad = jnp.zeros((b, PAD_SEQ, PATCH_FEAT), jnp.float32)
    patches_pad = patches_pad.at[:, 1:1 + NUM_PATCHES, :].set(patches)
    patches_pad = patches_pad.reshape(ROWS, PATCH_FEAT)

    # Single kernel invocation, no grid: the whole packed working set (<0.5 MiB) is DMA'd
    # into VMEM exactly once via 3 contiguous copies (patches + 2 parameter buffers).
    # TODO(synk): for large B add a leading "parallel" batch-block grid axis so v7x's two
    # TensorCores both get work; unnecessary (and counter-productive) at B=2.
    vmem = pl.BlockSpec(memory_space=pltpu.MemorySpace.VMEM)
    out_all = pl.pallas_call(
        transformer_kernel,
        out_shape=jax.ShapeDtypeStruct((ROWS, NUM_CLASSES), jnp.float32),
        in_specs=[vmem, vmem, vmem],
        out_specs=vmem,
    )(patches_pad, wide, narrow)

    # class-token row of each sample (rows 0, 8, ...)
    return out_all[0::PAD_SEQ, :]


# --------------------------- host-side parameter packing ---------------------------
def pack_params(p):
    """Pack natural-shaped params into the two contiguous VMEM buffers."""
    f32 = jnp.float32
    scale = 1.0 / math.sqrt(HEAD_DIM)

    # fold 1/sqrt(head_dim) into the Q columns of the fused QKV projection
    wqkv = p["wqkv"].at[:, :, 0:EMBED_DIM].multiply(scale)     # (L, E, 3E)
    bqkv = p["bqkv"].at[:, 0:EMBED_DIM].multiply(scale)        # (L, 3E)

    # init bias in padded layout: row 0 = cls + pos[0]; rows 1..4 = pos[1..4] + patch_b
    ib = jnp.zeros((B, PAD_SEQ, EMBED_DIM), f32)
    ib = ib.at[:, 0, :].set(p["cls"][0] + p["pos"][0])
    ib = ib.at[:, 1:1 + NUM_PATCHES, :].set(p["pos"][1:SEQ_LEN] + p["patch_b"][0])
    init_bias = ib.reshape(ROWS, EMBED_DIM)

    # block-diagonal attention masks (precomputed; all divides are host-side)
    e_idx = jnp.arange(EMBED_DIM)
    c_idx = jnp.arange(HR)
    r_idx = jnp.arange(ROWS)
    kbd = (e_idx[:, None] // HEAD_DIM == c_idx[None, :] // ROWS).astype(f32)      # (E, HR)
    key_row = c_idx % ROWS
    valid_key = (key_row % PAD_SEQ) < SEQ_LEN
    same_sample = (r_idx[:, None] // PAD_SEQ) == (key_row[None, :] // PAD_SEQ)
    smp_bias = jnp.where(same_sample & valid_key[None, :], 0.0, NEG_BIG).astype(f32)  # (ROWS, HR)
    vbd = (c_idx[:, None] // ROWS == e_idx[None, :] // HEAD_DIM).astype(f32)      # (HR, E)

    L, E, F = NUM_LAYERS, EMBED_DIM, FFN_DIM

    # ---- wide buffer (128 lanes) ----
    wide = jnp.zeros((WIDE_ROWS, 128), f32)
    wide = wide.at[W_KBD:W_KBD + E, :].set(kbd)
    wide = wide.at[W_SMP:W_SMP + ROWS, :].set(smp_bias)
    wide = wide.at[W_QKV:W_QKV + L * E, 0:3 * E].set(wqkv.reshape(L * E, 3 * E))
    wide = wide.at[W_W1:W_W1 + L * E, :].set(p["w1"].reshape(L * E, F))
    lvec = jnp.zeros((L, 8, 128), f32)
    lvec = lvec.at[:, 0, 0:3 * E].set(bqkv)
    lvec = lvec.at[:, 1, 0:E].set(p["bo"])
    lvec = lvec.at[:, 2, 0:E].set(p["ln1_g"])
    lvec = lvec.at[:, 3, 0:E].set(p["ln1_b"])
    lvec = lvec.at[:, 4, 0:F].set(p["b1"])
    lvec = lvec.at[:, 5, 0:E].set(p["b2"])
    lvec = lvec.at[:, 6, 0:E].set(p["ln2_g"])
    lvec = lvec.at[:, 7, 0:E].set(p["ln2_b"])
    wide = wide.at[W_LV:W_LV + L * 8, :].set(lvec.reshape(L * 8, 128))
    wide = wide.at[W_FF:W_FF + E, :].set(p["wff"])
    hvec = jnp.zeros((8, 128), f32)
    hvec = hvec.at[0, 0:F].set(p["bff"][0])
    hvec = hvec.at[1, 0:NUM_CLASSES].set(p["bcls"][0])
    wide = wide.at[W_HV:W_HV + 8, :].set(hvec)

    # ---- narrow buffer (32 lanes) ----
    nar = jnp.zeros((NARROW_ROWS, E), f32)
    nar = nar.at[N_PW:N_PW + PATCH_FEAT, :].set(p["patch_w"])
    nar = nar.at[N_IB:N_IB + ROWS, :].set(init_bias)
    nar = nar.at[N_VBD:N_VBD + HR, :].set(vbd)
    nar = nar.at[N_WO:N_WO + L * E, :].set(p["wo"].reshape(L * E, E))
    nar = nar.at[N_W2:N_W2 + L * F, :].set(p["w2"].reshape(L * F, E))
    nar = nar.at[N_WC:N_WC + F, 0:NUM_CLASSES].set(p["wcls"])
    return wide, nar


# ----------------------------- deterministic params -----------------------------
def make_params(seed=0):
    key = jax.random.PRNGKey(seed)
    ks = iter(jax.random.split(key, 64))

    def rnd(shape, s=0.05):
        return jax.random.normal(next(ks), shape, dtype=jnp.float32) * s

    # fixed sinusoidal positional encoding over SEQ_LEN positions
    position = jnp.arange(SEQ_LEN, dtype=jnp.float32)[:, None]
    div_term = jnp.exp(
        jnp.arange(0, EMBED_DIM, 2, dtype=jnp.float32) * (-math.log(10000.0) / EMBED_DIM))
    pe = jnp.zeros((SEQ_LEN, EMBED_DIM), dtype=jnp.float32)
    pe = pe.at[:, 0::2].set(jnp.sin(position * div_term))
    pe = pe.at[:, 1::2].set(jnp.cos(position * div_term))

    L, E, F = NUM_LAYERS, EMBED_DIM, FFN_DIM
    return {
        "patch_w": rnd((PATCH_FEAT, E)),
        "patch_b": rnd((1, E)),
        "cls":     rnd((1, E)),
        "pos":     pe,
        "wqkv":    rnd((L, E, 3 * E)),
        "bqkv":    rnd((L, 3 * E)),
        "wo":      rnd((L, E, E)),
        "bo":      rnd((L, E)),
        "ln1_g":   jnp.ones((L, E), jnp.float32),
        "ln1_b":   jnp.zeros((L, E), jnp.float32),
        "w1":      rnd((L, E, F)),
        "b1":      rnd((L, F)),
        "w2":      rnd((L, F, E)),
        "b2":      rnd((L, E)),
        "ln2_g":   jnp.ones((L, E), jnp.float32),
        "ln2_b":   jnp.zeros((L, E), jnp.float32),
        "wff":     rnd((E, F)),
        "bff":     rnd((1, F)),
        "wcls":    rnd((F, NUM_CLASSES)),
        "bcls":    rnd((1, NUM_CLASSES)),
    }


if __name__ == "__main__":
    key = jax.random.PRNGKey(0)
    x = jax.random.normal(key, (B, IN_CHANNELS, TIMESTEPS), dtype=jnp.float32)
    params = make_params(seed=0)
    wide, narrow = pack_params(params)

    out = time_series_transformer(x, wide, narrow)
    out = jax.block_until_ready(out)
    assert out.shape == (B, NUM_CLASSES) and out.dtype == jnp.float32
    assert bool(jnp.all(jnp.isfinite(out)))
    print("KERNEL_OK")
</pallas_src>

<mosaic_0001>
module attributes {stable_mosaic.version = 11 : i64} {
  func.func @transformer_kernel(%arg0: memref<16x16xf32, #tpu.memory_space<vmem>>, %arg1: memref<520x128xf32, #tpu.memory_space<vmem>>, %arg2: memref<1248x32xf32, #tpu.memory_space<vmem>>, %arg3: memref<16x2xf32, #tpu.memory_space<vmem>>) attributes {dimension_semantics = [], scalar_prefetch = 0 : i64, scratch_operands = 0 : i64, tpu.core_type = #tpu.core_type<tc>} {
    %c0 = arith.constant 0 : index
    %c0_0 = arith.constant 0 : index
    %0 = vector.load %arg2[%c0, %c0_0] : memref<1248x32xf32, #tpu.memory_space<vmem>>, vector<16x32xf32>
    %c16 = arith.constant 16 : index
    %c0_1 = arith.constant 0 : index
    %1 = vector.load %arg2[%c16, %c0_1] : memref<1248x32xf32, #tpu.memory_space<vmem>>, vector<16x32xf32>
    %c0_2 = arith.constant 0 : index
    %c0_3 = arith.constant 0 : index
    %2 = vector.load %arg0[%c0_2, %c0_3] : memref<16x16xf32, #tpu.memory_space<vmem>>, vector<16x16xf32>
    %cst = arith.constant dense<0.000000e+00> : vector<16x32xf32>
    %3 = tpu.matmul %2, %0, %cst {dimension_numbers = #tpu.dot_dimension_numbers<[1], [0], [0], [1], [0, 0, 1, 1], [], []>} : vector<16x16xf32>, vector<16x32xf32>, vector<16x32xf32> -> vector<16x32xf32>
    %4 = arith.addf %3, %1 : vector<16x32xf32>
    %c0_4 = arith.constant 0 : index
    %c0_5 = arith.constant 0 : index
    %5 = vector.load %arg1[%c0_4, %c0_5] : memref<520x128xf32, #tpu.memory_space<vmem>>, vector<32x128xf32>
    %c32 = arith.constant 32 : index
    %c0_6 = arith.constant 0 : index
    %6 = vector.load %arg1[%c32, %c0_6] : memref<520x128xf32, #tpu.memory_space<vmem>>, vector<16x128xf32>
    %c32_7 = arith.constant 32 : index
    %c0_8 = arith.constant 0 : index
    %7 = vector.load %arg2[%c32_7, %c0_8] : memref<1248x32xf32, #tpu.memory_space<vmem>>, vector<128x32xf32>
    %c48 = arith.constant 48 : index
    %c0_9 = arith.constant 0 : index
    %8 = vector.load %arg1[%c48, %c0_9] : memref<520x128xf32, #tpu.memory_space<vmem>>, vector<32x96xf32>
    %c240 = arith.constant 240 : index
    %c0_10 = arith.constant 0 : index
    %9 = vector.load %arg1[%c240, %c0_10] : memref<520x128xf32, #tpu.memory_space<vmem>>, vector<32x128xf32>
    %c432 = arith.constant 432 : index
    %c0_11 = arith.constant 0 : index
    %10 = vector.load %arg1[%c432, %c0_11] : memref<520x128xf32, #tpu.memory_space<vmem>>, vector<8x128xf32>
    %c160 = arith.constant 160 : index
    %c0_12 = arith.constant 0 : index
    %11 = vector.load %arg2[%c160, %c0_12] : memref<1248x32xf32, #tpu.memory_space<vmem>>, vector<32x32xf32>
    %c352 = arith.constant 352 : index
    %c0_13 = arith.constant 0 : index
    %12 = vector.load %arg2[%c352, %c0_13] : memref<1248x32xf32, #tpu.memory_space<vmem>>, vector<128x32xf32>
    %13 = vector.extract_strided_slice %10 {offsets = [0, 0], sizes = [1, 96], strides = [1, 1]} : vector<8x128xf32> to vector<1x96xf32>
    %14 = vector.extract_strided_slice %10 {offsets = [1, 0], sizes = [1, 32], strides = [1, 1]} : vector<8x128xf32> to vector<1x32xf32>
    %15 = vector.extract_strided_slice %10 {offsets = [2, 0], sizes = [1, 32], strides = [1, 1]} : vector<8x128xf32> to vector<1x32xf32>
    %16 = vector.extract_strided_slice %10 {offsets = [3, 0], sizes = [1, 32], strides = [1, 1]} : vector<8x128xf32> to vector<1x32xf32>
    %17 = vector.extract_strided_slice %10 {offsets = [4, 0], sizes = [1, 128], strides = [1, 1]} : vector<8x128xf32> to vector<1x128xf32>
    %18 = vector.extract_strided_slice %10 {offsets = [5, 0], sizes = [1, 32], strides = [1, 1]} : vector<8x128xf32> to vector<1x32xf32>
    %19 = vector.extract_strided_slice %10 {offsets = [6, 0], sizes = [1, 32], strides = [1, 1]} : vector<8x128xf32> to vector<1x32xf32>
    %20 = vector.extract_strided_slice %10 {offsets = [7, 0], sizes = [1, 32], strides = [1, 1]} : vector<8x128xf32> to vector<1x32xf32>
    %cst_14 = arith.constant dense<0.000000e+00> : vector<16x96xf32>
    %21 = tpu.matmul %4, %8, %cst_14 {dimension_numbers = #tpu.dot_dimension_numbers<[1], [0], [0], [1], [0, 0, 1, 1], [], []>} : vector<16x32xf32>, vector<32x96xf32>, vector<16x96xf32> -> vector<16x96xf32>
    %22 = vector.broadcast %13 : vector<1x96xf32> to vector<16x96xf32>
    %23 = arith.addf %21, %22 : vector<16x96xf32>
    %24 = vector.extract_strided_slice %23 {offsets = [0, 0], sizes = [16, 32], strides = [1, 1]} : vector<16x96xf32> to vector<16x32xf32>
    %25 = vector.extract_strided_slice %23 {offsets = [0, 32], sizes = [16, 32], strides = [1, 1]} : vector<16x96xf32> to vector<16x32xf32>
    %26 = vector.extract_strided_slice %23 {offsets = [0, 64], sizes = [16, 32], strides = [1, 1]} : vector<16x96xf32> to vector<16x32xf32>
    %27 = tpu.transpose %25, [1, 0] : vector<16x32xf32> -> vector<32x16xf32>
    %28 = tpu.concatenate %27, %27, %27, %27, %27, %27, %27, %27 in 1 : vector<32x16xf32>, vector<32x16xf32>, vector<32x16xf32>, vector<32x16xf32>, vector<32x16xf32>, vector<32x16xf32>, vector<32x16xf32>, vector<32x16xf32> -> vector<32x128xf32>
    %29 = arith.mulf %28, %5 : vector<32x128xf32>
    %cst_15 = arith.constant dense<0.000000e+00> : vector<16x128xf32>
    %30 = tpu.matmul %24, %29, %cst_15 {dimension_numbers = #tpu.dot_dimension_numbers<[1], [0], [0], [1], [0, 0, 1, 1], [], []>} : vector<16x32xf32>, vector<32x128xf32>, vector<16x128xf32> -> vector<16x128xf32>
    %31 = arith.addf %30, %6 : vector<16x128xf32>
    %cst_16 = arith.constant dense<0xFF800000> : vector<16xf32>
    %32 = vector.multi_reduction <maximumf>, %31, %cst_16 [1] : vector<16x128xf32> to vector<16xf32>
    %33 = vector.shape_cast %32 : vector<16xf32> to vector<16x1xf32>
    %34 = vector.broadcast %33 : vector<16x1xf32> to vector<16x128xf32>
    %35 = arith.subf %31, %34 : vector<16x128xf32>
    %36 = math.exp %35 : vector<16x128xf32>
    %37 = tpu.concatenate %26, %26, %26, %26, %26, %26, %26, %26 in 0 : vector<16x32xf32>, vector<16x32xf32>, vector<16x32xf32>, vector<16x32xf32>, vector<16x32xf32>, vector<16x32xf32>, vector<16x32xf32>, vector<16x32xf32> -> vector<128x32xf32>
    %38 = arith.mulf %37, %7 : vector<128x32xf32>
    %39 = tpu.concatenate %38, %7 in 1 : vector<128x32xf32>, vector<128x32xf32> -> vector<128x64xf32>
    %cst_17 = arith.constant dense<0.000000e+00> : vector<16x64xf32>
    %40 = tpu.matmul %36, %39, %cst_17 {dimension_numbers = #tpu.dot_dimension_numbers<[1], [0], [0], [1], [0, 0, 1, 1], [], []>} : vector<16x128xf32>, vector<128x64xf32>, vector<16x64xf32> -> vector<16x64xf32>
    %41 = vector.extract_strided_slice %40 {offsets = [0, 0], sizes = [16, 32], strides = [1, 1]} : vector<16x64xf32> to vector<16x32xf32>
    %42 = vector.extract_strided_slice %40 {offsets = [0, 32], sizes = [16, 32], strides = [1, 1]} : vector<16x64xf32> to vector<16x32xf32>
    %43 = arith.divf %41, %42 : vector<16x32xf32>
    %cst_18 = arith.constant dense<0.000000e+00> : vector<16x32xf32>
    %44 = tpu.matmul %43, %11, %cst_18 {dimension_numbers = #tpu.dot_dimension_numbers<[1], [0], [0], [1], [0, 0, 1, 1], [], []>} : vector<16x32xf32>, vector<32x32xf32>, vector<16x32xf32> -> vector<16x32xf32>
    %45 = vector.broadcast %14 : vector<1x32xf32> to vector<16x32xf32>
    %46 = arith.addf %44, %45 : vector<16x32xf32>
    %47 = arith.addf %4, %46 : vector<16x32xf32>
    %cst_19 = arith.constant dense<0.000000e+00> : vector<16xf32>
    %48 = vector.multi_reduction <add>, %47, %cst_19 [1] : vector<16x32xf32> to vector<16xf32>
    %49 = vector.shape_cast %48 : vector<16xf32> to vector<16x1xf32>
    %cst_20 = arith.constant 3.200000e+01 : f32
    %50 = vector.broadcast %cst_20 : f32 to vector<16x1xf32>
    %51 = arith.divf %49, %50 : vector<16x1xf32>
    %52 = vector.broadcast %51 : vector<16x1xf32> to vector<16x32xf32>
    %53 = arith.subf %47, %52 : vector<16x32xf32>
    %54 = arith.mulf %53, %53 : vector<16x32xf32>
    %cst_21 = arith.constant dense<0.000000e+00> : vector<16xf32>
    %55 = vector.multi_reduction <add>, %54, %cst_21 [1] : vector<16x32xf32> to vector<16xf32>
    %56 = vector.shape_cast %55 : vector<16xf32> to vector<16x1xf32>
    %cst_22 = arith.constant 3.200000e+01 : f32
    %57 = vector.broadcast %cst_22 : f32 to vector<16x1xf32>
    %58 = arith.divf %56, %57 : vector<16x1xf32>
    %cst_23 = arith.constant 9.99999974E-6 : f32
    %59 = vector.broadcast %cst_23 : f32 to vector<16x1xf32>
    %60 = arith.addf %58, %59 : vector<16x1xf32>
    %61 = math.rsqrt %60 : vector<16x1xf32>
    %62 = vector.broadcast %61 : vector<16x1xf32> to vector<16x32xf32>
    %63 = arith.mulf %53, %62 : vector<16x32xf32>
    %64 = vector.broadcast %15 : vector<1x32xf32> to vector<16x32xf32>
    %65 = arith.mulf %63, %64 : vector<16x32xf32>
    %66 = vector.broadcast %16 : vector<1x32xf32> to vector<16x32xf32>
    %67 = arith.addf %65, %66 : vector<16x32xf32>
    %cst_24 = arith.constant dense<0.000000e+00> : vector<16x128xf32>
    %68 = tpu.matmul %67, %9, %cst_24 {dimension_numbers = #tpu.dot_dimension_numbers<[1], [0], [0], [1], [0, 0, 1, 1], [], []>} : vector<16x32xf32>, vector<32x128xf32>, vector<16x128xf32> -> vector<16x128xf32>
    %69 = vector.broadcast %17 : vector<1x128xf32> to vector<16x128xf32>
    %70 = arith.addf %68, %69 : vector<16x128xf32>
    %cst_25 = arith.constant 0.000000e+00 : f32
    %71 = vector.broadcast %cst_25 : f32 to vector<16x128xf32>
    %72 = arith.maximumf %70, %71 : vector<16x128xf32>
    %cst_26 = arith.constant dense<0.000000e+00> : vector<16x32xf32>
    %73 = tpu.matmul %72, %12, %cst_26 {dimension_numbers = #tpu.dot_dimension_numbers<[1], [0], [0], [1], [0, 0, 1, 1], [], []>} : vector<16x128xf32>, vector<128x32xf32>, vector<16x32xf32> -> vector<16x32xf32>
    %74 = vector.broadcast %18 : vector<1x32xf32> to vector<16x32xf32>
    %75 = arith.addf %73, %74 : vector<16x32xf32>
    %76 = arith.addf %67, %75 : vector<16x32xf32>
    %cst_27 = arith.constant dense<0.000000e+00> : vector<16xf32>
    %77 = vector.multi_reduction <add>, %76, %cst_27 [1] : vector<16x32xf32> to vector<16xf32>
    %78 = vector.shape_cast %77 : vector<16xf32> to vector<16x1xf32>
    %cst_28 = arith.constant 3.200000e+01 : f32
    %79 = vector.broadcast %cst_28 : f32 to vector<16x1xf32>
    %80 = arith.divf %78, %79 : vector<16x1xf32>
    %81 = vector.broadcast %80 : vector<16x1xf32> to vector<16x32xf32>
    %82 = arith.subf %76, %81 : vector<16x32xf32>
    %83 = arith.mulf %82, %82 : vector<16x32xf32>
    %cst_29 = arith.constant dense<0.000000e+00> : vector<16xf32>
    %84 = vector.multi_reduction <add>, %83, %cst_29 [1] : vector<16x32xf32> to vector<16xf32>
    %85 = vector.shape_cast %84 : vector<16xf32> to vector<16x1xf32>
    %cst_30 = arith.constant 3.200000e+01 : f32
    %86 = vector.broadcast %cst_30 : f32 to vector<16x1xf32>
    %87 = arith.divf %85, %86 : vector<16x1xf32>
    %cst_31 = arith.constant 9.99999974E-6 : f32
    %88 = vector.broadcast %cst_31 : f32 to vector<16x1xf32>
    %89 = arith.addf %87, %88 : vector<16x1xf32>
    %90 = math.rsqrt %89 : vector<16x1xf32>
    %91 = vector.broadcast %90 : vector<16x1xf32> to vector<16x32xf32>
    %92 = arith.mulf %82, %91 : vector<16x32xf32>
    %93 = vector.broadcast %19 : vector<1x32xf32> to vector<16x32xf32>
    %94 = arith.mulf %92, %93 : vector<16x32xf32>
    %95 = vector.broadcast %20 : vector<1x32xf32> to vector<16x32xf32>
    %96 = arith.addf %94, %95 : vector<16x32xf32>
    %c0_32 = arith.constant 0 : index
    %c0_33 = arith.constant 0 : index
    %97 = vector.load %arg1[%c0_32, %c0_33] : memref<520x128xf32, #tpu.memory_space<vmem>>, vector<32x128xf32>
    %c32_34 = arith.constant 32 : index
    %c0_35 = arith.constant 0 : index
    %98 = vector.load %arg1[%c32_34, %c0_35] : memref<520x128xf32, #tpu.memory_space<vmem>>, vector<16x128xf32>
    %c32_36 = arith.constant 32 : index
    %c0_37 = arith.constant 0 : index
    %99 = vector.load %arg2[%c32_36, %c0_37] : memref<1248x32xf32, #tpu.memory_space<vmem>>, vector<128x32xf32>
    %c80 = arith.constant 80 : index
    %c0_38 = arith.constant 0 : index
    %100 = vector.load %arg1[%c80, %c0_38] : memref<520x128xf32, #tpu.memory_space<vmem>>, vector<32x96xf32>
    %c272 = arith.constant 272 : index
    %c0_39 = arith.constant 0 : index
    %101 = vector.load %arg1[%c272, %c0_39] : memref<520x128xf32, #tpu.memory_space<vmem>>, vector<32x128xf32>
    %c440 = arith.constant 440 : index
    %c0_40 = arith.constant 0 : index
    %102 = vector.load %arg1[%c440, %c0_40] : memref<520x128xf32, #tpu.memory_space<vmem>>, vector<8x128xf32>
    %c192 = arith.constant 192 : index
    %c0_41 = arith.constant 0 : index
    %103 = vector.load %arg2[%c192, %c0_41] : memref<1248x32xf32, #tpu.memory_space<vmem>>, vector<32x32xf32>
    %c480 = arith.constant 480 : index
    %c0_42 = arith.constant 0 : index
    %104 = vector.load %arg2[%c480, %c0_42] : memref<1248x32xf32, #tpu.memory_space<vmem>>, vector<128x32xf32>
    %105 = vector.extract_strided_slice %102 {offsets = [0, 0], sizes = [1, 96], strides = [1, 1]} : vector<8x128xf32> to vector<1x96xf32>
    %106 = vector.extract_strided_slice %102 {offsets = [1, 0], sizes = [1, 32], strides = [1, 1]} : vector<8x128xf32> to vector<1x32xf32>
    %107 = vector.extract_strided_slice %102 {offsets = [2, 0], sizes = [1, 32], strides = [1, 1]} : vector<8x128xf32> to vector<1x32xf32>
    %108 = vector.extract_strided_slice %102 {offsets = [3, 0], sizes = [1, 32], strides = [1, 1]} : vector<8x128xf32> to vector<1x32xf32>
    %109 = vector.extract_strided_slice %102 {offsets = [4, 0], sizes = [1, 128], strides = [1, 1]} : vector<8x128xf32> to vector<1x128xf32>
    %110 = vector.extract_strided_slice %102 {offsets = [5, 0], sizes = [1, 32], strides = [1, 1]} : vector<8x128xf32> to vector<1x32xf32>
    %111 = vector.extract_strided_slice %102 {offsets = [6, 0], sizes = [1, 32], strides = [1, 1]} : vector<8x128xf32> to vector<1x32xf32>
    %112 = vector.extract_strided_slice %102 {offsets = [7, 0], sizes = [1, 32], strides = [1, 1]} : vector<8x128xf32> to vector<1x32xf32>
    %cst_43 = arith.constant dense<0.000000e+00> : vector<16x96xf32>
    %113 = tpu.matmul %96, %100, %cst_43 {dimension_numbers = #tpu.dot_dimension_numbers<[1], [0], [0], [1], [0, 0, 1, 1], [], []>} : vector<16x32xf32>, vector<32x96xf32>, vector<16x96xf32> -> vector<16x96xf32>
    %114 = vector.broadcast %105 : vector<1x96xf32> to vector<16x96xf32>
    %115 = arith.addf %113, %114 : vector<16x96xf32>
    %116 = vector.extract_strided_slice %115 {offsets = [0, 0], sizes = [16, 32], strides = [1, 1]} : vector<16x96xf32> to vector<16x32xf32>
    %117 = vector.extract_strided_slice %115 {offsets = [0, 32], sizes = [16, 32], strides = [1, 1]} : vector<16x96xf32> to vector<16x32xf32>
    %118 = vector.extract_strided_slice %115 {offsets = [0, 64], sizes = [16, 32], strides = [1, 1]} : vector<16x96xf32> to vector<16x32xf32>
    %119 = tpu.transpose %117, [1, 0] : vector<16x32xf32> -> vector<32x16xf32>
    %120 = tpu.concatenate %119, %119, %119, %119, %119, %119, %119, %119 in 1 : vector<32x16xf32>, vector<32x16xf32>, vector<32x16xf32>, vector<32x16xf32>, vector<32x16xf32>, vector<32x16xf32>, vector<32x16xf32>, vector<32x16xf32> -> vector<32x128xf32>
    %121 = arith.mulf %120, %97 : vector<32x128xf32>
    %cst_44 = arith.constant dense<0.000000e+00> : vector<16x128xf32>
    %122 = tpu.matmul %116, %121, %cst_44 {dimension_numbers = #tpu.dot_dimension_numbers<[1], [0], [0], [1], [0, 0, 1, 1], [], []>} : vector<16x32xf32>, vector<32x128xf32>, vector<16x128xf32> -> vector<16x128xf32>
    %123 = arith.addf %122, %98 : vector<16x128xf32>
    %cst_45 = arith.constant dense<0xFF800000> : vector<16xf32>
    %124 = vector.multi_reduction <maximumf>, %123, %cst_45 [1] : vector<16x128xf32> to vector<16xf32>
    %125 = vector.shape_cast %124 : vector<16xf32> to vector<16x1xf32>
    %126 = vector.broadcast %125 : vector<16x1xf32> to vector<16x128xf32>
    %127 = arith.subf %123, %126 : vector<16x128xf32>
    %128 = math.exp %127 : vector<16x128xf32>
    %129 = tpu.concatenate %118, %118, %118, %118, %118, %118, %118, %118 in 0 : vector<16x32xf32>, vector<16x32xf32>, vector<16x32xf32>, vector<16x32xf32>, vector<16x32xf32>, vector<16x32xf32>, vector<16x32xf32>, vector<16x32xf32> -> vector<128x32xf32>
    %130 = arith.mulf %129, %99 : vector<128x32xf32>
    %131 = tpu.concatenate %130, %99 in 1 : vector<128x32xf32>, vector<128x32xf32> -> vector<128x64xf32>
    %cst_46 = arith.constant dense<0.000000e+00> : vector<16x64xf32>
    %132 = tpu.matmul %128, %131, %cst_46 {dimension_numbers = #tpu.dot_dimension_numbers<[1], [0], [0], [1], [0, 0, 1, 1], [], []>} : vector<16x128xf32>, vector<128x64xf32>, vector<16x64xf32> -> vector<16x64xf32>
    %133 = vector.extract_strided_slice %132 {offsets = [0, 0], sizes = [16, 32], strides = [1, 1]} : vector<16x64xf32> to vector<16x32xf32>
    %134 = vector.extract_strided_slice %132 {offsets = [0, 32], sizes = [16, 32], strides = [1, 1]} : vector<16x64xf32> to vector<16x32xf32>
    %135 = arith.divf %133, %134 : vector<16x32xf32>
    %cst_47 = arith.constant dense<0.000000e+00> : vector<16x32xf32>
    %136 = tpu.matmul %135, %103, %cst_47 {dimension_numbers = #tpu.dot_dimension_numbers<[1], [0], [0], [1], [0, 0, 1, 1], [], []>} : vector<16x32xf32>, vector<32x32xf32>, vector<16x32xf32> -> vector<16x32xf32>
    %137 = vector.broadcast %106 : vector<1x32xf32> to vector<16x32xf32>
    %138 = arith.addf %136, %137 : vector<16x32xf32>
    %139 = arith.addf %96, %138 : vector<16x32xf32>
    %cst_48 = arith.constant dense<0.000000e+00> : vector<16xf32>
    %140 = vector.multi_reduction <add>, %139, %cst_48 [1] : vector<16x32xf32> to vector<16xf32>
    %141 = vector.shape_cast %140 : vector<16xf32> to vector<16x1xf32>
    %cst_49 = arith.constant 3.200000e+01 : f32
    %142 = vector.broadcast %cst_49 : f32 to vector<16x1xf32>
    %143 = arith.divf %141, %142 : vector<16x1xf32>
    %144 = vector.broadcast %143 : vector<16x1xf32> to vector<16x32xf32>
    %145 = arith.subf %139, %144 : vector<16x32xf32>
    %146 = arith.mulf %145, %145 : vector<16x32xf32>
    %cst_50 = arith.constant dense<0.000000e+00> : vector<16xf32>
    %147 = vector.multi_reduction <add>, %146, %cst_50 [1] : vector<16x32xf32> to vector<16xf32>
    %148 = vector.shape_cast %147 : vector<16xf32> to vector<16x1xf32>
    %cst_51 = arith.constant 3.200000e+01 : f32
    %149 = vector.broadcast %cst_51 : f32 to vector<16x1xf32>
    %150 = arith.divf %148, %149 : vector<16x1xf32>
    %cst_52 = arith.constant 9.99999974E-6 : f32
    %151 = vector.broadcast %cst_52 : f32 to vector<16x1xf32>
    %152 = arith.addf %150, %151 : vector<16x1xf32>
    %153 = math.rsqrt %152 : vector<16x1xf32>
    %154 = vector.broadcast %153 : vector<16x1xf32> to vector<16x32xf32>
    %155 = arith.mulf %145, %154 : vector<16x32xf32>
    %156 = vector.broadcast %107 : vector<1x32xf32> to vector<16x32xf32>
    %157 = arith.mulf %155, %156 : vector<16x32xf32>
    %158 = vector.broadcast %108 : vector<1x32xf32> to vector<16x32xf32>
    %159 = arith.addf %157, %158 : vector<16x32xf32>
    %cst_53 = arith.constant dense<0.000000e+00> : vector<16x128xf32>
    %160 = tpu.matmul %159, %101, %cst_53 {dimension_numbers = #tpu.dot_dimension_numbers<[1], [0], [0], [1], [0, 0, 1, 1], [], []>} : vector<16x32xf32>, vector<32x128xf32>, vector<16x128xf32> -> vector<16x128xf32>
    %161 = vector.broadcast %109 : vector<1x128xf32> to vector<16x128xf32>
    %162 = arith.addf %160, %161 : vector<16x128xf32>
    %cst_54 = arith.constant 0.000000e+00 : f32
    %163 = vector.broadcast %cst_54 : f32 to vector<16x128xf32>
    %164 = arith.maximumf %162, %163 : vector<16x128xf32>
    %cst_55 = arith.constant dense<0.000000e+00> : vector<16x32xf32>
    %165 = tpu.matmul %164, %104, %cst_55 {dimension_numbers = #tpu.dot_dimension_numbers<[1], [0], [0], [1], [0, 0, 1, 1], [], []>} : vector<16x128xf32>, vector<128x32xf32>, vector<16x32xf32> -> vector<16x32xf32>
    %166 = vector.broadcast %110 : vector<1x32xf32> to vector<16x32xf32>
    %167 = arith.addf %165, %166 : vector<16x32xf32>
    %168 = arith.addf %159, %167 : vector<16x32xf32>
    %cst_56 = arith.constant dense<0.000000e+00> : vector<16xf32>
    %169 = vector.multi_reduction <add>, %168, %cst_56 [1] : vector<16x32xf32> to vector<16xf32>
    %170 = vector.shape_cast %169 : vector<16xf32> to vector<16x1xf32>
    %cst_57 = arith.constant 3.200000e+01 : f32
    %171 = vector.broadcast %cst_57 : f32 to vector<16x1xf32>
    %172 = arith.divf %170, %171 : vector<16x1xf32>
    %173 = vector.broadcast %172 : vector<16x1xf32> to vector<16x32xf32>
    %174 = arith.subf %168, %173 : vector<16x32xf32>
    %175 = arith.mulf %174, %174 : vector<16x32xf32>
    %cst_58 = arith.constant dense<0.000000e+00> : vector<16xf32>
    %176 = vector.multi_reduction <add>, %175, %cst_58 [1] : vector<16x32xf32> to vector<16xf32>
    %177 = vector.shape_cast %176 : vector<16xf32> to vector<16x1xf32>
    %cst_59 = arith.constant 3.200000e+01 : f32
    %178 = vector.broadcast %cst_59 : f32 to vector<16x1xf32>
    %179 = arith.divf %177, %178 : vector<16x1xf32>
    %cst_60 = arith.constant 9.99999974E-6 : f32
    %180 = vector.broadcast %cst_60 : f32 to vector<16x1xf32>
    %181 = arith.addf %179, %180 : vector<16x1xf32>
    %182 = math.rsqrt %181 : vector<16x1xf32>
    %183 = vector.broadcast %182 : vector<16x1xf32> to vector<16x32xf32>
    %184 = arith.mulf %174, %183 : vector<16x32xf32>
    %185 = vector.broadcast %111 : vector<1x32xf32> to vector<16x32xf32>
    %186 = arith.mulf %184, %185 : vector<16x32xf32>
    %187 = vector.broadcast %112 : vector<1x32xf32> to vector<16x32xf32>
    %188 = arith.addf %186, %187 : vector<16x32xf32>
    %c0_61 = arith.constant 0 : index
    %c0_62 = arith.constant 0 : index
    %189 = vector.load %arg1[%c0_61, %c0_62] : memref<520x128xf32, #tpu.memory_space<vmem>>, vector<32x128xf32>
    %c32_63 = arith.constant 32 : index
    %c0_64 = arith.constant 0 : index
    %190 = vector.load %arg1[%c32_63, %c0_64] : memref<520x128xf32, #tpu.memory_space<vmem>>, vector<16x128xf32>
    %c32_65 = arith.constant 32 : index
    %c0_66 = arith.constant 0 : index
    %191 = vector.load %arg2[%c32_65, %c0_66] : memref<1248x32xf32, #tpu.memory_space<vmem>>, vector<128x32xf32>
    %c112 = arith.constant 112 : index
    %c0_67 = arith.constant 0 : index
    %192 = vector.load %arg1[%c112, %c0_67] : memref<520x128xf32, #tpu.memory_space<vmem>>, vector<32x96xf32>
    %c304 = arith.constant 304 : index
    %c0_68 = arith.constant 0 : index
    %193 = vector.load %arg1[%c304, %c0_68] : memref<520x128xf32, #tpu.memory_space<vmem>>, vector<32x128xf32>
    %c448 = arith.constant 448 : index
    %c0_69 = arith.constant 0 : index
    %194 = vector.load %arg1[%c448, %c0_69] : memref<520x128xf32, #tpu.memory_space<vmem>>, vector<8x128xf32>
    %c224 = arith.constant 224 : index
    %c0_70 = arith.constant 0 : index
    %195 = vector.load %arg2[%c224, %c0_70] : memref<1248x32xf32, #tpu.memory_space<vmem>>, vector<32x32xf32>
    %c608 = arith.constant 608 : index
    %c0_71 = arith.constant 0 : index
    %196 = vector.load %arg2[%c608, %c0_71] : memref<1248x32xf32, #tpu.memory_space<vmem>>, vector<128x32xf32>
    %197 = vector.extract_strided_slice %194 {offsets = [0, 0], sizes = [1, 96], strides = [1, 1]} : vector<8x128xf32> to vector<1x96xf32>
    %198 = vector.extract_strided_slice %194 {offsets = [1, 0], sizes = [1, 32], strides = [1, 1]} : vector<8x128xf32> to vector<1x32xf32>
    %199 = vector.extract_strided_slice %194 {offsets = [2, 0], sizes = [1, 32], strides = [1, 1]} : vector<8x128xf32> to vector<1x32xf32>
    %200 = vector.extract_strided_slice %194 {offsets = [3, 0], sizes = [1, 32], strides = [1, 1]} : vector<8x128xf32> to vector<1x32xf32>
    %201 = vector.extract_strided_slice %194 {offsets = [4, 0], sizes = [1, 128], strides = [1, 1]} : vector<8x128xf32> to vector<1x128xf32>
    %202 = vector.extract_strided_slice %194 {offsets = [5, 0], sizes = [1, 32], strides = [1, 1]} : vector<8x128xf32> to vector<1x32xf32>
    %203 = vector.extract_strided_slice %194 {offsets = [6, 0], sizes = [1, 32], strides = [1, 1]} : vector<8x128xf32> to vector<1x32xf32>
    %204 = vector.extract_strided_slice %194 {offsets = [7, 0], sizes = [1, 32], strides = [1, 1]} : vector<8x128xf32> to vector<1x32xf32>
    %cst_72 = arith.constant dense<0.000000e+00> : vector<16x96xf32>
    %205 = tpu.matmul %188, %192, %cst_72 {dimension_numbers = #tpu.dot_dimension_numbers<[1], [0], [0], [1], [0, 0, 1, 1], [], []>} : vector<16x32xf32>, vector<32x96xf32>, vector<16x96xf32> -> vector<16x96xf32>
    %206 = vector.broadcast %197 : vector<1x96xf32> to vector<16x96xf32>
    %207 = arith.addf %205, %206 : vector<16x96xf32>
    %208 = vector.extract_strided_slice %207 {offsets = [0, 0], sizes = [16, 32], strides = [1, 1]} : vector<16x96xf32> to vector<16x32xf32>
    %209 = vector.extract_strided_slice %207 {offsets = [0, 32], sizes = [16, 32], strides = [1, 1]} : vector<16x96xf32> to vector<16x32xf32>
    %210 = vector.extract_strided_slice %207 {offsets = [0, 64], sizes = [16, 32], strides = [1, 1]} : vector<16x96xf32> to vector<16x32xf32>
    %211 = tpu.transpose %209, [1, 0] : vector<16x32xf32> -> vector<32x16xf32>
    %212 = tpu.concatenate %211, %211, %211, %211, %211, %211, %211, %211 in 1 : vector<32x16xf32>, vector<32x16xf32>, vector<32x16xf32>, vector<32x16xf32>, vector<32x16xf32>, vector<32x16xf32>, vector<32x16xf32>, vector<32x16xf32> -> vector<32x128xf32>
    %213 = arith.mulf %212, %189 : vector<32x128xf32>
    %cst_73 = arith.constant dense<0.000000e+00> : vector<16x128xf32>
    %214 = tpu.matmul %208, %213, %cst_73 {dimension_numbers = #tpu.dot_dimension_numbers<[1], [0], [0], [1], [0, 0, 1, 1], [], []>} : vector<16x32xf32>, vector<32x128xf32>, vector<16x128xf32> -> vector<16x128xf32>
    %215 = arith.addf %214, %190 : vector<16x128xf32>
    %cst_74 = arith.constant dense<0xFF800000> : vector<16xf32>
    %216 = vector.multi_reduction <maximumf>, %215, %cst_74 [1] : vector<16x128xf32> to vector<16xf32>
    %217 = vector.shape_cast %216 : vector<16xf32> to vector<16x1xf32>
    %218 = vector.broadcast %217 : vector<16x1xf32> to vector<16x128xf32>
    %219 = arith.subf %215, %218 : vector<16x128xf32>
    %220 = math.exp %219 : vector<16x128xf32>
    %221 = tpu.concatenate %210, %210, %210, %210, %210, %210, %210, %210 in 0 : vector<16x32xf32>, vector<16x32xf32>, vector<16x32xf32>, vector<16x32xf32>, vector<16x32xf32>, vector<16x32xf32>, vector<16x32xf32>, vector<16x32xf32> -> vector<128x32xf32>
    %222 = arith.mulf %221, %191 : vector<128x32xf32>
    %223 = tpu.concatenate %222, %191 in 1 : vector<128x32xf32>, vector<128x32xf32> -> vector<128x64xf32>
    %cst_75 = arith.constant dense<0.000000e+00> : vector<16x64xf32>
    %224 = tpu.matmul %220, %223, %cst_75 {dimension_numbers = #tpu.dot_dimension_numbers<[1], [0], [0], [1], [0, 0, 1, 1], [], []>} : vector<16x128xf32>, vector<128x64xf32>, vector<16x64xf32> -> vector<16x64xf32>
    %225 = vector.extract_strided_slice %224 {offsets = [0, 0], sizes = [16, 32], strides = [1, 1]} : vector<16x64xf32> to vector<16x32xf32>
    %226 = vector.extract_strided_slice %224 {offsets = [0, 32], sizes = [16, 32], strides = [1, 1]} : vector<16x64xf32> to vector<16x32xf32>
    %227 = arith.divf %225, %226 : vector<16x32xf32>
    %cst_76 = arith.constant dense<0.000000e+00> : vector<16x32xf32>
    %228 = tpu.matmul %227, %195, %cst_76 {dimension_numbers = #tpu.dot_dimension_numbers<[1], [0], [0], [1], [0, 0, 1, 1], [], []>} : vector<16x32xf32>, vector<32x32xf32>, vector<16x32xf32> -> vector<16x32xf32>
    %229 = vector.broadcast %198 : vector<1x32xf32> to vector<16x32xf32>
    %230 = arith.addf %228, %229 : vector<16x32xf32>
    %231 = arith.addf %188, %230 : vector<16x32xf32>
    %cst_77 = arith.constant dense<0.000000e+00> : vector<16xf32>
    %232 = vector.multi_reduction <add>, %231, %cst_77 [1] : vector<16x32xf32> to vector<16xf32>
    %233 = vector.shape_cast %232 : vector<16xf32> to vector<16x1xf32>
    %cst_78 = arith.constant 3.200000e+01 : f32
    %234 = vector.broadcast %cst_78 : f32 to vector<16x1xf32>
    %235 = arith.divf %233, %234 : vector<16x1xf32>
    %236 = vector.broadcast %235 : vector<16x1xf32> to vector<16x32xf32>
    %237 = arith.subf %231, %236 : vector<16x32xf32>
    %238 = arith.mulf %237, %237 : vector<16x32xf32>
    %cst_79 = arith.constant dense<0.000000e+00> : vector<16xf32>
    %239 = vector.multi_reduction <add>, %238, %cst_79 [1] : vector<16x32xf32> to vector<16xf32>
    %240 = vector.shape_cast %239 : vector<16xf32> to vector<16x1xf32>
    %cst_80 = arith.constant 3.200000e+01 : f32
    %241 = vector.broadcast %cst_80 : f32 to vector<16x1xf32>
    %242 = arith.divf %240, %241 : vector<16x1xf32>
    %cst_81 = arith.constant 9.99999974E-6 : f32
    %243 = vector.broadcast %cst_81 : f32 to vector<16x1xf32>
    %244 = arith.addf %242, %243 : vector<16x1xf32>
    %245 = math.rsqrt %244 : vector<16x1xf32>
    %246 = vector.broadcast %245 : vector<16x1xf32> to vector<16x32xf32>
    %247 = arith.mulf %237, %246 : vector<16x32xf32>
    %248 = vector.broadcast %199 : vector<1x32xf32> to vector<16x32xf32>
    %249 = arith.mulf %247, %248 : vector<16x32xf32>
    %250 = vector.broadcast %200 : vector<1x32xf32> to vector<16x32xf32>
    %251 = arith.addf %249, %250 : vector<16x32xf32>
    %cst_82 = arith.constant dense<0.000000e+00> : vector<16x128xf32>
    %252 = tpu.matmul %251, %193, %cst_82 {dimension_numbers = #tpu.dot_dimension_numbers<[1], [0], [0], [1], [0, 0, 1, 1], [], []>} : vector<16x32xf32>, vector<32x128xf32>, vector<16x128xf32> -> vector<16x128xf32>
    %253 = vector.broadcast %201 : vector<1x128xf32> to vector<16x128xf32>
    %254 = arith.addf %252, %253 : vector<16x128xf32>
    %cst_83 = arith.constant 0.000000e+00 : f32
    %255 = vector.broadcast %cst_83 : f32 to vector<16x128xf32>
    %256 = arith.maximumf %254, %255 : vector<16x128xf32>
    %cst_84 = arith.constant dense<0.000000e+00> : vector<16x32xf32>
    %257 = tpu.matmul %256, %196, %cst_84 {dimension_numbers = #tpu.dot_dimension_numbers<[1], [0], [0], [1], [0, 0, 1, 1], [], []>} : vector<16x128xf32>, vector<128x32xf32>, vector<16x32xf32> -> vector<16x32xf32>
    %258 = vector.broadcast %202 : vector<1x32xf32> to vector<16x32xf32>
    %259 = arith.addf %257, %258 : vector<16x32xf32>
    %260 = arith.addf %251, %259 : vector<16x32xf32>
    %cst_85 = arith.constant dense<0.000000e+00> : vector<16xf32>
    %261 = vector.multi_reduction <add>, %260, %cst_85 [1] : vector<16x32xf32> to vector<16xf32>
    %262 = vector.shape_cast %261 : vector<16xf32> to vector<16x1xf32>
    %cst_86 = arith.constant 3.200000e+01 : f32
    %263 = vector.broadcast %cst_86 : f32 to vector<16x1xf32>
    %264 = arith.divf %262, %263 : vector<16x1xf32>
    %265 = vector.broadcast %264 : vector<16x1xf32> to vector<16x32xf32>
    %266 = arith.subf %260, %265 : vector<16x32xf32>
    %267 = arith.mulf %266, %266 : vector<16x32xf32>
    %cst_87 = arith.constant dense<0.000000e+00> : vector<16xf32>
    %268 = vector.multi_reduction <add>, %267, %cst_87 [1] : vector<16x32xf32> to vector<16xf32>
    %269 = vector.shape_cast %268 : vector<16xf32> to vector<16x1xf32>
    %cst_88 = arith.constant 3.200000e+01 : f32
    %270 = vector.broadcast %cst_88 : f32 to vector<16x1xf32>
    %271 = arith.divf %269, %270 : vector<16x1xf32>
    %cst_89 = arith.constant 9.99999974E-6 : f32
    %272 = vector.broadcast %cst_89 : f32 to vector<16x1xf32>
    %273 = arith.addf %271, %272 : vector<16x1xf32>
    %274 = math.rsqrt %273 : vector<16x1xf32>
    %275 = vector.broadcast %274 : vector<16x1xf32> to vector<16x32xf32>
    %276 = arith.mulf %266, %275 : vector<16x32xf32>
    %277 = vector.broadcast %203 : vector<1x32xf32> to vector<16x32xf32>
    %278 = arith.mulf %276, %277 : vector<16x32xf32>
    %279 = vector.broadcast %204 : vector<1x32xf32> to vector<16x32xf32>
    %280 = arith.addf %278, %279 : vector<16x32xf32>
    %c0_90 = arith.constant 0 : index
    %c0_91 = arith.constant 0 : index
    %281 = vector.load %arg1[%c0_90, %c0_91] : memref<520x128xf32, #tpu.memory_space<vmem>>, vector<32x128xf32>
    %c32_92 = arith.constant 32 : index
    %c0_93 = arith.constant 0 : index
    %282 = vector.load %arg1[%c32_92, %c0_93] : memref<520x128xf32, #tpu.memory_space<vmem>>, vector<16x128xf32>
    %c32_94 = arith.constant 32 : index
    %c0_95 = arith.constant 0 : index
    %283 = vector.load %arg2[%c32_94, %c0_95] : memref<1248x32xf32, #tpu.memory_space<vmem>>, vector<128x32xf32>
    %c144 = arith.constant 144 : index
    %c0_96 = arith.constant 0 : index
    %284 = vector.load %arg1[%c144, %c0_96] : memref<520x128xf32, #tpu.memory_space<vmem>>, vector<32x96xf32>
    %c336 = arith.constant 336 : index
    %c0_97 = arith.constant 0 : index
    %285 = vector.load %arg1[%c336, %c0_97] : memref<520x128xf32, #tpu.memory_space<vmem>>, vector<32x128xf32>
    %c456 = arith.constant 456 : index
    %c0_98 = arith.constant 0 : index
    %286 = vector.load %arg1[%c456, %c0_98] : memref<520x128xf32, #tpu.memory_space<vmem>>, vector<8x128xf32>
    %c256 = arith.constant 256 : index
    %c0_99 = arith.constant 0 : index
    %287 = vector.load %arg2[%c256, %c0_99] : memref<1248x32xf32, #tpu.memory_space<vmem>>, vector<32x32xf32>
    %c736 = arith.constant 736 : index
    %c0_100 = arith.constant 0 : index
    %288 = vector.load %arg2[%c736, %c0_100] : memref<1248x32xf32, #tpu.memory_space<vmem>>, vector<128x32xf32>
    %289 = vector.extract_strided_slice %286 {offsets = [0, 0], sizes = [1, 96], strides = [1, 1]} : vector<8x128xf32> to vector<1x96xf32>
    %290 = vector.extract_strided_slice %286 {offsets = [1, 0], sizes = [1, 32], strides = [1, 1]} : vector<8x128xf32> to vector<1x32xf32>
    %291 = vector.extract_strided_slice %286 {offsets = [2, 0], sizes = [1, 32], strides = [1, 1]} : vector<8x128xf32> to vector<1x32xf32>
    %292 = vector.extract_strided_slice %286 {offsets = [3, 0], sizes = [1, 32], strides = [1, 1]} : vector<8x128xf32> to vector<1x32xf32>
    %293 = vector.extract_strided_slice %286 {offsets = [4, 0], sizes = [1, 128], strides = [1, 1]} : vector<8x128xf32> to vector<1x128xf32>
    %294 = vector.extract_strided_slice %286 {offsets = [5, 0], sizes = [1, 32], strides = [1, 1]} : vector<8x128xf32> to vector<1x32xf32>
    %295 = vector.extract_strided_slice %286 {offsets = [6, 0], sizes = [1, 32], strides = [1, 1]} : vector<8x128xf32> to vector<1x32xf32>
    %296 = vector.extract_strided_slice %286 {offsets = [7, 0], sizes = [1, 32], strides = [1, 1]} : vector<8x128xf32> to vector<1x32xf32>
    %cst_101 = arith.constant dense<0.000000e+00> : vector<16x96xf32>
    %297 = tpu.matmul %280, %284, %cst_101 {dimension_numbers = #tpu.dot_dimension_numbers<[1], [0], [0], [1], [0, 0, 1, 1], [], []>} : vector<16x32xf32>, vector<32x96xf32>, vector<16x96xf32> -> vector<16x96xf32>
    %298 = vector.broadcast %289 : vector<1x96xf32> to vector<16x96xf32>
    %299 = arith.addf %297, %298 : vector<16x96xf32>
    %300 = vector.extract_strided_slice %299 {offsets = [0, 0], sizes = [16, 32], strides = [1, 1]} : vector<16x96xf32> to vector<16x32xf32>
    %301 = vector.extract_strided_slice %299 {offsets = [0, 32], sizes = [16, 32], strides = [1, 1]} : vector<16x96xf32> to vector<16x32xf32>
    %302 = vector.extract_strided_slice %299 {offsets = [0, 64], sizes = [16, 32], strides = [1, 1]} : vector<16x96xf32> to vector<16x32xf32>
    %303 = tpu.transpose %301, [1, 0] : vector<16x32xf32> -> vector<32x16xf32>
    %304 = tpu.concatenate %303, %303, %303, %303, %303, %303, %303, %303 in 1 : vector<32x16xf32>, vector<32x16xf32>, vector<32x16xf32>, vector<32x16xf32>, vector<32x16xf32>, vector<32x16xf32>, vector<32x16xf32>, vector<32x16xf32> -> vector<32x128xf32>
    %305 = arith.mulf %304, %281 : vector<32x128xf32>
    %cst_102 = arith.constant dense<0.000000e+00> : vector<16x128xf32>
    %306 = tpu.matmul %300, %305, %cst_102 {dimension_numbers = #tpu.dot_dimension_numbers<[1], [0], [0], [1], [0, 0, 1, 1], [], []>} : vector<16x32xf32>, vector<32x128xf32>, vector<16x128xf32> -> vector<16x128xf32>
    %307 = arith.addf %306, %282 : vector<16x128xf32>
    %cst_103 = arith.constant dense<0xFF800000> : vector<16xf32>
    %308 = vector.multi_reduction <maximumf>, %307, %cst_103 [1] : vector<16x128xf32> to vector<16xf32>
    %309 = vector.shape_cast %308 : vector<16xf32> to vector<16x1xf32>
    %310 = vector.broadcast %309 : vector<16x1xf32> to vector<16x128xf32>
    %311 = arith.subf %307, %310 : vector<16x128xf32>
    %312 = math.exp %311 : vector<16x128xf32>
    %313 = tpu.concatenate %302, %302, %302, %302, %302, %302, %302, %302 in 0 : vector<16x32xf32>, vector<16x32xf32>, vector<16x32xf32>, vector<16x32xf32>, vector<16x32xf32>, vector<16x32xf32>, vector<16x32xf32>, vector<16x32xf32> -> vector<128x32xf32>
    %314 = arith.mulf %313, %283 : vector<128x32xf32>
    %315 = tpu.concatenate %314, %283 in 1 : vector<128x32xf32>, vector<128x32xf32> -> vector<128x64xf32>
    %cst_104 = arith.constant dense<0.000000e+00> : vector<16x64xf32>
    %316 = tpu.matmul %312, %315, %cst_104 {dimension_numbers = #tpu.dot_dimension_numbers<[1], [0], [0], [1], [0, 0, 1, 1], [], []>} : vector<16x128xf32>, vector<128x64xf32>, vector<16x64xf32> -> vector<16x64xf32>
    %317 = vector.extract_strided_slice %316 {offsets = [0, 0], sizes = [16, 32], strides = [1, 1]} : vector<16x64xf32> to vector<16x32xf32>
    %318 = vector.extract_strided_slice %316 {offsets = [0, 32], sizes = [16, 32], strides = [1, 1]} : vector<16x64xf32> to vector<16x32xf32>
    %319 = arith.divf %317, %318 : vector<16x32xf32>
    %cst_105 = arith.constant dense<0.000000e+00> : vector<16x32xf32>
    %320 = tpu.matmul %319, %287, %cst_105 {dimension_numbers = #tpu.dot_dimension_numbers<[1], [0], [0], [1], [0, 0, 1, 1], [], []>} : vector<16x32xf32>, vector<32x32xf32>, vector<16x32xf32> -> vector<16x32xf32>
    %321 = vector.broadcast %290 : vector<1x32xf32> to vector<16x32xf32>
    %322 = arith.addf %320, %321 : vector<16x32xf32>
    %323 = arith.addf %280, %322 : vector<16x32xf32>
    %cst_106 = arith.constant dense<0.000000e+00> : vector<16xf32>
    %324 = vector.multi_reduction <add>, %323, %cst_106 [1] : vector<16x32xf32> to vector<16xf32>
    %325 = vector.shape_cast %324 : vector<16xf32> to vector<16x1xf32>
    %cst_107 = arith.constant 3.200000e+01 : f32
    %326 = vector.broadcast %cst_107 : f32 to vector<16x1xf32>
    %327 = arith.divf %325, %326 : vector<16x1xf32>
    %328 = vector.broadcast %327 : vector<16x1xf32> to vector<16x32xf32>
    %329 = arith.subf %323, %328 : vector<16x32xf32>
    %330 = arith.mulf %329, %329 : vector<16x32xf32>
    %cst_108 = arith.constant dense<0.000000e+00> : vector<16xf32>
    %331 = vector.multi_reduction <add>, %330, %cst_108 [1] : vector<16x32xf32> to vector<16xf32>
    %332 = vector.shape_cast %331 : vector<16xf32> to vector<16x1xf32>
    %cst_109 = arith.constant 3.200000e+01 : f32
    %333 = vector.broadcast %cst_109 : f32 to vector<16x1xf32>
    %334 = arith.divf %332, %333 : vector<16x1xf32>
    %cst_110 = arith.constant 9.99999974E-6 : f32
    %335 = vector.broadcast %cst_110 : f32 to vector<16x1xf32>
    %336 = arith.addf %334, %335 : vector<16x1xf32>
    %337 = math.rsqrt %336 : vector<16x1xf32>
    %338 = vector.broadcast %337 : vector<16x1xf32> to vector<16x32xf32>
    %339 = arith.mulf %329, %338 : vector<16x32xf32>
    %340 = vector.broadcast %291 : vector<1x32xf32> to vector<16x32xf32>
    %341 = arith.mulf %339, %340 : vector<16x32xf32>
    %342 = vector.broadcast %292 : vector<1x32xf32> to vector<16x32xf32>
    %343 = arith.addf %341, %342 : vector<16x32xf32>
    %cst_111 = arith.constant dense<0.000000e+00> : vector<16x128xf32>
    %344 = tpu.matmul %343, %285, %cst_111 {dimension_numbers = #tpu.dot_dimension_numbers<[1], [0], [0], [1], [0, 0, 1, 1], [], []>} : vector<16x32xf32>, vector<32x128xf32>, vector<16x128xf32> -> vector<16x128xf32>
    %345 = vector.broadcast %293 : vector<1x128xf32> to vector<16x128xf32>
    %346 = arith.addf %344, %345 : vector<16x128xf32>
    %cst_112 = arith.constant 0.000000e+00 : f32
    %347 = vector.broadcast %cst_112 : f32 to vector<16x128xf32>
    %348 = arith.maximumf %346, %347 : vector<16x128xf32>
    %cst_113 = arith.constant dense<0.000000e+00> : vector<16x32xf32>
    %349 = tpu.matmul %348, %288, %cst_113 {dimension_numbers = #tpu.dot_dimension_numbers<[1], [0], [0], [1], [0, 0, 1, 1], [], []>} : vector<16x128xf32>, vector<128x32xf32>, vector<16x32xf32> -> vector<16x32xf32>
    %350 = vector.broadcast %294 : vector<1x32xf32> to vector<16x32xf32>
    %351 = arith.addf %349, %350 : vector<16x32xf32>
    %352 = arith.addf %343, %351 : vector<16x32xf32>
    %cst_114 = arith.constant dense<0.000000e+00> : vector<16xf32>
    %353 = vector.multi_reduction <add>, %352, %cst_114 [1] : vector<16x32xf32> to vector<16xf32>
    %354 = vector.shape_cast %353 : vector<16xf32> to vector<16x1xf32>
    %cst_115 = arith.constant 3.200000e+01 : f32
    %355 = vector.broadcast %cst_115 : f32 to vector<16x1xf32>
    %356 = arith.divf %354, %355 : vector<16x1xf32>
    %357 = vector.broadcast %356 : vector<16x1xf32> to vector<16x32xf32>
    %358 = arith.subf %352, %357 : vector<16x32xf32>
    %359 = arith.mulf %358, %358 : vector<16x32xf32>
    %cst_116 = arith.constant dense<0.000000e+00> : vector<16xf32>
    %360 = vector.multi_reduction <add>, %359, %cst_116 [1] : vector<16x32xf32> to vector<16xf32>
    %361 = vector.shape_cast %360 : vector<16xf32> to vector<16x1xf32>
    %cst_117 = arith.constant 3.200000e+01 : f32
    %362 = vector.broadcast %cst_117 : f32 to vector<16x1xf32>
    %363 = arith.divf %361, %362 : vector<16x1xf32>
    %cst_118 = arith.constant 9.99999974E-6 : f32
    %364 = vector.broadcast %cst_118 : f32 to vector<16x1xf32>
    %365 = arith.addf %363, %364 : vector<16x1xf32>
    %366 = math.rsqrt %365 : vector<16x1xf32>
    %367 = vector.broadcast %366 : vector<16x1xf32> to vector<16x32xf32>
    %368 = arith.mulf %358, %367 : vector<16x32xf32>
    %369 = vector.broadcast %295 : vector<1x32xf32> to vector<16x32xf32>
    %370 = arith.mulf %368, %369 : vector<16x32xf32>
    %371 = vector.broadcast %296 : vector<1x32xf32> to vector<16x32xf32>
    %372 = arith.addf %370, %371 : vector<16x32xf32>
    %c0_119 = arith.constant 0 : index
    %c0_120 = arith.constant 0 : index
    %373 = vector.load %arg1[%c0_119, %c0_120] : memref<520x128xf32, #tpu.memory_space<vmem>>, vector<32x128xf32>
    %c32_121 = arith.constant 32 : index
    %c0_122 = arith.constant 0 : index
    %374 = vector.load %arg1[%c32_121, %c0_122] : memref<520x128xf32, #tpu.memory_space<vmem>>, vector<16x128xf32>
    %c32_123 = arith.constant 32 : index
    %c0_124 = arith.constant 0 : index
    %375 = vector.load %arg2[%c32_123, %c0_124] : memref<1248x32xf32, #tpu.memory_space<vmem>>, vector<128x32xf32>
    %c176 = arith.constant 176 : index
    %c0_125 = arith.constant 0 : index
    %376 = vector.load %arg1[%c176, %c0_125] : memref<520x128xf32, #tpu.memory_space<vmem>>, vector<32x96xf32>
    %c368 = arith.constant 368 : index
    %c0_126 = arith.constant 0 : index
    %377 = vector.load %arg1[%c368, %c0_126] : memref<520x128xf32, #tpu.memory_space<vmem>>, vector<32x128xf32>
    %c464 = arith.constant 464 : index
    %c0_127 = arith.constant 0 : index
    %378 = vector.load %arg1[%c464, %c0_127] : memref<520x128xf32, #tpu.memory_space<vmem>>, vector<8x128xf32>
    %c288 = arith.constant 288 : index
    %c0_128 = arith.constant 0 : index
    %379 = vector.load %arg2[%c288, %c0_128] : memref<1248x32xf32, #tpu.memory_space<vmem>>, vector<32x32xf32>
    %c864 = arith.constant 864 : index
    %c0_129 = arith.constant 0 : index
    %380 = vector.load %arg2[%c864, %c0_129] : memref<1248x32xf32, #tpu.memory_space<vmem>>, vector<128x32xf32>
    %381 = vector.extract_strided_slice %378 {offsets = [0, 0], sizes = [1, 96], strides = [1, 1]} : vector<8x128xf32> to vector<1x96xf32>
    %382 = vector.extract_strided_slice %378 {offsets = [1, 0], sizes = [1, 32], strides = [1, 1]} : vector<8x128xf32> to vector<1x32xf32>
    %383 = vector.extract_strided_slice %378 {offsets = [2, 0], sizes = [1, 32], strides = [1, 1]} : vector<8x128xf32> to vector<1x32xf32>
    %384 = vector.extract_strided_slice %378 {offsets = [3, 0], sizes = [1, 32], strides = [1, 1]} : vector<8x128xf32> to vector<1x32xf32>
    %385 = vector.extract_strided_slice %378 {offsets = [4, 0], sizes = [1, 128], strides = [1, 1]} : vector<8x128xf32> to vector<1x128xf32>
    %386 = vector.extract_strided_slice %378 {offsets = [5, 0], sizes = [1, 32], strides = [1, 1]} : vector<8x128xf32> to vector<1x32xf32>
    %387 = vector.extract_strided_slice %378 {offsets = [6, 0], sizes = [1, 32], strides = [1, 1]} : vector<8x128xf32> to vector<1x32xf32>
    %388 = vector.extract_strided_slice %378 {offsets = [7, 0], sizes = [1, 32], strides = [1, 1]} : vector<8x128xf32> to vector<1x32xf32>
    %cst_130 = arith.constant dense<0.000000e+00> : vector<16x96xf32>
    %389 = tpu.matmul %372, %376, %cst_130 {dimension_numbers = #tpu.dot_dimension_numbers<[1], [0], [0], [1], [0, 0, 1, 1], [], []>} : vector<16x32xf32>, vector<32x96xf32>, vector<16x96xf32> -> vector<16x96xf32>
    %390 = vector.broadcast %381 : vector<1x96xf32> to vector<16x96xf32>
    %391 = arith.addf %389, %390 : vector<16x96xf32>
    %392 = vector.extract_strided_slice %391 {offsets = [0, 0], sizes = [16, 32], strides = [1, 1]} : vector<16x96xf32> to vector<16x32xf32>
    %393 = vector.extract_strided_slice %391 {offsets = [0, 32], sizes = [16, 32], strides = [1, 1]} : vector<16x96xf32> to vector<16x32xf32>
    %394 = vector.extract_strided_slice %391 {offsets = [0, 64], sizes = [16, 32], strides = [1, 1]} : vector<16x96xf32> to vector<16x32xf32>
    %395 = tpu.transpose %393, [1, 0] : vector<16x32xf32> -> vector<32x16xf32>
    %396 = tpu.concatenate %395, %395, %395, %395, %395, %395, %395, %395 in 1 : vector<32x16xf32>, vector<32x16xf32>, vector<32x16xf32>, vector<32x16xf32>, vector<32x16xf32>, vector<32x16xf32>, vector<32x16xf32>, vector<32x16xf32> -> vector<32x128xf32>
    %397 = arith.mulf %396, %373 : vector<32x128xf32>
    %cst_131 = arith.constant dense<0.000000e+00> : vector<16x128xf32>
    %398 = tpu.matmul %392, %397, %cst_131 {dimension_numbers = #tpu.dot_dimension_numbers<[1], [0], [0], [1], [0, 0, 1, 1], [], []>} : vector<16x32xf32>, vector<32x128xf32>, vector<16x128xf32> -> vector<16x128xf32>
    %399 = arith.addf %398, %374 : vector<16x128xf32>
    %cst_132 = arith.constant dense<0xFF800000> : vector<16xf32>
    %400 = vector.multi_reduction <maximumf>, %399, %cst_132 [1] : vector<16x128xf32> to vector<16xf32>
    %401 = vector.shape_cast %400 : vector<16xf32> to vector<16x1xf32>
    %402 = vector.broadcast %401 : vector<16x1xf32> to vector<16x128xf32>
    %403 = arith.subf %399, %402 : vector<16x128xf32>
    %404 = math.exp %403 : vector<16x128xf32>
    %405 = tpu.concatenate %394, %394, %394, %394, %394, %394, %394, %394 in 0 : vector<16x32xf32>, vector<16x32xf32>, vector<16x32xf32>, vector<16x32xf32>, vector<16x32xf32>, vector<16x32xf32>, vector<16x32xf32>, vector<16x32xf32> -> vector<128x32xf32>
    %406 = arith.mulf %405, %375 : vector<128x32xf32>
    %407 = tpu.concatenate %406, %375 in 1 : vector<128x32xf32>, vector<128x32xf32> -> vector<128x64xf32>
    %cst_133 = arith.constant dense<0.000000e+00> : vector<16x64xf32>
    %408 = tpu.matmul %404, %407, %cst_133 {dimension_numbers = #tpu.dot_dimension_numbers<[1], [0], [0], [1], [0, 0, 1, 1], [], []>} : vector<16x128xf32>, vector<128x64xf32>, vector<16x64xf32> -> vector<16x64xf32>
    %409 = vector.extract_strided_slice %408 {offsets = [0, 0], sizes = [16, 32], strides = [1, 1]} : vector<16x64xf32> to vector<16x32xf32>
    %410 = vector.extract_strided_slice %408 {offsets = [0, 32], sizes = [16, 32], strides = [1, 1]} : vector<16x64xf32> to vector<16x32xf32>
    %411 = arith.divf %409, %410 : vector<16x32xf32>
    %cst_134 = arith.constant dense<0.000000e+00> : vector<16x32xf32>
    %412 = tpu.matmul %411, %379, %cst_134 {dimension_numbers = #tpu.dot_dimension_numbers<[1], [0], [0], [1], [0, 0, 1, 1], [], []>} : vector<16x32xf32>, vector<32x32xf32>, vector<16x32xf32> -> vector<16x32xf32>
    %413 = vector.broadcast %382 : vector<1x32xf32> to vector<16x32xf32>
    %414 = arith.addf %412, %413 : vector<16x32xf32>
    %415 = arith.addf %372, %414 : vector<16x32xf32>
    %cst_135 = arith.constant dense<0.000000e+00> : vector<16xf32>
    %416 = vector.multi_reduction <add>, %415, %cst_135 [1] : vector<16x32xf32> to vector<16xf32>
    %417 = vector.shape_cast %416 : vector<16xf32> to vector<16x1xf32>
    %cst_136 = arith.constant 3.200000e+01 : f32
    %418 = vector.broadcast %cst_136 : f32 to vector<16x1xf32>
    %419 = arith.divf %417, %418 : vector<16x1xf32>
    %420 = vector.broadcast %419 : vector<16x1xf32> to vector<16x32xf32>
    %421 = arith.subf %415, %420 : vector<16x32xf32>
    %422 = arith.mulf %421, %421 : vector<16x32xf32>
    %cst_137 = arith.constant dense<0.000000e+00> : vector<16xf32>
    %423 = vector.multi_reduction <add>, %422, %cst_137 [1] : vector<16x32xf32> to vector<16xf32>
    %424 = vector.shape_cast %423 : vector<16xf32> to vector<16x1xf32>
    %cst_138 = arith.constant 3.200000e+01 : f32
    %425 = vector.broadcast %cst_138 : f32 to vector<16x1xf32>
    %426 = arith.divf %424, %425 : vector<16x1xf32>
    %cst_139 = arith.constant 9.99999974E-6 : f32
    %427 = vector.broadcast %cst_139 : f32 to vector<16x1xf32>
    %428 = arith.addf %426, %427 : vector<16x1xf32>
    %429 = math.rsqrt %428 : vector<16x1xf32>
    %430 = vector.broadcast %429 : vector<16x1xf32> to vector<16x32xf32>
    %431 = arith.mulf %421, %430 : vector<16x32xf32>
    %432 = vector.broadcast %383 : vector<1x32xf32> to vector<16x32xf32>
    %433 = arith.mulf %431, %432 : vector<16x32xf32>
    %434 = vector.broadcast %384 : vector<1x32xf32> to vector<16x32xf32>
    %435 = arith.addf %433, %434 : vector<16x32xf32>
    %cst_140 = arith.constant dense<0.000000e+00> : vector<16x128xf32>
    %436 = tpu.matmul %435, %377, %cst_140 {dimension_numbers = #tpu.dot_dimension_numbers<[1], [0], [0], [1], [0, 0, 1, 1], [], []>} : vector<16x32xf32>, vector<32x128xf32>, vector<16x128xf32> -> vector<16x128xf32>
    %437 = vector.broadcast %385 : vector<1x128xf32> to vector<16x128xf32>
    %438 = arith.addf %436, %437 : vector<16x128xf32>
    %cst_141 = arith.constant 0.000000e+00 : f32
    %439 = vector.broadcast %cst_141 : f32 to vector<16x128xf32>
    %440 = arith.maximumf %438, %439 : vector<16x128xf32>
    %cst_142 = arith.constant dense<0.000000e+00> : vector<16x32xf32>
    %441 = tpu.matmul %440, %380, %cst_142 {dimension_numbers = #tpu.dot_dimension_numbers<[1], [0], [0], [1], [0, 0, 1, 1], [], []>} : vector<16x128xf32>, vector<128x32xf32>, vector<16x32xf32> -> vector<16x32xf32>
    %442 = vector.broadcast %386 : vector<1x32xf32> to vector<16x32xf32>
    %443 = arith.addf %441, %442 : vector<16x32xf32>
    %444 = arith.addf %435, %443 : vector<16x32xf32>
    %cst_143 = arith.constant dense<0.000000e+00> : vector<16xf32>
    %445 = vector.multi_reduction <add>, %444, %cst_143 [1] : vector<16x32xf32> to vector<16xf32>
    %446 = vector.shape_cast %445 : vector<16xf32> to vector<16x1xf32>
    %cst_144 = arith.constant 3.200000e+01 : f32
    %447 = vector.broadcast %cst_144 : f32 to vector<16x1xf32>
    %448 = arith.divf %446, %447 : vector<16x1xf32>
    %449 = vector.broadcast %448 : vector<16x1xf32> to vector<16x32xf32>
    %450 = arith.subf %444, %449 : vector<16x32xf32>
    %451 = arith.mulf %450, %450 : vector<16x32xf32>
    %cst_145 = arith.constant dense<0.000000e+00> : vector<16xf32>
    %452 = vector.multi_reduction <add>, %451, %cst_145 [1] : vector<16x32xf32> to vector<16xf32>
    %453 = vector.shape_cast %452 : vector<16xf32> to vector<16x1xf32>
    %cst_146 = arith.constant 3.200000e+01 : f32
    %454 = vector.broadcast %cst_146 : f32 to vector<16x1xf32>
    %455 = arith.divf %453, %454 : vector<16x1xf32>
    %cst_147 = arith.constant 9.99999974E-6 : f32
    %456 = vector.broadcast %cst_147 : f32 to vector<16x1xf32>
    %457 = arith.addf %455, %456 : vector<16x1xf32>
    %458 = math.rsqrt %457 : vector<16x1xf32>
    %459 = vector.broadcast %458 : vector<16x1xf32> to vector<16x32xf32>
    %460 = arith.mulf %450, %459 : vector<16x32xf32>
    %461 = vector.broadcast %387 : vector<1x32xf32> to vector<16x32xf32>
    %462 = arith.mulf %460, %461 : vector<16x32xf32>
    %463 = vector.broadcast %388 : vector<1x32xf32> to vector<16x32xf32>
    %464 = arith.addf %462, %463 : vector<16x32xf32>
    %c0_148 = arith.constant 0 : index
    %c0_149 = arith.constant 0 : index
    %465 = vector.load %arg1[%c0_148, %c0_149] : memref<520x128xf32, #tpu.memory_space<vmem>>, vector<32x128xf32>
    %c32_150 = arith.constant 32 : index
    %c0_151 = arith.constant 0 : index
    %466 = vector.load %arg1[%c32_150, %c0_151] : memref<520x128xf32, #tpu.memory_space<vmem>>, vector<16x128xf32>
    %c32_152 = arith.constant 32 : index
    %c0_153 = arith.constant 0 : index
    %467 = vector.load %arg2[%c32_152, %c0_153] : memref<1248x32xf32, #tpu.memory_space<vmem>>, vector<128x32xf32>
    %c208 = arith.constant 208 : index
    %c0_154 = arith.constant 0 : index
    %468 = vector.load %arg1[%c208, %c0_154] : memref<520x128xf32, #tpu.memory_space<vmem>>, vector<32x96xf32>
    %c400 = arith.constant 400 : index
    %c0_155 = arith.constant 0 : index
    %469 = vector.load %arg1[%c400, %c0_155] : memref<520x128xf32, #tpu.memory_space<vmem>>, vector<32x128xf32>
    %c472 = arith.constant 472 : index
    %c0_156 = arith.constant 0 : index
    %470 = vector.load %arg1[%c472, %c0_156] : memref<520x128xf32, #tpu.memory_space<vmem>>, vector<8x128xf32>
    %c320 = arith.constant 320 : index
    %c0_157 = arith.constant 0 : index
    %471 = vector.load %arg2[%c320, %c0_157] : memref<1248x32xf32, #tpu.memory_space<vmem>>, vector<32x32xf32>
    %c992 = arith.constant 992 : index
    %c0_158 = arith.constant 0 : index
    %472 = vector.load %arg2[%c992, %c0_158] : memref<1248x32xf32, #tpu.memory_space<vmem>>, vector<128x32xf32>
    %473 = vector.extract_strided_slice %470 {offsets = [0, 0], sizes = [1, 96], strides = [1, 1]} : vector<8x128xf32> to vector<1x96xf32>
    %474 = vector.extract_strided_slice %470 {offsets = [1, 0], sizes = [1, 32], strides = [1, 1]} : vector<8x128xf32> to vector<1x32xf32>
    %475 = vector.extract_strided_slice %470 {offsets = [2, 0], sizes = [1, 32], strides = [1, 1]} : vector<8x128xf32> to vector<1x32xf32>
    %476 = vector.extract_strided_slice %470 {offsets = [3, 0], sizes = [1, 32], strides = [1, 1]} : vector<8x128xf32> to vector<1x32xf32>
    %477 = vector.extract_strided_slice %470 {offsets = [4, 0], sizes = [1, 128], strides = [1, 1]} : vector<8x128xf32> to vector<1x128xf32>
    %478 = vector.extract_strided_slice %470 {offsets = [5, 0], sizes = [1, 32], strides = [1, 1]} : vector<8x128xf32> to vector<1x32xf32>
    %479 = vector.extract_strided_slice %470 {offsets = [6, 0], sizes = [1, 32], strides = [1, 1]} : vector<8x128xf32> to vector<1x32xf32>
    %480 = vector.extract_strided_slice %470 {offsets = [7, 0], sizes = [1, 32], strides = [1, 1]} : vector<8x128xf32> to vector<1x32xf32>
    %cst_159 = arith.constant dense<0.000000e+00> : vector<16x96xf32>
    %481 = tpu.matmul %464, %468, %cst_159 {dimension_numbers = #tpu.dot_dimension_numbers<[1], [0], [0], [1], [0, 0, 1, 1], [], []>} : vector<16x32xf32>, vector<32x96xf32>, vector<16x96xf32> -> vector<16x96xf32>
    %482 = vector.broadcast %473 : vector<1x96xf32> to vector<16x96xf32>
    %483 = arith.addf %481, %482 : vector<16x96xf32>
    %484 = vector.extract_strided_slice %483 {offsets = [0, 0], sizes = [16, 32], strides = [1, 1]} : vector<16x96xf32> to vector<16x32xf32>
    %485 = vector.extract_strided_slice %483 {offsets = [0, 32], sizes = [16, 32], strides = [1, 1]} : vector<16x96xf32> to vector<16x32xf32>
    %486 = vector.extract_strided_slice %483 {offsets = [0, 64], sizes = [16, 32], strides = [1, 1]} : vector<16x96xf32> to vector<16x32xf32>
    %487 = tpu.transpose %485, [1, 0] : vector<16x32xf32> -> vector<32x16xf32>
    %488 = tpu.concatenate %487, %487, %487, %487, %487, %487, %487, %487 in 1 : vector<32x16xf32>, vector<32x16xf32>, vector<32x16xf32>, vector<32x16xf32>, vector<32x16xf32>, vector<32x16xf32>, vector<32x16xf32>, vector<32x16xf32> -> vector<32x128xf32>
    %489 = arith.mulf %488, %465 : vector<32x128xf32>
    %cst_160 = arith.constant dense<0.000000e+00> : vector<16x128xf32>
    %490 = tpu.matmul %484, %489, %cst_160 {dimension_numbers = #tpu.dot_dimension_numbers<[1], [0], [0], [1], [0, 0, 1, 1], [], []>} : vector<16x32xf32>, vector<32x128xf32>, vector<16x128xf32> -> vector<16x128xf32>
    %491 = arith.addf %490, %466 : vector<16x128xf32>
    %cst_161 = arith.constant dense<0xFF800000> : vector<16xf32>
    %492 = vector.multi_reduction <maximumf>, %491, %cst_161 [1] : vector<16x128xf32> to vector<16xf32>
    %493 = vector.shape_cast %492 : vector<16xf32> to vector<16x1xf32>
    %494 = vector.broadcast %493 : vector<16x1xf32> to vector<16x128xf32>
    %495 = arith.subf %491, %494 : vector<16x128xf32>
    %496 = math.exp %495 : vector<16x128xf32>
    %497 = tpu.concatenate %486, %486, %486, %486, %486, %486, %486, %486 in 0 : vector<16x32xf32>, vector<16x32xf32>, vector<16x32xf32>, vector<16x32xf32>, vector<16x32xf32>, vector<16x32xf32>, vector<16x32xf32>, vector<16x32xf32> -> vector<128x32xf32>
    %498 = arith.mulf %497, %467 : vector<128x32xf32>
    %499 = tpu.concatenate %498, %467 in 1 : vector<128x32xf32>, vector<128x32xf32> -> vector<128x64xf32>
    %cst_162 = arith.constant dense<0.000000e+00> : vector<16x64xf32>
    %500 = tpu.matmul %496, %499, %cst_162 {dimension_numbers = #tpu.dot_dimension_numbers<[1], [0], [0], [1], [0, 0, 1, 1], [], []>} : vector<16x128xf32>, vector<128x64xf32>, vector<16x64xf32> -> vector<16x64xf32>
    %501 = vector.extract_strided_slice %500 {offsets = [0, 0], sizes = [16, 32], strides = [1, 1]} : vector<16x64xf32> to vector<16x32xf32>
    %502 = vector.extract_strided_slice %500 {offsets = [0, 32], sizes = [16, 32], strides = [1, 1]} : vector<16x64xf32> to vector<16x32xf32>
    %503 = arith.divf %501, %502 : vector<16x32xf32>
    %cst_163 = arith.constant dense<0.000000e+00> : vector<16x32xf32>
    %504 = tpu.matmul %503, %471, %cst_163 {dimension_numbers = #tpu.dot_dimension_numbers<[1], [0], [0], [1], [0, 0, 1, 1], [], []>} : vector<16x32xf32>, vector<32x32xf32>, vector<16x32xf32> -> vector<16x32xf32>
    %505 = vector.broadcast %474 : vector<1x32xf32> to vector<16x32xf32>
    %506 = arith.addf %504, %505 : vector<16x32xf32>
    %507 = arith.addf %464, %506 : vector<16x32xf32>
    %cst_164 = arith.constant dense<0.000000e+00> : vector<16xf32>
    %508 = vector.multi_reduction <add>, %507, %cst_164 [1] : vector<16x32xf32> to vector<16xf32>
    %509 = vector.shape_cast %508 : vector<16xf32> to vector<16x1xf32>
    %cst_165 = arith.constant 3.200000e+01 : f32
    %510 = vector.broadcast %cst_165 : f32 to vector<16x1xf32>
    %511 = arith.divf %509, %510 : vector<16x1xf32>
    %512 = vector.broadcast %511 : vector<16x1xf32> to vector<16x32xf32>
    %513 = arith.subf %507, %512 : vector<16x32xf32>
    %514 = arith.mulf %513, %513 : vector<16x32xf32>
    %cst_166 = arith.constant dense<0.000000e+00> : vector<16xf32>
    %515 = vector.multi_reduction <add>, %514, %cst_166 [1] : vector<16x32xf32> to vector<16xf32>
    %516 = vector.shape_cast %515 : vector<16xf32> to vector<16x1xf32>
    %cst_167 = arith.constant 3.200000e+01 : f32
    %517 = vector.broadcast %cst_167 : f32 to vector<16x1xf32>
    %518 = arith.divf %516, %517 : vector<16x1xf32>
    %cst_168 = arith.constant 9.99999974E-6 : f32
    %519 = vector.broadcast %cst_168 : f32 to vector<16x1xf32>
    %520 = arith.addf %518, %519 : vector<16x1xf32>
    %521 = math.rsqrt %520 : vector<16x1xf32>
    %522 = vector.broadcast %521 : vector<16x1xf32> to vector<16x32xf32>
    %523 = arith.mulf %513, %522 : vector<16x32xf32>
    %524 = vector.broadcast %475 : vector<1x32xf32> to vector<16x32xf32>
    %525 = arith.mulf %523, %524 : vector<16x32xf32>
    %526 = vector.broadcast %476 : vector<1x32xf32> to vector<16x32xf32>
    %527 = arith.addf %525, %526 : vector<16x32xf32>
    %cst_169 = arith.constant dense<0.000000e+00> : vector<16x128xf32>
    %528 = tpu.matmul %527, %469, %cst_169 {dimension_numbers = #tpu.dot_dimension_numbers<[1], [0], [0], [1], [0, 0, 1, 1], [], []>} : vector<16x32xf32>, vector<32x128xf32>, vector<16x128xf32> -> vector<16x128xf32>
    %529 = vector.broadcast %477 : vector<1x128xf32> to vector<16x128xf32>
    %530 = arith.addf %528, %529 : vector<16x128xf32>
    %cst_170 = arith.constant 0.000000e+00 : f32
    %531 = vector.broadcast %cst_170 : f32 to vector<16x128xf32>
    %532 = arith.maximumf %530, %531 : vector<16x128xf32>
    %cst_171 = arith.constant dense<0.000000e+00> : vector<16x32xf32>
    %533 = tpu.matmul %532, %472, %cst_171 {dimension_numbers = #tpu.dot_dimension_numbers<[1], [0], [0], [1], [0, 0, 1, 1], [], []>} : vector<16x128xf32>, vector<128x32xf32>, vector<16x32xf32> -> vector<16x32xf32>
    %534 = vector.broadcast %478 : vector<1x32xf32> to vector<16x32xf32>
    %535 = arith.addf %533, %534 : vector<16x32xf32>
    %536 = arith.addf %527, %535 : vector<16x32xf32>
    %cst_172 = arith.constant dense<0.000000e+00> : vector<16xf32>
    %537 = vector.multi_reduction <add>, %536, %cst_172 [1] : vector<16x32xf32> to vector<16xf32>
    %538 = vector.shape_cast %537 : vector<16xf32> to vector<16x1xf32>
    %cst_173 = arith.constant 3.200000e+01 : f32
    %539 = vector.broadcast %cst_173 : f32 to vector<16x1xf32>
    %540 = arith.divf %538, %539 : vector<16x1xf32>
    %541 = vector.broadcast %540 : vector<16x1xf32> to vector<16x32xf32>
    %542 = arith.subf %536, %541 : vector<16x32xf32>
    %543 = arith.mulf %542, %542 : vector<16x32xf32>
    %cst_174 = arith.constant dense<0.000000e+00> : vector<16xf32>
    %544 = vector.multi_reduction <add>, %543, %cst_174 [1] : vector<16x32xf32> to vector<16xf32>
    %545 = vector.shape_cast %544 : vector<16xf32> to vector<16x1xf32>
    %cst_175 = arith.constant 3.200000e+01 : f32
    %546 = vector.broadcast %cst_175 : f32 to vector<16x1xf32>
    %547 = arith.divf %545, %546 : vector<16x1xf32>
    %cst_176 = arith.constant 9.99999974E-6 : f32
    %548 = vector.broadcast %cst_176 : f32 to vector<16x1xf32>
    %549 = arith.addf %547, %548 : vector<16x1xf32>
    %550 = math.rsqrt %549 : vector<16x1xf32>
    %551 = vector.broadcast %550 : vector<16x1xf32> to vector<16x32xf32>
    %552 = arith.mulf %542, %551 : vector<16x32xf32>
    %553 = vector.broadcast %479 : vector<1x32xf32> to vector<16x32xf32>
    %554 = arith.mulf %552, %553 : vector<16x32xf32>
    %555 = vector.broadcast %480 : vector<1x32xf32> to vector<16x32xf32>
    %556 = arith.addf %554, %555 : vector<16x32xf32>
    %c480_177 = arith.constant 480 : index
    %c0_178 = arith.constant 0 : index
    %557 = vector.load %arg1[%c480_177, %c0_178] : memref<520x128xf32, #tpu.memory_space<vmem>>, vector<32x128xf32>
    %c512 = arith.constant 512 : index
    %c0_179 = arith.constant 0 : index
    %558 = vector.load %arg1[%c512, %c0_179] : memref<520x128xf32, #tpu.memory_space<vmem>>, vector<8x128xf32>
    %c1120 = arith.constant 1120 : index
    %c0_180 = arith.constant 0 : index
    %559 = vector.load %arg2[%c1120, %c0_180] : memref<1248x32xf32, #tpu.memory_space<vmem>>, vector<128x32xf32>
    %cst_181 = arith.constant dense<0.000000e+00> : vector<16x128xf32>
    %560 = tpu.matmul %556, %557, %cst_181 {dimension_numbers = #tpu.dot_dimension_numbers<[1], [0], [0], [1], [0, 0, 1, 1], [], []>} : vector<16x32xf32>, vector<32x128xf32>, vector<16x128xf32> -> vector<16x128xf32>
    %561 = vector.extract_strided_slice %558 {offsets = [0, 0], sizes = [1, 128], strides = [1, 1]} : vector<8x128xf32> to vector<1x128xf32>
    %562 = vector.broadcast %561 : vector<1x128xf32> to vector<16x128xf32>
    %563 = arith.addf %560, %562 : vector<16x128xf32>
    %cst_182 = arith.constant dense<0.000000e+00> : vector<16x32xf32>
    %564 = tpu.matmul %563, %559, %cst_182 {dimension_numbers = #tpu.dot_dimension_numbers<[1], [0], [0], [1], [0, 0, 1, 1], [], []>} : vector<16x128xf32>, vector<128x32xf32>, vector<16x32xf32> -> vector<16x32xf32>
    %565 = vector.extract_strided_slice %558 {offsets = [1, 0], sizes = [1, 32], strides = [1, 1]} : vector<8x128xf32> to vector<1x32xf32>
    %566 = vector.broadcast %565 : vector<1x32xf32> to vector<16x32xf32>
    %567 = arith.addf %564, %566 : vector<16x32xf32>
    %568 = vector.extract_strided_slice %567 {offsets = [0, 0], sizes = [16, 2], strides = [1, 1]} : vector<16x32xf32> to vector<16x2xf32>
    %c0_183 = arith.constant 0 : index
    %c0_184 = arith.constant 0 : index
    %569 = vector.load %arg3[%c0_183, %c0_184] : memref<16x2xf32, #tpu.memory_space<vmem>>, vector<16x2xf32>
    tpu.vector_store %arg3[%c0_183, %c0_184], %568 {strides = array<i32>} : memref<16x2xf32, #tpu.memory_space<vmem>>, vector<16x2xf32>,
    return
  }
}

</mosaic_0001>

<llo_original>
// kernel: time_series_transformer.1
$region0: #{time_series_transformer.1}
  #allocation0 [shape = 'u32[]', space=smem, size = 0x4, offset = 0x4, fixed_abs, tag = 'smem constant byte address 0x4 - core index']
  #allocation1 [shape = 'u32[72,128]{1,0:T(1,128)}', space=vmem, size = 0x9000, scoped, tag = 'internal scratch']
  %s0 = inlined_call_operand.vmem [shape: f32[16,16], index: 0, kind: input, shape index: {}]
  %s1 = inlined_call_operand.vmem [shape: f32[520,128], index: 1, kind: input, shape index: {}]
  %s2 = inlined_call_operand.vmem [shape: f32[1248,32], index: 2, kind: input, shape index: {}]
  %s3 = inlined_call_operand.vmem [shape: f32[16,2], index: 3, kind: output, shape index: {}]
  %s4 = sld [smem:[#allocation0]]
  $region22: #{time_series_transformer.1} parent=0
    _
  %s6 = ssub.s32 1, %s4
  %s7 = scalar_select 0, %s6, %s4
  // Predicated region
  $region2: #{time_series_transformer.1} parent=0 // pred_check
    _
  $region3: #{time_series_transformer.1} parent=0 // pred_check_branch
    %9 = sbr.rel (0) target = $region5
  $region4: #{time_series_transformer.1} parent=0 // pred_region
    _
  $region5: #{time_series_transformer.1} parent=0 // pred_fallthru
    _
  // Predicated region
  $region6: #{time_series_transformer.1} parent=0 // pred_check
    _
  $region7: #{time_series_transformer.1} parent=0 // pred_check_branch
    %11 = sbr.rel (0) target = $region9
  $region8: #{time_series_transformer.1} parent=0 // pred_region
    _
  $region9: #{time_series_transformer.1} parent=0 // pred_fallthru
    _
  // Predicated region
  $region10: #{time_series_transformer.1} parent=0 // pred_check
    _
  $region11: #{time_series_transformer.1} parent=0 // pred_check_branch
    %13 = sbr.rel (0) target = $region13
  $region12: #{time_series_transformer.1} parent=0 // pred_region
    _
  $region13: #{time_series_transformer.1} parent=0 // pred_fallthru
    _
  %v14 = vld [vmem:[%s2] sm:$0xff]
  %v15 = vld [vmem:[%s2 + $0x8] sm:$0xff]
  %v16 = vld [vmem:[%s2 + $0x10] sm:$0xff]
  %v17 = vld [vmem:[%s2 + $0x18] sm:$0xff]
  %v18 = vld [vmem:[%s0] sm:$0xff]
  %v19 = vld [vmem:[%s0 + $0x8] sm:$0xff]
  %vm20 = vcmask 130048
  %v22 = vsel %vm20, %v18, 0
  %v25 = vsel %vm20, %v19, 0
  %27 = vmatpush.msra.mxu0 0.0
  %28 = vmatpush.msra.mxu0 0.0
  %29 = vmatpush.msra.mxu0 0.0
  %30 = vmatpush.msra.mxu0 0.0
  %31 = vmatpush.msra.mxu0 0.0
  %32 = vmatpush.msra.mxu0 0.0
  %33 = vmatpush.msra.mxu0 0.0
  %34 = vmatpush.msra.mxu0 0.0
  %35 = vmatpush.msra.mxu0 0.0
  %36 = vmatpush.msra.mxu0 0.0
  %37 = vmatpush.msra.mxu0 0.0
  %38 = vmatpush.msra.mxu0 0.0
  %39 = vmatpush.msra.mxu0 0.0
  %40 = vmatpush.msra.mxu0 0.0
  %41 = vmatpush.msra.mxu0 %v15
  %42 = vmatpush.msra.mxu0 %v14
  %43 = vmatmul.f32.gmra.mxu0 %v22
  %v44 = vpop.f32.mrf.mxu0
  %v45 = vadd.f32 %v16, %v44
  %46 = vmatmul.f32.gmra.mxu0 %v25
  %v47 = vpop.f32.mrf.mxu0
  %v48 = vadd.f32 %v17, %v47
  %49 = vdwg.mxu0
  %v50 = vld [vmem:[%s1] sm:$0xff]
  %v51 = vld [vmem:[%s1 + $0x8] sm:$0xff]
  %v52 = vld [vmem:[%s1 + $0x10] sm:$0xff]
  %v53 = vld [vmem:[%s1 + $0x18] sm:$0xff]
  %v54 = vld [vmem:[%s1 + $0x20] sm:$0xff]
  %v55 = vld [vmem:[%s1 + $0x28] sm:$0xff]
  %v56 = vld [vmem:[%s2 + $0x20] sm:$0xff]
  %v57 = vld [vmem:[%s2 + $0x28] sm:$0xff]
  %v58 = vld [vmem:[%s2 + $0x30] sm:$0xff]
  %v59 = vld [vmem:[%s2 + $0x38] sm:$0xff]
  %v60 = vld [vmem:[%s2 + $0x40] sm:$0xff]
  %v61 = vld [vmem:[%s2 + $0x48] sm:$0xff]
  %v62 = vld [vmem:[%s2 + $0x50] sm:$0xff]
  %v63 = vld [vmem:[%s2 + $0x58] sm:$0xff]
  %v64 = vld [vmem:[%s2 + $0x60] sm:$0xff]
  %v65 = vld [vmem:[%s2 + $0x68] sm:$0xff]
  %v66 = vld [vmem:[%s2 + $0x70] sm:$0xff]
  %v67 = vld [vmem:[%s2 + $0x78] sm:$0xff]
  %v68 = vld [vmem:[%s2 + $0x80] sm:$0xff]
  %v69 = vld [vmem:[%s2 + $0x88] sm:$0xff]
  %v70 = vld [vmem:[%s2 + $0x90] sm:$0xff]
  %v71 = vld [vmem:[%s2 + $0x98] sm:$0xff]
  %v72 = vld [vmem:[%s1 + $0x30] sm:$0xff]
  %v73 = vld [vmem:[%s1 + $0x38] sm:$0xff]
  %v74 = vld [vmem:[%s1 + $0x40] sm:$0xff]
  %v75 = vld [vmem:[%s1 + $0x48] sm:$0xff]
  %v76 = vld [vmem:[%s1 + $0xf0] sm:$0xff]
  %v77 = vld [vmem:[%s1 + $0xf8] sm:$0xff]
  %v78 = vld [vmem:[%s1 + $0x100] sm:$0xff]
  %v79 = vld [vmem:[%s1 + $0x108] sm:$0xff]
  %v80 = vld [vmem:[%s1 + $0x1b0] sm:$0xff]
  %v81 = vld [vmem:[%s2 + $0xa0] sm:$0xff]
  %v82 = vld [vmem:[%s2 + $0xa8] sm:$0xff]
  %v83 = vld [vmem:[%s2 + $0xb0] sm:$0xff]
  %v84 = vld [vmem:[%s2 + $0xb8] sm:$0xff]
  %v85 = vld [vmem:[%s2 + $0x160] sm:$0xff]
  %v86 = vld [vmem:[%s2 + $0x168] sm:$0xff]
  %v87 = vld [vmem:[%s2 + $0x170] sm:$0xff]
  %v88 = vld [vmem:[%s2 + $0x178] sm:$0xff]
  %v89 = vld [vmem:[%s2 + $0x180] sm:$0xff]
  %v90 = vld [vmem:[%s2 + $0x188] sm:$0xff]
  %v91 = vld [vmem:[%s2 + $0x190] sm:$0xff]
  %v92 = vld [vmem:[%s2 + $0x198] sm:$0xff]
  %v93 = vld [vmem:[%s2 + $0x1a0] sm:$0xff]
  %v94 = vld [vmem:[%s2 + $0x1a8] sm:$0xff]
  %v95 = vld [vmem:[%s2 + $0x1b0] sm:$0xff]
  %v96 = vld [vmem:[%s2 + $0x1b8] sm:$0xff]
  %v97 = vld [vmem:[%s2 + $0x1c0] sm:$0xff]
  %v98 = vld [vmem:[%s2 + $0x1c8] sm:$0xff]
  %v99 = vld [vmem:[%s2 + $0x1d0] sm:$0xff]
  %v100 = vld [vmem:[%s2 + $0x1d8] sm:$0xff]
  %v101 = vperm.slane %v80, 0
  %vm102 = vcmask 261120
  %v104 = vsel %vm102, %v45, 0
  %v107 = vsel %vm102, %v48, 0
  %109 = vmatpush.msra.mxu0 0.0
  %110 = vmatpush.msra.mxu0 0.0
  %111 = vmatpush.msra.mxu0 0.0
  %112 = vmatpush.msra.mxu0 0.0
  %113 = vmatpush.msra.mxu0 0.0
  %114 = vmatpush.msra.mxu0 0.0
  %115 = vmatpush.msra.mxu0 0.0
  %116 = vmatpush.msra.mxu0 0.0
  %117 = vmatpush.msra.mxu0 0.0
  %118 = vmatpush.msra.mxu0 0.0
  %119 = vmatpush.msra.mxu0 0.0
  %120 = vmatpush.msra.mxu0 0.0
  %121 = vmatpush.msra.mxu0 %v75
  %122 = vmatpush.msra.mxu0 %v74
  %123 = vmatpush.msra.mxu0 %v73
  %124 = vmatpush.msra.mxu0 %v72
  %125 = vmatmul.f32.gmra.mxu0 %v104
  %v126 = vpop.f32.mrf.mxu0
  %v127 = vadd.f32 %v101, %v126
  %128 = vmatmul.f32.gmra.mxu0 %v107
  %v129 = vpop.f32.mrf.mxu0
  %v130 = vadd.f32 %v101, %v129
  %131 = vdwg.mxu0
  %134 = vrot.lane.b32.xlu0 %v127, 96
  %v135 = vpop.permute.xlu0 %134
  %136 = vrot.lane.b32.xlu0 %v130, 96
  %v137 = vpop.permute.xlu0 %136
  %140 = vxpose.xlu0.b32.start [1/16] %v135, 128
  %141 = vxpose.xlu0.b32.cont [2/16] %v137, 128
  %142 = vxpose.xlu0.b32.cont [3/16] 0.0, 128
  %143 = vxpose.xlu0.b32.cont [4/16] 0.0, 128
  %144 = vxpose.xlu0.b32.cont [5/16] 0.0, 128
  %145 = vxpose.xlu0.b32.cont [6/16] 0.0, 128
  %146 = vxpose.xlu0.b32.cont [7/16] 0.0, 128
  %147 = vxpose.xlu0.b32.cont [8/16] 0.0, 128
  %148 = vxpose.xlu0.b32.cont [9/16] 0.0, 128
  %149 = vxpose.xlu0.b32.cont [10/16] 0.0, 128
  %150 = vxpose.xlu0.b32.cont [11/16] 0.0, 128
  %151 = vxpose.xlu0.b32.cont [12/16] 0.0, 128
  %152 = vxpose.xlu0.b32.cont [13/16] 0.0, 128
  %153 = vxpose.xlu0.b32.cont [14/16] 0.0, 128
  %154 = vxpose.xlu0.b32.cont [15/16] 0.0, 128
  %155 = vxpose.xlu0.b32.end [16/16] 0.0, 128
  %v156 = vpop.trf.xlu0
  %v157 = vpop.trf.xlu0
  %v158 = vpop.trf.xlu0
  %v159 = vpop.trf.xlu0
  %v160 = vpop.trf.xlu0
  %v161 = vpop.trf.xlu0
  %v162 = vpop.trf.xlu0
  %v163 = vpop.trf.xlu0
  %v164 = vpop.trf.xlu0
  %v165 = vpop.trf.xlu0
  %v166 = vpop.trf.xlu0
  %v167 = vpop.trf.xlu0
  %v168 = vpop.trf.xlu0
  %v169 = vpop.trf.xlu0
  %v170 = vpop.trf.xlu0
  %v171 = vpop.trf.xlu0
  %176 = vrot.lane.b32.xlu0 %v156, 16
  %v177 = vpop.permute.xlu0 %176
  %178 = vrot.lane.b32.xlu0 %v157, 16
  %v179 = vpop.permute.xlu0 %178
  %180 = vrot.lane.b32.xlu0 %v158, 16
  %v181 = vpop.permute.xlu0 %180
  %182 = vrot.lane.b32.xlu0 %v159, 16
  %v183 = vpop.permute.xlu0 %182
  %188 = vrot.lane.b32.xlu0 %v156, 32
  %v189 = vpop.permute.xlu0 %188
  %190 = vrot.lane.b32.xlu0 %v157, 32
  %v191 = vpop.permute.xlu0 %190
  %192 = vrot.lane.b32.xlu0 %v158, 32
  %v193 = vpop.permute.xlu0 %192
  %194 = vrot.lane.b32.xlu0 %v159, 32
  %v195 = vpop.permute.xlu0 %194
  %200 = vrot.lane.b32.xlu0 %v156, 48
  %v201 = vpop.permute.xlu0 %200
  %202 = vrot.lane.b32.xlu0 %v157, 48
  %v203 = vpop.permute.xlu0 %202
  %204 = vrot.lane.b32.xlu0 %v158, 48
  %v205 = vpop.permute.xlu0 %204
  %206 = vrot.lane.b32.xlu0 %v159, 48
  %v207 = vpop.permute.xlu0 %206
  %212 = vrot.lane.b32.xlu0 %v156, 64
  %v213 = vpop.permute.xlu0 %212
  %214 = vrot.lane.b32.xlu0 %v157, 64
  %v215 = vpop.permute.xlu0 %214
  %216 = vrot.lane.b32.xlu0 %v158, 64
  %v217 = vpop.permute.xlu0 %216
  %218 = vrot.lane.b32.xlu0 %v159, 64
  %v219 = vpop.permute.xlu0 %218
  %224 = vrot.lane.b32.xlu0 %v156, 80
  %v225 = vpop.permute.xlu0 %224
  %226 = vrot.lane.b32.xlu0 %v157, 80
  %v227 = vpop.permute.xlu0 %226
  %228 = vrot.lane.b32.xlu0 %v158, 80
  %v229 = vpop.permute.xlu0 %228
  %230 = vrot.lane.b32.xlu0 %v159, 80
  %v231 = vpop.permute.xlu0 %230
  %236 = vrot.lane.b32.xlu0 %v156, 96
  %v237 = vpop.permute.xlu0 %236
  %238 = vrot.lane.b32.xlu0 %v157, 96
  %v239 = vpop.permute.xlu0 %238
  %240 = vrot.lane.b32.xlu0 %v158, 96
  %v241 = vpop.permute.xlu0 %240
  %242 = vrot.lane.b32.xlu0 %v159, 96
  %v243 = vpop.permute.xlu0 %242
  %248 = vrot.lane.b32.xlu0 %v156, 112
  %v249 = vpop.permute.xlu0 %248
  %250 = vrot.lane.b32.xlu0 %v157, 112
  %v251 = vpop.permute.xlu0 %250
  %252 = vrot.lane.b32.xlu0 %v158, 112
  %v253 = vpop.permute.xlu0 %252
  %254 = vrot.lane.b32.xlu0 %v159, 112
  %v255 = vpop.permute.xlu0 %254
  %v260 = vsel %vm20, %v156, %v177
  %v261 = vsel %vm20, %v157, %v179
  %v262 = vsel %vm20, %v158, %v181
  %v263 = vsel %vm20, %v159, %v183
  %v264 = vsel %vm102, %v260, %v189
  %v265 = vsel %vm102, %v261, %v191
  %v266 = vsel %vm102, %v262, %v193
  %v267 = vsel %vm102, %v263, %v195
  %vm268 = vcmask 392192
  %v269 = vsel %vm268, %v264, %v201
  %v270 = vsel %vm268, %v265, %v203
  %v271 = vsel %vm268, %v266, %v205
  %v272 = vsel %vm268, %v267, %v207
  %vm273 = vcmask 523264
  %v274 = vsel %vm273, %v269, %v213
  %v275 = vsel %vm273, %v270, %v215
  %v276 = vsel %vm273, %v271, %v217
  %v277 = vsel %vm273, %v272, %v219
  %vm278 = vcmask 654336
  %v279 = vsel %vm278, %v274, %v225
  %v280 = vsel %vm278, %v275, %v227
  %v281 = vsel %vm278, %v276, %v229
  %v282 = vsel %vm278, %v277, %v231
  %vm283 = vcmask 785408
  %v284 = vsel %vm283, %v279, %v237
  %v285 = vsel %vm283, %v280, %v239
  %v286 = vsel %vm283, %v281, %v241
  %v287 = vsel %vm283, %v282, %v243
  %vm288 = vcmask 916480
  %v289 = vsel %vm288, %v284, %v249
  %v290 = vsel %vm288, %v285, %v251
  %v291 = vsel %vm288, %v286, %v253
  %v292 = vsel %vm288, %v287, %v255
  %v293 = vmul.f32 %v289, %v50
  %v294 = vmul.f32 %v290, %v51
  %v295 = vmul.f32 %v291, %v52
  %v296 = vmul.f32 %v292, %v53
  %v297 = vsel %vm102, %v127, 0
  %v299 = vsel %vm102, %v130, 0
  %301 = vmatpush.msra.mxu0 0.0
  %302 = vmatpush.msra.mxu0 0.0
  %303 = vmatpush.msra.mxu0 0.0
  %304 = vmatpush.msra.mxu0 0.0
  %305 = vmatpush.msra.mxu0 0.0
  %306 = vmatpush.msra.mxu0 0.0
  %307 = vmatpush.msra.mxu0 0.0
  %308 = vmatpush.msra.mxu0 0.0
  %309 = vmatpush.msra.mxu0 0.0
  %310 = vmatpush.msra.mxu0 0.0
  %311 = vmatpush.msra.mxu0 0.0
  %312 = vmatpush.msra.mxu0 0.0
  %313 = vmatpush.msra.mxu0 %v296
  %314 = vmatpush.msra.mxu0 %v295
  %315 = vmatpush.msra.mxu0 %v294
  %316 = vmatpush.msra.mxu0 %v293
  %317 = vmatmul.f32.gmra.mxu0 %v297
  %v318 = vpop.f32.mrf.mxu0
  %v319 = vadd.f32 %v54, %v318
  %320 = vmatmul.f32.gmra.mxu0 %v299
  %v321 = vpop.f32.mrf.mxu0
  %v322 = vadd.f32 %v55, %v321
  %323 = vdwg.mxu0
  %324 = vmax.xlane.f32.xlu0 %v319
  %v325 = vpop.xlane.xlu0 %324
  %326 = vmax.xlane.f32.xlu0 %v322
  %v327 = vpop.xlane.xlu0 %326
  %v328 = vsub.f32 %v319, %v325
  %v329 = vsub.f32 %v322, %v327
  %v330 = vmul.f32 %v328, 1.442695
  %v331 = vpow.pop %v330
  %v332 = vmul.f32 %v329, 1.442695
  %v333 = vpow.pop %v332
  %350 = vrot.lane.b32.xlu0 %v56, 64
  %v351 = vpop.permute.xlu0 %350
  %352 = vrot.lane.b32.xlu0 %v57, 64
  %v353 = vpop.permute.xlu0 %352
  %354 = vrot.lane.b32.xlu0 %v58, 64
  %v355 = vpop.permute.xlu0 %354
  %356 = vrot.lane.b32.xlu0 %v59, 64
  %v357 = vpop.permute.xlu0 %356
  %358 = vrot.lane.b32.xlu0 %v60, 64
  %v359 = vpop.permute.xlu0 %358
  %360 = vrot.lane.b32.xlu0 %v61, 64
  %v361 = vpop.permute.xlu0 %360
  %362 = vrot.lane.b32.xlu0 %v62, 64
  %v363 = vpop.permute.xlu0 %362
  %364 = vrot.lane.b32.xlu0 %v63, 64
  %v365 = vpop.permute.xlu0 %364
  %366 = vrot.lane.b32.xlu0 %v64, 64
  %v367 = vpop.permute.xlu0 %366
  %368 = vrot.lane.b32.xlu0 %v65, 64
  %v369 = vpop.permute.xlu0 %368
  %370 = vrot.lane.b32.xlu0 %v66, 64
  %v371 = vpop.permute.xlu0 %370
  %372 = vrot.lane.b32.xlu0 %v67, 64
  %v373 = vpop.permute.xlu0 %372
  %374 = vrot.lane.b32.xlu0 %v68, 64
  %v375 = vpop.permute.xlu0 %374
  %376 = vrot.lane.b32.xlu0 %v69, 64
  %v377 = vpop.permute.xlu0 %376
  %378 = vrot.lane.b32.xlu0 %v70, 64
  %v379 = vpop.permute.xlu0 %378
  %380 = vrot.lane.b32.xlu0 %v71, 64
  %v381 = vpop.permute.xlu0 %380
  %v398 = vmul.f32 %v127, %v351
  %v399 = vmul.f32 %v130, %v353
  %v400 = vmul.f32 %v127, %v355
  %v401 = vmul.f32 %v130, %v357
  %v402 = vmul.f32 %v127, %v359
  %v403 = vmul.f32 %v130, %v361
  %v404 = vmul.f32 %v127, %v363
  %v405 = vmul.f32 %v130, %v365
  %v406 = vmul.f32 %v127, %v367
  %v407 = vmul.f32 %v130, %v369
  %v408 = vmul.f32 %v127, %v371
  %v409 = vmul.f32 %v130, %v373
  %v410 = vmul.f32 %v127, %v375
  %v411 = vmul.f32 %v130, %v377
  %v412 = vmul.f32 %v127, %v379
  %v413 = vmul.f32 %v130, %v381
  %430 = vrot.lane.b32.xlu0 %v398, 64
  %v431 = vpop.permute.xlu0 %430
  %432 = vrot.lane.b32.xlu0 %v399, 64
  %v433 = vpop.permute.xlu0 %432
  %434 = vrot.lane.b32.xlu0 %v400, 64
  %v435 = vpop.permute.xlu0 %434
  %436 = vrot.lane.b32.xlu0 %v401, 64
  %v437 = vpop.permute.xlu0 %436
  %438 = vrot.lane.b32.xlu0 %v402, 64
  %v439 = vpop.permute.xlu0 %438
  %440 = vrot.lane.b32.xlu0 %v403, 64
  %v441 = vpop.permute.xlu0 %440
  %442 = vrot.lane.b32.xlu0 %v404, 64
  %v443 = vpop.permute.xlu0 %442
  %444 = vrot.lane.b32.xlu0 %v405, 64
  %v445 = vpop.permute.xlu0 %444
  %446 = vrot.lane.b32.xlu0 %v406, 64
  %v447 = vpop.permute.xlu0 %446
  %448 = vrot.lane.b32.xlu0 %v407, 64
  %v449 = vpop.permute.xlu0 %448
  %450 = vrot.lane.b32.xlu0 %v408, 64
  %v451 = vpop.permute.xlu0 %450
  %452 = vrot.lane.b32.xlu0 %v409, 64
  %v453 = vpop.permute.xlu0 %452
  %454 = vrot.lane.b32.xlu0 %v410, 64
  %v455 = vpop.permute.xlu0 %454
  %456 = vrot.lane.b32.xlu0 %v411, 64
  %v457 = vpop.permute.xlu0 %456
  %458 = vrot.lane.b32.xlu0 %v412, 64
  %v459 = vpop.permute.xlu0 %458
  %460 = vrot.lane.b32.xlu0 %v413, 64
  %v461 = vpop.permute.xlu0 %460
  %478 = vrot.lane.b32.xlu0 %v56, 32
  %v479 = vpop.permute.xlu0 %478
  %480 = vrot.lane.b32.xlu0 %v57, 32
  %v481 = vpop.permute.xlu0 %480
  %482 = vrot.lane.b32.xlu0 %v58, 32
  %v483 = vpop.permute.xlu0 %482
  %484 = vrot.lane.b32.xlu0 %v59, 32
  %v485 = vpop.permute.xlu0 %484
  %486 = vrot.lane.b32.xlu0 %v60, 32
  %v487 = vpop.permute.xlu0 %486
  %488 = vrot.lane.b32.xlu0 %v61, 32
  %v489 = vpop.permute.xlu0 %488
  %490 = vrot.lane.b32.xlu0 %v62, 32
  %v491 = vpop.permute.xlu0 %490
  %492 = vrot.lane.b32.xlu0 %v63, 32
  %v493 = vpop.permute.xlu0 %492
  %494 = vrot.lane.b32.xlu0 %v64, 32
  %v495 = vpop.permute.xlu0 %494
  %496 = vrot.lane.b32.xlu0 %v65, 32
  %v497 = vpop.permute.xlu0 %496
  %498 = vrot.lane.b32.xlu0 %v66, 32
  %v499 = vpop.permute.xlu0 %498
  %500 = vrot.lane.b32.xlu0 %v67, 32
  %v501 = vpop.permute.xlu0 %500
  %502 = vrot.lane.b32.xlu0 %v68, 32
  %v503 = vpop.permute.xlu0 %502
  %504 = vrot.lane.b32.xlu0 %v69, 32
  %v505 = vpop.permute.xlu0 %504
  %506 = vrot.lane.b32.xlu0 %v70, 32
  %v507 = vpop.permute.xlu0 %506
  %508 = vrot.lane.b32.xlu0 %v71, 32
  %v509 = vpop.permute.xlu0 %508
  %v526 = vsel %vm102, %v431, %v479
  %v527 = vsel %vm102, %v433, %v481
  %v528 = vsel %vm102, %v435, %v483
  %v529 = vsel %vm102, %v437, %v485
  %v530 = vsel %vm102, %v439, %v487
  %v531 = vsel %vm102, %v441, %v489
  %v532 = vsel %vm102, %v443, %v491
  %v533 = vsel %vm102, %v445, %v493
  %v534 = vsel %vm102, %v447, %v495
  %v535 = vsel %vm102, %v449, %v497
  %v536 = vsel %vm102, %v451, %v499
  %v537 = vsel %vm102, %v453, %v501
  %v538 = vsel %vm102, %v455, %v503
  %v539 = vsel %vm102, %v457, %v505
  %v540 = vsel %vm102, %v459, %v507
  %v541 = vsel %vm102, %v461, %v509
  %542 = vmatpush.msra.mxu0 %v541
  %543 = vmatpush.msra.mxu0 %v540
  %544 = vmatpush.msra.mxu0 %v539
  %545 = vmatpush.msra.mxu0 %v538
  %546 = vmatpush.msra.mxu0 %v537
  %547 = vmatpush.msra.mxu0 %v536
  %548 = vmatpush.msra.mxu0 %v535
  %549 = vmatpush.msra.mxu0 %v534
  %550 = vmatpush.msra.mxu0 %v533
  %551 = vmatpush.msra.mxu0 %v532
  %552 = vmatpush.msra.mxu0 %v531
  %553 = vmatpush.msra.mxu0 %v530
  %554 = vmatpush.msra.mxu0 %v529
  %555 = vmatpush.msra.mxu0 %v528
  %556 = vmatpush.msra.mxu0 %v527
  %557 = vmatpush.msra.mxu0 %v526
  %558 = vmatmul.f32.gmra.mxu0 %v331
  %v559 = vpop.f32.mrf.mxu0
  %v560 = vadd.f32 0.0, %v559
  %561 = vmatmul.f32.gmra.mxu0 %v333
  %v562 = vpop.f32.mrf.mxu0
  %v563 = vadd.f32 0.0, %v562
  %564 = vdwg.mxu0
  %567 = vrot.lane.b32.xlu0 %v560, 96
  %v568 = vpop.permute.xlu0 %567
  %569 = vrot.lane.b32.xlu0 %v563, 96
  %v570 = vpop.permute.xlu0 %569
  %v573 = vrcp.pop %v568
  %v574 = vmul.f32 %v568, %v573
  %v575 = vsub.f32 1.0, %v574
  %v576 = vmul.f32 %v573, %v575
  %v577 = vadd.f32 %v573, %v576
  %vm578 = vweird.f32 %v568
  %vm579 = vweird.f32 %v573
  %vm580 = vmor %vm578, %vm579
  %v581 = vsel %vm580, %v573, %v577
  %v582 = vand.u32 2147483647, %v568
  %vm583 = vcmp.eq.f32.partialorder %v582, 8.507059e+37
  %v584 = vand.u32 %v568, 2147483648
  %v585 = vor.u32 1.1754944e-38, %v584
  %v586 = vsel %vm583, %v585, %v581
  %v587 = vmul.f32 %v560, %v586
  %v588 = vrcp.pop %v570
  %v589 = vmul.f32 %v570, %v588
  %v590 = vsub.f32 1.0, %v589
  %v591 = vmul.f32 %v588, %v590
  %v592 = vadd.f32 %v588, %v591
  %vm593 = vweird.f32 %v570
  %vm594 = vweird.f32 %v588
  %vm595 = vmor %vm593, %vm594
  %v596 = vsel %vm595, %v588, %v592
  %v597 = vand.u32 2147483647, %v570
  %vm598 = vcmp.eq.f32.partialorder %v597, 8.507059e+37
  %v599 = vand.u32 %v570, 2147483648
  %v600 = vor.u32 1.1754944e-38, %v599
  %v601 = vsel %vm598, %v600, %v596
  %v602 = vmul.f32 %v563, %v601
  %v603 = vperm.slane %v80, 1
  %v605 = vsel %vm102, %v587, 0
  %v608 = vsel %vm102, %v602, 0
  %610 = vmatpush.msra.mxu0 0.0
  %611 = vmatpush.msra.mxu0 0.0
  %612 = vmatpush.msra.mxu0 0.0
  %613 = vmatpush.msra.mxu0 0.0
  %614 = vmatpush.msra.mxu0 0.0
  %615 = vmatpush.msra.mxu0 0.0
  %616 = vmatpush.msra.mxu0 0.0
  %617 = vmatpush.msra.mxu0 0.0
  %618 = vmatpush.msra.mxu0 0.0
  %619 = vmatpush.msra.mxu0 0.0
  %620 = vmatpush.msra.mxu0 0.0
  %621 = vmatpush.msra.mxu0 0.0
  %622 = vmatpush.msra.mxu0 %v84
  %623 = vmatpush.msra.mxu0 %v83
  %624 = vmatpush.msra.mxu0 %v82
  %625 = vmatpush.msra.mxu0 %v81
  %626 = vmatmul.f32.gmra.mxu0 %v605
  %v627 = vpop.f32.mrf.mxu0
  %v628 = vadd.f32 %v603, %v627
  %629 = vmatmul.f32.gmra.mxu0 %v608
  %v630 = vpop.f32.mrf.mxu0
  %v631 = vadd.f32 %v603, %v630
  %632 = vdwg.mxu0
  %v633 = vadd.f32 %v45, %v628
  %v634 = vadd.f32 %v48, %v631
  %v635 = vsel %vm102, %v633, 0.0
  %636 = vadd.xlane.f32.xlu0 %v635
  %v637 = vpop.xlane.xlu0 %636
  %v638 = vsel %vm102, %v634, 0.0
  %639 = vadd.xlane.f32.xlu0 %v638
  %v640 = vpop.xlane.xlu0 %639
  %v641 = vrcp.pop 32.0
  %v642 = vmul.f32 32.0, %v641
  %v643 = vsub.f32 1.0, %v642
  %v644 = vmul.f32 %v641, %v643
  %v645 = vadd.f32 %v641, %v644
  %vm646 = vweird.f32 %v641
  %v647 = vsel %vm646, %v641, %v645
  %v648 = vmul.f32 %v637, %v647
  %v649 = vmul.f32 %v640, %v647
  %v650 = vsub.f32 %v633, %v648
  %v651 = vsub.f32 %v634, %v649
  %v652 = vmul.f32 %v650, %v650
  %v653 = vmul.f32 %v651, %v651
  %v654 = vsel %vm102, %v652, 0.0
  %655 = vadd.xlane.f32.xlu0 %v654
  %v656 = vpop.xlane.xlu0 %655
  %v657 = vsel %vm102, %v653, 0.0
  %658 = vadd.xlane.f32.xlu0 %v657
  %v659 = vpop.xlane.xlu0 %658
  %v660 = vmul.f32 %v656, %v647
  %v661 = vmul.f32 %v659, %v647
  %v662 = vadd.f32 %v660, 1e-05
  %v663 = vadd.f32 %v661, 1e-05
  %v664 = vrsqrt.pop %v662
  %v665 = vmul.f32 %v664, %v662
  %v666 = vmul.f32 %v665, %v664
  %v667 = vmul.f32 0.5, %v666
  %v668 = vsub.f32 1.5, %v667
  %v669 = vmul.f32 %v664, %v668
  %vm670 = vweird.f32 %v662
  %vm671 = vweird.f32 %v664
  %vm672 = vmor %vm670, %vm671
  %v673 = vsel %vm672, %v664, %v669
  %v674 = vrsqrt.pop %v663
  %v675 = vmul.f32 %v674, %v663
  %v676 = vmul.f32 %v675, %v674
  %v677 = vmul.f32 0.5, %v676
  %v678 = vsub.f32 1.5, %v677
  %v679 = vmul.f32 %v674, %v678
  %vm680 = vweird.f32 %v663
  %vm681 = vweird.f32 %v674
  %vm682 = vmor %vm680, %vm681
  %v683 = vsel %vm682, %v674, %v679
  %v684 = vmul.f32 %v650, %v673
  %v685 = vmul.f32 %v651, %v683
  %v686 = vperm.slane %v80, 2
  %v687 = vmul.f32 %v684, %v686
  %v688 = vmul.f32 %v685, %v686
  %v689 = vperm.slane %v80, 3
  %v690 = vadd.f32 %v687, %v689
  %v691 = vadd.f32 %v688, %v689
  %v692 = vperm.slane %v80, 4
  %v694 = vsel %vm102, %v690, 0
  %v697 = vsel %vm102, %v691, 0
  %699 = vmatpush.msra.mxu0 0.0
  %700 = vmatpush.msra.mxu0 0.0
  %701 = vmatpush.msra.mxu0 0.0
  %702 = vmatpush.msra.mxu0 0.0
  %703 = vmatpush.msra.mxu0 0.0
  %704 = vmatpush.msra.mxu0 0.0
  %705 = vmatpush.msra.mxu0 0.0
  %706 = vmatpush.msra.mxu0 0.0
  %707 = vmatpush.msra.mxu0 0.0
  %708 = vmatpush.msra.mxu0 0.0
  %709 = vmatpush.msra.mxu0 0.0
  %710 = vmatpush.msra.mxu0 0.0
  %711 = vmatpush.msra.mxu0 %v79
  %712 = vmatpush.msra.mxu0 %v78
  %713 = vmatpush.msra.mxu0 %v77
  %714 = vmatpush.msra.mxu0 %v76
  %715 = vmatmul.f32.gmra.mxu0 %v694
  %v716 = vpop.f32.mrf.mxu0
  %v717 = vadd.f32 %v692, %v716
  %718 = vmatmul.f32.gmra.mxu0 %v697
  %v719 = vpop.f32.mrf.mxu0
  %v720 = vadd.f32 %v692, %v719
  %721 = vdwg.mxu0
  %v722 = vmax.f32 %v717, 0.0
  %v723 = vmax.f32 %v720, 0.0
  %v724 = vperm.slane %v80, 5
  %725 = vmatpush.msra.mxu0 %v100
  %726 = vmatpush.msra.mxu0 %v99
  %727 = vmatpush.msra.mxu0 %v98
  %728 = vmatpush.msra.mxu0 %v97
  %729 = vmatpush.msra.mxu0 %v96
  %730 = vmatpush.msra.mxu0 %v95
  %731 = vmatpush.msra.mxu0 %v94
  %732 = vmatpush.msra.mxu0 %v93
  %733 = vmatpush.msra.mxu0 %v92
  %734 = vmatpush.msra.mxu0 %v91
  %735 = vmatpush.msra.mxu0 %v90
  %736 = vmatpush.msra.mxu0 %v89
  %737 = vmatpush.msra.mxu0 %v88
  %738 = vmatpush.msra.mxu0 %v87
  %739 = vmatpush.msra.mxu0 %v86
  %740 = vmatpush.msra.mxu0 %v85
  %741 = vmatmul.f32.gmra.mxu0 %v722
  %v742 = vpop.f32.mrf.mxu0
  %v743 = vadd.f32 %v724, %v742
  %744 = vmatmul.f32.gmra.mxu0 %v723
  %v745 = vpop.f32.mrf.mxu0
  %v746 = vadd.f32 %v724, %v745
  %747 = vdwg.mxu0
  %v748 = vadd.f32 %v690, %v743
  %v749 = vadd.f32 %v691, %v746
  %v750 = vsel %vm102, %v748, 0.0
  %751 = vadd.xlane.f32.xlu0 %v750
  %v752 = vpop.xlane.xlu0 %751
  %v753 = vsel %vm102, %v749, 0.0
  %754 = vadd.xlane.f32.xlu0 %v753
  %v755 = vpop.xlane.xlu0 %754
  %v756 = vmul.f32 %v752, %v647
  %v757 = vmul.f32 %v755, %v647
  %v758 = vsub.f32 %v748, %v756
  %v759 = vsub.f32 %v749, %v757
  %v760 = vmul.f32 %v758, %v758
  %v761 = vmul.f32 %v759, %v759
  %v762 = vsel %vm102, %v760, 0.0
  %763 = vadd.xlane.f32.xlu0 %v762
  %v764 = vpop.xlane.xlu0 %763
  %v765 = vsel %vm102, %v761, 0.0
  %766 = vadd.xlane.f32.xlu0 %v765
  %v767 = vpop.xlane.xlu0 %766
  %v768 = vmul.f32 %v764, %v647
  %v769 = vmul.f32 %v767, %v647
  %v770 = vadd.f32 %v768, 1e-05
  %v771 = vadd.f32 %v769, 1e-05
  %v772 = vrsqrt.pop %v770
  %v773 = vmul.f32 %v772, %v770
  %v774 = vmul.f32 %v773, %v772
  %v775 = vmul.f32 0.5, %v774
  %v776 = vsub.f32 1.5, %v775
  %v777 = vmul.f32 %v772, %v776
  %vm778 = vweird.f32 %v770
  %vm779 = vweird.f32 %v772
  %vm780 = vmor %vm778, %vm779
  %v781 = vsel %vm780, %v772, %v777
  %v782 = vrsqrt.pop %v771
  %v783 = vmul.f32 %v782, %v771
  %v784 = vmul.f32 %v783, %v782
  %v785 = vmul.f32 0.5, %v784
  %v786 = vsub.f32 1.5, %v785
  %v787 = vmul.f32 %v782, %v786
  %vm788 = vweird.f32 %v771
  %vm789 = vweird.f32 %v782
  %vm790 = vmor %vm788, %vm789
  %v791 = vsel %vm790, %v782, %v787
  %v792 = vmul.f32 %v758, %v781
  %v793 = vmul.f32 %v759, %v791
  %v794 = vperm.slane %v80, 6
  %v795 = vmul.f32 %v792, %v794
  %v796 = vmul.f32 %v793, %v794
  %v797 = vperm.slane %v80, 7
  %v798 = vadd.f32 %v795, %v797
  %v799 = vadd.f32 %v796, %v797
  %v800 = vld [vmem:[%s1 + $0x50] sm:$0xff]
  %v801 = vld [vmem:[%s1 + $0x58] sm:$0xff]
  %v802 = vld [vmem:[%s1 + $0x60] sm:$0xff]
  %v803 = vld [vmem:[%s1 + $0x68] sm:$0xff]
  %v804 = vld [vmem:[%s1 + $0x110] sm:$0xff]
  %v805 = vld [vmem:[%s1 + $0x118] sm:$0xff]
  %v806 = vld [vmem:[%s1 + $0x120] sm:$0xff]
  %v807 = vld [vmem:[%s1 + $0x128] sm:$0xff]
  %v808 = vld [vmem:[%s1 + $0x1b8] sm:$0xff]
  %v809 = vld [vmem:[%s2 + $0xc0] sm:$0xff]
  %v810 = vld [vmem:[%s2 + $0xc8] sm:$0xff]
  %v811 = vld [vmem:[%s2 + $0xd0] sm:$0xff]
  %v812 = vld [vmem:[%s2 + $0xd8] sm:$0xff]
  %v813 = vld [vmem:[%s2 + $0x1e0] sm:$0xff]
  %v814 = vld [vmem:[%s2 + $0x1e8] sm:$0xff]
  %v815 = vld [vmem:[%s2 + $0x1f0] sm:$0xff]
  %v816 = vld [vmem:[%s2 + $0x1f8] sm:$0xff]
  %v817 = vld [vmem:[%s2 + $0x200] sm:$0xff]
  %v818 = vld [vmem:[%s2 + $0x208] sm:$0xff]
  %v819 = vld [vmem:[%s2 + $0x210] sm:$0xff]
  %v820 = vld [vmem:[%s2 + $0x218] sm:$0xff]
  %v821 = vld [vmem:[%s2 + $0x220] sm:$0xff]
  %v822 = vld [vmem:[%s2 + $0x228] sm:$0xff]
  %v823 = vld [vmem:[%s2 + $0x230] sm:$0xff]
  %v824 = vld [vmem:[%s2 + $0x238] sm:$0xff]
  %v825 = vld [vmem:[%s2 + $0x240] sm:$0xff]
  %v826 = vld [vmem:[%s2 + $0x248] sm:$0xff]
  %v827 = vld [vmem:[%s2 + $0x250] sm:$0xff]
  %v828 = vld [vmem:[%s2 + $0x258] sm:$0xff]
  %v829 = vperm.slane %v808, 0
  %v831 = vsel %vm102, %v798, 0
  %v834 = vsel %vm102, %v799, 0
  %836 = vmatpush.msra.mxu0 0.0
  %837 = vmatpush.msra.mxu0 0.0
  %838 = vmatpush.msra.mxu0 0.0
  %839 = vmatpush.msra.mxu0 0.0
  %840 = vmatpush.msra.mxu0 0.0
  %841 = vmatpush.msra.mxu0 0.0
  %842 = vmatpush.msra.mxu0 0.0
  %843 = vmatpush.msra.mxu0 0.0
  %844 = vmatpush.msra.mxu0 0.0
  %845 = vmatpush.msra.mxu0 0.0
  %846 = vmatpush.msra.mxu0 0.0
  %847 = vmatpush.msra.mxu0 0.0
  %848 = vmatpush.msra.mxu0 %v803
  %849 = vmatpush.msra.mxu0 %v802
  %850 = vmatpush.msra.mxu0 %v801
  %851 = vmatpush.msra.mxu0 %v800
  %852 = vmatmul.f32.gmra.mxu0 %v831
  %v853 = vpop.f32.mrf.mxu0
  %v854 = vadd.f32 %v829, %v853
  %855 = vmatmul.f32.gmra.mxu0 %v834
  %v856 = vpop.f32.mrf.mxu0
  %v857 = vadd.f32 %v829, %v856
  %858 = vdwg.mxu0
  %861 = vrot.lane.b32.xlu0 %v854, 96
  %v862 = vpop.permute.xlu0 %861
  %863 = vrot.lane.b32.xlu0 %v857, 96
  %v864 = vpop.permute.xlu0 %863
  %867 = vxpose.xlu0.b32.start [1/16] %v862, 128
  %868 = vxpose.xlu0.b32.cont [2/16] %v864, 128
  %869 = vxpose.xlu0.b32.cont [3/16] 0.0, 128
  %870 = vxpose.xlu0.b32.cont [4/16] 0.0, 128
  %871 = vxpose.xlu0.b32.cont [5/16] 0.0, 128
  %872 = vxpose.xlu0.b32.cont [6/16] 0.0, 128
  %873 = vxpose.xlu0.b32.cont [7/16] 0.0, 128
  %874 = vxpose.xlu0.b32.cont [8/16] 0.0, 128
  %875 = vxpose.xlu0.b32.cont [9/16] 0.0, 128
  %876 = vxpose.xlu0.b32.cont [10/16] 0.0, 128
  %877 = vxpose.xlu0.b32.cont [11/16] 0.0, 128
  %878 = vxpose.xlu0.b32.cont [12/16] 0.0, 128
  %879 = vxpose.xlu0.b32.cont [13/16] 0.0, 128
  %880 = vxpose.xlu0.b32.cont [14/16] 0.0, 128
  %881 = vxpose.xlu0.b32.cont [15/16] 0.0, 128
  %882 = vxpose.xlu0.b32.end [16/16] 0.0, 128
  %v883 = vpop.trf.xlu0
  %v884 = vpop.trf.xlu0
  %v885 = vpop.trf.xlu0
  %v886 = vpop.trf.xlu0
  %v887 = vpop.trf.xlu0
  %v888 = vpop.trf.xlu0
  %v889 = vpop.trf.xlu0
  %v890 = vpop.trf.xlu0
  %v891 = vpop.trf.xlu0
  %v892 = vpop.trf.xlu0
  %v893 = vpop.trf.xlu0
  %v894 = vpop.trf.xlu0
  %v895 = vpop.trf.xlu0
  %v896 = vpop.trf.xlu0
  %v897 = vpop.trf.xlu0
  %v898 = vpop.trf.xlu0
  %903 = vrot.lane.b32.xlu0 %v883, 16
  %v904 = vpop.permute.xlu0 %903
  %905 = vrot.lane.b32.xlu0 %v884, 16
  %v906 = vpop.permute.xlu0 %905
  %907 = vrot.lane.b32.xlu0 %v885, 16
  %v908 = vpop.permute.xlu0 %907
  %909 = vrot.lane.b32.xlu0 %v886, 16
  %v910 = vpop.permute.xlu0 %909
  %915 = vrot.lane.b32.xlu0 %v883, 32
  %v916 = vpop.permute.xlu0 %915
  %917 = vrot.lane.b32.xlu0 %v884, 32
  %v918 = vpop.permute.xlu0 %917
  %919 = vrot.lane.b32.xlu0 %v885, 32
  %v920 = vpop.permute.xlu0 %919
  %921 = vrot.lane.b32.xlu0 %v886, 32
  %v922 = vpop.permute.xlu0 %921
  %927 = vrot.lane.b32.xlu0 %v883, 48
  %v928 = vpop.permute.xlu0 %927
  %929 = vrot.lane.b32.xlu0 %v884, 48
  %v930 = vpop.permute.xlu0 %929
  %931 = vrot.lane.b32.xlu0 %v885, 48
  %v932 = vpop.permute.xlu0 %931
  %933 = vrot.lane.b32.xlu0 %v886, 48
  %v934 = vpop.permute.xlu0 %933
  %939 = vrot.lane.b32.xlu0 %v883, 64
  %v940 = vpop.permute.xlu0 %939
  %941 = vrot.lane.b32.xlu0 %v884, 64
  %v942 = vpop.permute.xlu0 %941
  %943 = vrot.lane.b32.xlu0 %v885, 64
  %v944 = vpop.permute.xlu0 %943
  %945 = vrot.lane.b32.xlu0 %v886, 64
  %v946 = vpop.permute.xlu0 %945
  %951 = vrot.lane.b32.xlu0 %v883, 80
  %v952 = vpop.permute.xlu0 %951
  %953 = vrot.lane.b32.xlu0 %v884, 80
  %v954 = vpop.permute.xlu0 %953
  %955 = vrot.lane.b32.xlu0 %v885, 80
  %v956 = vpop.permute.xlu0 %955
  %957 = vrot.lane.b32.xlu0 %v886, 80
  %v958 = vpop.permute.xlu0 %957
  %963 = vrot.lane.b32.xlu0 %v883, 96
  %v964 = vpop.permute.xlu0 %963
  %965 = vrot.lane.b32.xlu0 %v884, 96
  %v966 = vpop.permute.xlu0 %965
  %967 = vrot.lane.b32.xlu0 %v885, 96
  %v968 = vpop.permute.xlu0 %967
  %969 = vrot.lane.b32.xlu0 %v886, 96
  %v970 = vpop.permute.xlu0 %969
  %975 = vrot.lane.b32.xlu0 %v883, 112
  %v976 = vpop.permute.xlu0 %975
  %977 = vrot.lane.b32.xlu0 %v884, 112
  %v978 = vpop.permute.xlu0 %977
  %979 = vrot.lane.b32.xlu0 %v885, 112
  %v980 = vpop.permute.xlu0 %979
  %981 = vrot.lane.b32.xlu0 %v886, 112
  %v982 = vpop.permute.xlu0 %981
  %v987 = vsel %vm20, %v883, %v904
  %v988 = vsel %vm20, %v884, %v906
  %v989 = vsel %vm20, %v885, %v908
  %v990 = vsel %vm20, %v886, %v910
  %v991 = vsel %vm102, %v987, %v916
  %v992 = vsel %vm102, %v988, %v918
  %v993 = vsel %vm102, %v989, %v920
  %v994 = vsel %vm102, %v990, %v922
  %v995 = vsel %vm268, %v991, %v928
  %v996 = vsel %vm268, %v992, %v930
  %v997 = vsel %vm268, %v993, %v932
  %v998 = vsel %vm268, %v994, %v934
  %v999 = vsel %vm273, %v995, %v940
  %v1000 = vsel %vm273, %v996, %v942
  %v1001 = vsel %vm273, %v997, %v944
  %v1002 = vsel %vm273, %v998, %v946
  %v1003 = vsel %vm278, %v999, %v952
  %v1004 = vsel %vm278, %v1000, %v954
  %v1005 = vsel %vm278, %v1001, %v956
  %v1006 = vsel %vm278, %v1002, %v958
  %v1007 = vsel %vm283, %v1003, %v964
  %v1008 = vsel %vm283, %v1004, %v966
  %v1009 = vsel %vm283, %v1005, %v968
  %v1010 = vsel %vm283, %v1006, %v970
  %v1011 = vsel %vm288, %v1007, %v976
  %v1012 = vsel %vm288, %v1008, %v978
  %v1013 = vsel %vm288, %v1009, %v980
  %v1014 = vsel %vm288, %v1010, %v982
  %v1015 = vmul.f32 %v1011, %v50
  %v1016 = vmul.f32 %v1012, %v51
  %v1017 = vmul.f32 %v1013, %v52
  %v1018 = vmul.f32 %v1014, %v53
  %v1019 = vsel %vm102, %v854, 0
  %v1021 = vsel %vm102, %v857, 0
  %1023 = vmatpush.msra.mxu0 0.0
  %1024 = vmatpush.msra.mxu0 0.0
  %1025 = vmatpush.msra.mxu0 0.0
  %1026 = vmatpush.msra.mxu0 0.0
  %1027 = vmatpush.msra.mxu0 0.0
  %1028 = vmatpush.msra.mxu0 0.0
  %1029 = vmatpush.msra.mxu0 0.0
  %1030 = vmatpush.msra.mxu0 0.0
  %1031 = vmatpush.msra.mxu0 0.0
  %1032 = vmatpush.msra.mxu0 0.0
  %1033 = vmatpush.msra.mxu0 0.0
  %1034 = vmatpush.msra.mxu0 0.0
  %1035 = vmatpush.msra.mxu0 %v1018
  %1036 = vmatpush.msra.mxu0 %v1017
  %1037 = vmatpush.msra.mxu0 %v1016
  %1038 = vmatpush.msra.mxu0 %v1015
  %1039 = vmatmul.f32.gmra.mxu0 %v1019
  %v1040 = vpop.f32.mrf.mxu0
  %v1041 = vadd.f32 %v54, %v1040
  %1042 = vmatmul.f32.gmra.mxu0 %v1021
  %v1043 = vpop.f32.mrf.mxu0
  %v1044 = vadd.f32 %v55, %v1043
  %1045 = vdwg.mxu0
  %1046 = vmax.xlane.f32.xlu0 %v1041
  %v1047 = vpop.xlane.xlu0 %1046
  %1048 = vmax.xlane.f32.xlu0 %v1044
  %v1049 = vpop.xlane.xlu0 %1048
  %v1050 = vsub.f32 %v1041, %v1047
  %v1051 = vsub.f32 %v1044, %v1049
  %v1052 = vmul.f32 %v1050, 1.442695
  %v1053 = vpow.pop %v1052
  %v1054 = vmul.f32 %v1051, 1.442695
  %v1055 = vpow.pop %v1054
  %v1056 = vmul.f32 %v854, %v351
  %v1057 = vmul.f32 %v857, %v353
  %v1058 = vmul.f32 %v854, %v355
  %v1059 = vmul.f32 %v857, %v357
  %v1060 = vmul.f32 %v854, %v359
  %v1061 = vmul.f32 %v857, %v361
  %v1062 = vmul.f32 %v854, %v363
  %v1063 = vmul.f32 %v857, %v365
  %v1064 = vmul.f32 %v854, %v367
  %v1065 = vmul.f32 %v857, %v369
  %v1066 = vmul.f32 %v854, %v371
  %v1067 = vmul.f32 %v857, %v373
  %v1068 = vmul.f32 %v854, %v375
  %v1069 = vmul.f32 %v857, %v377
  %v1070 = vmul.f32 %v854, %v379
  %v1071 = vmul.f32 %v857, %v381
  %1088 = vrot.lane.b32.xlu0 %v1056, 64
  %v1089 = vpop.permute.xlu0 %1088
  %1090 = vrot.lane.b32.xlu0 %v1057, 64
  %v1091 = vpop.permute.xlu0 %1090
  %1092 = vrot.lane.b32.xlu0 %v1058, 64
  %v1093 = vpop.permute.xlu0 %1092
  %1094 = vrot.lane.b32.xlu0 %v1059, 64
  %v1095 = vpop.permute.xlu0 %1094
  %1096 = vrot.lane.b32.xlu0 %v1060, 64
  %v1097 = vpop.permute.xlu0 %1096
  %1098 = vrot.lane.b32.xlu0 %v1061, 64
  %v1099 = vpop.permute.xlu0 %1098
  %1100 = vrot.lane.b32.xlu0 %v1062, 64
  %v1101 = vpop.permute.xlu0 %1100
  %1102 = vrot.lane.b32.xlu0 %v1063, 64
  %v1103 = vpop.permute.xlu0 %1102
  %1104 = vrot.lane.b32.xlu0 %v1064, 64
  %v1105 = vpop.permute.xlu0 %1104
  %1106 = vrot.lane.b32.xlu0 %v1065, 64
  %v1107 = vpop.permute.xlu0 %1106
  %1108 = vrot.lane.b32.xlu0 %v1066, 64
  %v1109 = vpop.permute.xlu0 %1108
  %1110 = vrot.lane.b32.xlu0 %v1067, 64
  %v1111 = vpop.permute.xlu0 %1110
  %1112 = vrot.lane.b32.xlu0 %v1068, 64
  %v1113 = vpop.permute.xlu0 %1112
  %1114 = vrot.lane.b32.xlu0 %v1069, 64
  %v1115 = vpop.permute.xlu0 %1114
  %1116 = vrot.lane.b32.xlu0 %v1070, 64
  %v1117 = vpop.permute.xlu0 %1116
  %1118 = vrot.lane.b32.xlu0 %v1071, 64
  %v1119 = vpop.permute.xlu0 %1118
  %v1136 = vsel %vm102, %v1089, %v479
  %v1137 = vsel %vm102, %v1091, %v481
  %v1138 = vsel %vm102, %v1093, %v483
  %v1139 = vsel %vm102, %v1095, %v485
  %v1140 = vsel %vm102, %v1097, %v487
  %v1141 = vsel %vm102, %v1099, %v489
  %v1142 = vsel %vm102, %v1101, %v491
  %v1143 = vsel %vm102, %v1103, %v493
  %v1144 = vsel %vm102, %v1105, %v495
  %v1145 = vsel %vm102, %v1107, %v497
  %v1146 = vsel %vm102, %v1109, %v499
  %v1147 = vsel %vm102, %v1111, %v501
  %v1148 = vsel %vm102, %v1113, %v503
  %v1149 = vsel %vm102, %v1115, %v505
  %v1150 = vsel %vm102, %v1117, %v507
  %v1151 = vsel %vm102, %v1119, %v509
  %1152 = vmatpush.msra.mxu0 %v1151
  %1153 = vmatpush.msra.mxu0 %v1150
  %1154 = vmatpush.msra.mxu0 %v1149
  %1155 = vmatpush.msra.mxu0 %v1148
  %1156 = vmatpush.msra.mxu0 %v1147
  %1157 = vmatpush.msra.mxu0 %v1146
  %1158 = vmatpush.msra.mxu0 %v1145
  %1159 = vmatpush.msra.mxu0 %v1144
  %1160 = vmatpush.msra.mxu0 %v1143
  %1161 = vmatpush.msra.mxu0 %v1142
  %1162 = vmatpush.msra.mxu0 %v1141
  %1163 = vmatpush.msra.mxu0 %v1140
  %1164 = vmatpush.msra.mxu0 %v1139
  %1165 = vmatpush.msra.mxu0 %v1138
  %1166 = vmatpush.msra.mxu0 %v1137
  %1167 = vmatpush.msra.mxu0 %v1136
  %1168 = vmatmul.f32.gmra.mxu0 %v1053
  %v1169 = vpop.f32.mrf.mxu0
  %v1170 = vadd.f32 0.0, %v1169
  %1171 = vmatmul.f32.gmra.mxu0 %v1055
  %v1172 = vpop.f32.mrf.mxu0
  %v1173 = vadd.f32 0.0, %v1172
  %1174 = vdwg.mxu0
  %1177 = vrot.lane.b32.xlu0 %v1170, 96
  %v1178 = vpop.permute.xlu0 %1177
  %1179 = vrot.lane.b32.xlu0 %v1173, 96
  %v1180 = vpop.permute.xlu0 %1179
  %v1183 = vrcp.pop %v1178
  %v1184 = vmul.f32 %v1178, %v1183
  %v1185 = vsub.f32 1.0, %v1184
  %v1186 = vmul.f32 %v1183, %v1185
  %v1187 = vadd.f32 %v1183, %v1186
  %vm1188 = vweird.f32 %v1178
  %vm1189 = vweird.f32 %v1183
  %vm1190 = vmor %vm1188, %vm1189
  %v1191 = vsel %vm1190, %v1183, %v1187
  %v1192 = vand.u32 2147483647, %v1178
  %vm1193 = vcmp.eq.f32.partialorder %v1192, 8.507059e+37
  %v1194 = vand.u32 %v1178, 2147483648
  %v1195 = vor.u32 1.1754944e-38, %v1194
  %v1196 = vsel %vm1193, %v1195, %v1191
  %v1197 = vmul.f32 %v1170, %v1196
  %v1198 = vrcp.pop %v1180
  %v1199 = vmul.f32 %v1180, %v1198
  %v1200 = vsub.f32 1.0, %v1199
  %v1201 = vmul.f32 %v1198, %v1200
  %v1202 = vadd.f32 %v1198, %v1201
  %vm1203 = vweird.f32 %v1180
  %vm1204 = vweird.f32 %v1198
  %vm1205 = vmor %vm1203, %vm1204
  %v1206 = vsel %vm1205, %v1198, %v1202
  %v1207 = vand.u32 2147483647, %v1180
  %vm1208 = vcmp.eq.f32.partialorder %v1207, 8.507059e+37
  %v1209 = vand.u32 %v1180, 2147483648
  %v1210 = vor.u32 1.1754944e-38, %v1209
  %v1211 = vsel %vm1208, %v1210, %v1206
  %v1212 = vmul.f32 %v1173, %v1211
  %v1213 = vperm.slane %v808, 1
  %v1215 = vsel %vm102, %v1197, 0
  %v1218 = vsel %vm102, %v1212, 0
  %1220 = vmatpush.msra.mxu0 0.0
  %1221 = vmatpush.msra.mxu0 0.0
  %1222 = vmatpush.msra.mxu0 0.0
  %1223 = vmatpush.msra.mxu0 0.0
  %1224 = vmatpush.msra.mxu0 0.0
  %1225 = vmatpush.msra.mxu0 0.0
  %1226 = vmatpush.msra.mxu0 0.0
  %1227 = vmatpush.msra.mxu0 0.0
  %1228 = vmatpush.msra.mxu0 0.0
  %1229 = vmatpush.msra.mxu0 0.0
  %1230 = vmatpush.msra.mxu0 0.0
  %1231 = vmatpush.msra.mxu0 0.0
  %1232 = vmatpush.msra.mxu0 %v812
  %1233 = vmatpush.msra.mxu0 %v811
  %1234 = vmatpush.msra.mxu0 %v810
  %1235 = vmatpush.msra.mxu0 %v809
  %1236 = vmatmul.f32.gmra.mxu0 %v1215
  %v1237 = vpop.f32.mrf.mxu0
  %v1238 = vadd.f32 %v1213, %v1237
  %1239 = vmatmul.f32.gmra.mxu0 %v1218
  %v1240 = vpop.f32.mrf.mxu0
  %v1241 = vadd.f32 %v1213, %v1240
  %1242 = vdwg.mxu0
  %v1243 = vadd.f32 %v798, %v1238
  %v1244 = vadd.f32 %v799, %v1241
  %v1245 = vsel %vm102, %v1243, 0.0
  %1246 = vadd.xlane.f32.xlu0 %v1245
  %v1247 = vpop.xlane.xlu0 %1246
  %v1248 = vsel %vm102, %v1244, 0.0
  %1249 = vadd.xlane.f32.xlu0 %v1248
  %v1250 = vpop.xlane.xlu0 %1249
  %v1251 = vmul.f32 %v1247, %v647
  %v1252 = vmul.f32 %v1250, %v647
  %v1253 = vsub.f32 %v1243, %v1251
  %v1254 = vsub.f32 %v1244, %v1252
  %v1255 = vmul.f32 %v1253, %v1253
  %v1256 = vmul.f32 %v1254, %v1254
  %v1257 = vsel %vm102, %v1255, 0.0
  %1258 = vadd.xlane.f32.xlu0 %v1257
  %v1259 = vpop.xlane.xlu0 %1258
  %v1260 = vsel %vm102, %v1256, 0.0
  %1261 = vadd.xlane.f32.xlu0 %v1260
  %v1262 = vpop.xlane.xlu0 %1261
  %v1263 = vmul.f32 %v1259, %v647
  %v1264 = vmul.f32 %v1262, %v647
  %v1265 = vadd.f32 %v1263, 1e-05
  %v1266 = vadd.f32 %v1264, 1e-05
  %v1267 = vrsqrt.pop %v1265
  %v1268 = vmul.f32 %v1267, %v1265
  %v1269 = vmul.f32 %v1268, %v1267
  %v1270 = vmul.f32 0.5, %v1269
  %v1271 = vsub.f32 1.5, %v1270
  %v1272 = vmul.f32 %v1267, %v1271
  %vm1273 = vweird.f32 %v1265
  %vm1274 = vweird.f32 %v1267
  %vm1275 = vmor %vm1273, %vm1274
  %v1276 = vsel %vm1275, %v1267, %v1272
  %v1277 = vrsqrt.pop %v1266
  %v1278 = vmul.f32 %v1277, %v1266
  %v1279 = vmul.f32 %v1278, %v1277
  %v1280 = vmul.f32 0.5, %v1279
  %v1281 = vsub.f32 1.5, %v1280
  %v1282 = vmul.f32 %v1277, %v1281
  %vm1283 = vweird.f32 %v1266
  %vm1284 = vweird.f32 %v1277
  %vm1285 = vmor %vm1283, %vm1284
  %v1286 = vsel %vm1285, %v1277, %v1282
  %v1287 = vmul.f32 %v1253, %v1276
  %v1288 = vmul.f32 %v1254, %v1286
  %v1289 = vperm.slane %v808, 2
  %v1290 = vmul.f32 %v1287, %v1289
  %v1291 = vmul.f32 %v1288, %v1289
  %v1292 = vperm.slane %v808, 3
  %v1293 = vadd.f32 %v1290, %v1292
  %v1294 = vadd.f32 %v1291, %v1292
  %v1295 = vperm.slane %v808, 4
  %v1297 = vsel %vm102, %v1293, 0
  %v1300 = vsel %vm102, %v1294, 0
  %1302 = vmatpush.msra.mxu0 0.0
  %1303 = vmatpush.msra.mxu0 0.0
  %1304 = vmatpush.msra.mxu0 0.0
  %1305 = vmatpush.msra.mxu0 0.0
  %1306 = vmatpush.msra.mxu0 0.0
  %1307 = vmatpush.msra.mxu0 0.0
  %1308 = vmatpush.msra.mxu0 0.0
  %1309 = vmatpush.msra.mxu0 0.0
  %1310 = vmatpush.msra.mxu0 0.0
  %1311 = vmatpush.msra.mxu0 0.0
  %1312 = vmatpush.msra.mxu0 0.0
  %1313 = vmatpush.msra.mxu0 0.0
  %1314 = vmatpush.msra.mxu0 %v807
  %1315 = vmatpush.msra.mxu0 %v806
  %1316 = vmatpush.msra.mxu0 %v805
  %1317 = vmatpush.msra.mxu0 %v804
  %1318 = vmatmul.f32.gmra.mxu0 %v1297
  %v1319 = vpop.f32.mrf.mxu0
  %v1320 = vadd.f32 %v1295, %v1319
  %1321 = vmatmul.f32.gmra.mxu0 %v1300
  %v1322 = vpop.f32.mrf.mxu0
  %v1323 = vadd.f32 %v1295, %v1322
  %1324 = vdwg.mxu0
  %v1325 = vmax.f32 %v1320, 0.0
  %v1326 = vmax.f32 %v1323, 0.0
  %v1327 = vperm.slane %v808, 5
  %1328 = vmatpush.msra.mxu0 %v828
  %1329 = vmatpush.msra.mxu0 %v827
  %1330 = vmatpush.msra.mxu0 %v826
  %1331 = vmatpush.msra.mxu0 %v825
  %1332 = vmatpush.msra.mxu0 %v824
  %1333 = vmatpush.msra.mxu0 %v823
  %1334 = vmatpush.msra.mxu0 %v822
  %1335 = vmatpush.msra.mxu0 %v821
  %1336 = vmatpush.msra.mxu0 %v820
  %1337 = vmatpush.msra.mxu0 %v819
  %1338 = vmatpush.msra.mxu0 %v818
  %1339 = vmatpush.msra.mxu0 %v817
  %1340 = vmatpush.msra.mxu0 %v816
  %1341 = vmatpush.msra.mxu0 %v815
  %1342 = vmatpush.msra.mxu0 %v814
  %1343 = vmatpush.msra.mxu0 %v813
  %1344 = vmatmul.f32.gmra.mxu0 %v1325
  %v1345 = vpop.f32.mrf.mxu0
  %v1346 = vadd.f32 %v1327, %v1345
  %1347 = vmatmul.f32.gmra.mxu0 %v1326
  %v1348 = vpop.f32.mrf.mxu0
  %v1349 = vadd.f32 %v1327, %v1348
  %1350 = vdwg.mxu0
  %v1351 = vadd.f32 %v1293, %v1346
  %v1352 = vadd.f32 %v1294, %v1349
  %v1353 = vsel %vm102, %v1351, 0.0
  %1354 = vadd.xlane.f32.xlu0 %v1353
  %v1355 = vpop.xlane.xlu0 %1354
  %v1356 = vsel %vm102, %v1352, 0.0
  %1357 = vadd.xlane.f32.xlu0 %v1356
  %v1358 = vpop.xlane.xlu0 %1357
  %v1359 = vmul.f32 %v1355, %v647
  %v1360 = vmul.f32 %v1358, %v647
  %v1361 = vsub.f32 %v1351, %v1359
  %v1362 = vsub.f32 %v1352, %v1360
  %v1363 = vmul.f32 %v1361, %v1361
  %v1364 = vmul.f32 %v1362, %v1362
  %v1365 = vsel %vm102, %v1363, 0.0
  %1366 = vadd.xlane.f32.xlu0 %v1365
  %v1367 = vpop.xlane.xlu0 %1366
  %v1368 = vsel %vm102, %v1364, 0.0
  %1369 = vadd.xlane.f32.xlu0 %v1368
  %v1370 = vpop.xlane.xlu0 %1369
  %v1371 = vmul.f32 %v1367, %v647
  %v1372 = vmul.f32 %v1370, %v647
  %v1373 = vadd.f32 %v1371, 1e-05
  %v1374 = vadd.f32 %v1372, 1e-05
  %v1375 = vrsqrt.pop %v1373
  %v1376 = vmul.f32 %v1375, %v1373
  %v1377 = vmul.f32 %v1376, %v1375
  %v1378 = vmul.f32 0.5, %v1377
  %v1379 = vsub.f32 1.5, %v1378
  %v1380 = vmul.f32 %v1375, %v1379
  %vm1381 = vweird.f32 %v1373
  %vm1382 = vweird.f32 %v1375
  %vm1383 = vmor %vm1381, %vm1382
  %v1384 = vsel %vm1383, %v1375, %v1380
  %v1385 = vrsqrt.pop %v1374
  %v1386 = vmul.f32 %v1385, %v1374
  %v1387 = vmul.f32 %v1386, %v1385
  %v1388 = vmul.f32 0.5, %v1387
  %v1389 = vsub.f32 1.5, %v1388
  %v1390 = vmul.f32 %v1385, %v1389
  %vm1391 = vweird.f32 %v1374
  %vm1392 = vweird.f32 %v1385
  %vm1393 = vmor %vm1391, %vm1392
  %v1394 = vsel %vm1393, %v1385, %v1390
  %v1395 = vmul.f32 %v1361, %v1384
  %v1396 = vmul.f32 %v1362, %v1394
  %v1397 = vperm.slane %v808, 6
  %v1398 = vmul.f32 %v1395, %v1397
  %v1399 = vmul.f32 %v1396, %v1397
  %v1400 = vperm.slane %v808, 7
  %v1401 = vadd.f32 %v1398, %v1400
  %v1402 = vadd.f32 %v1399, %v1400
  %v1403 = vld [vmem:[%s1 + $0x70] sm:$0xff]
  %v1404 = vld [vmem:[%s1 + $0x78] sm:$0xff]
  %v1405 = vld [vmem:[%s1 + $0x80] sm:$0xff]
  %v1406 = vld [vmem:[%s1 + $0x88] sm:$0xff]
  %v1407 = vld [vmem:[%s1 + $0x130] sm:$0xff]
  %v1408 = vld [vmem:[%s1 + $0x138] sm:$0xff]
  %v1409 = vld [vmem:[%s1 + $0x140] sm:$0xff]
  %v1410 = vld [vmem:[%s1 + $0x148] sm:$0xff]
  %v1411 = vld [vmem:[%s1 + $0x1c0] sm:$0xff]
  %v1412 = vld [vmem:[%s2 + $0xe0] sm:$0xff]
  %v1413 = vld [vmem:[%s2 + $0xe8] sm:$0xff]
  %v1414 = vld [vmem:[%s2 + $0xf0] sm:$0xff]
  %v1415 = vld [vmem:[%s2 + $0xf8] sm:$0xff]
  %v1416 = vld [vmem:[%s2 + $0x260] sm:$0xff]
  %v1417 = vld [vmem:[%s2 + $0x268] sm:$0xff]
  %v1418 = vld [vmem:[%s2 + $0x270] sm:$0xff]
  %v1419 = vld [vmem:[%s2 + $0x278] sm:$0xff]
  %v1420 = vld [vmem:[%s2 + $0x280] sm:$0xff]
  %v1421 = vld [vmem:[%s2 + $0x288] sm:$0xff]
  %v1422 = vld [vmem:[%s2 + $0x290] sm:$0xff]
  %v1423 = vld [vmem:[%s2 + $0x298] sm:$0xff]
  %v1424 = vld [vmem:[%s2 + $0x2a0] sm:$0xff]
  %v1425 = vld [vmem:[%s2 + $0x2a8] sm:$0xff]
  %v1426 = vld [vmem:[%s2 + $0x2b0] sm:$0xff]
  %v1427 = vld [vmem:[%s2 + $0x2b8] sm:$0xff]
  %v1428 = vld [vmem:[%s2 + $0x2c0] sm:$0xff]
  %v1429 = vld [vmem:[%s2 + $0x2c8] sm:$0xff]
  %v1430 = vld [vmem:[%s2 + $0x2d0] sm:$0xff]
  %v1431 = vld [vmem:[%s2 + $0x2d8] sm:$0xff]
  %v1432 = vperm.slane %v1411, 0
  %v1434 = vsel %vm102, %v1401, 0
  %v1437 = vsel %vm102, %v1402, 0
  %1439 = vmatpush.msra.mxu0 0.0
  %1440 = vmatpush.msra.mxu0 0.0
  %1441 = vmatpush.msra.mxu0 0.0
  %1442 = vmatpush.msra.mxu0 0.0
  %1443 = vmatpush.msra.mxu0 0.0
  %1444 = vmatpush.msra.mxu0 0.0
  %1445 = vmatpush.msra.mxu0 0.0
  %1446 = vmatpush.msra.mxu0 0.0
  %1447 = vmatpush.msra.mxu0 0.0
  %1448 = vmatpush.msra.mxu0 0.0
  %1449 = vmatpush.msra.mxu0 0.0
  %1450 = vmatpush.msra.mxu0 0.0
  %1451 = vmatpush.msra.mxu0 %v1406
  %1452 = vmatpush.msra.mxu0 %v1405
  %1453 = vmatpush.msra.mxu0 %v1404
  %1454 = vmatpush.msra.mxu0 %v1403
  %1455 = vmatmul.f32.gmra.mxu0 %v1434
  %v1456 = vpop.f32.mrf.mxu0
  %v1457 = vadd.f32 %v1432, %v1456
  %1458 = vmatmul.f32.gmra.mxu0 %v1437
  %v1459 = vpop.f32.mrf.mxu0
  %v1460 = vadd.f32 %v1432, %v1459
  %1461 = vdwg.mxu0
  %1464 = vrot.lane.b32.xlu0 %v1457, 96
  %v1465 = vpop.permute.xlu0 %1464
  %1466 = vrot.lane.b32.xlu0 %v1460, 96
  %v1467 = vpop.permute.xlu0 %1466
  %1470 = vxpose.xlu0.b32.start [1/16] %v1465, 128
  %1471 = vxpose.xlu0.b32.cont [2/16] %v1467, 128
  %1472 = vxpose.xlu0.b32.cont [3/16] 0.0, 128
  %1473 = vxpose.xlu0.b32.cont [4/16] 0.0, 128
  %1474 = vxpose.xlu0.b32.cont [5/16] 0.0, 128
  %1475 = vxpose.xlu0.b32.cont [6/16] 0.0, 128
  %1476 = vxpose.xlu0.b32.cont [7/16] 0.0, 128
  %1477 = vxpose.xlu0.b32.cont [8/16] 0.0, 128
  %1478 = vxpose.xlu0.b32.cont [9/16] 0.0, 128
  %1479 = vxpose.xlu0.b32.cont [10/16] 0.0, 128
  %1480 = vxpose.xlu0.b32.cont [11/16] 0.0, 128
  %1481 = vxpose.xlu0.b32.cont [12/16] 0.0, 128
  %1482 = vxpose.xlu0.b32.cont [13/16] 0.0, 128
  %1483 = vxpose.xlu0.b32.cont [14/16] 0.0, 128
  %1484 = vxpose.xlu0.b32.cont [15/16] 0.0, 128
  %1485 = vxpose.xlu0.b32.end [16/16] 0.0, 128
  %v1486 = vpop.trf.xlu0
  %v1487 = vpop.trf.xlu0
  %v1488 = vpop.trf.xlu0
  %v1489 = vpop.trf.xlu0
  %v1490 = vpop.trf.xlu0
  %v1491 = vpop.trf.xlu0
  %v1492 = vpop.trf.xlu0
  %v1493 = vpop.trf.xlu0
  %v1494 = vpop.trf.xlu0
  %v1495 = vpop.trf.xlu0
  %v1496 = vpop.trf.xlu0
  %v1497 = vpop.trf.xlu0
  %v1498 = vpop.trf.xlu0
  %v1499 = vpop.trf.xlu0
  %v1500 = vpop.trf.xlu0
  %v1501 = vpop.trf.xlu0
  %1506 = vrot.lane.b32.xlu0 %v1486, 16
  %v1507 = vpop.permute.xlu0 %1506
  %1508 = vrot.lane.b32.xlu0 %v1487, 16
  %v1509 = vpop.permute.xlu0 %1508
  %1510 = vrot.lane.b32.xlu0 %v1488, 16
  %v1511 = vpop.permute.xlu0 %1510
  %1512 = vrot.lane.b32.xlu0 %v1489, 16
  %v1513 = vpop.permute.xlu0 %1512
  %1518 = vrot.lane.b32.xlu0 %v1486, 32
  %v1519 = vpop.permute.xlu0 %1518
  %1520 = vrot.lane.b32.xlu0 %v1487, 32
  %v1521 = vpop.permute.xlu0 %1520
  %1522 = vrot.lane.b32.xlu0 %v1488, 32
  %v1523 = vpop.permute.xlu0 %1522
  %1524 = vrot.lane.b32.xlu0 %v1489, 32
  %v1525 = vpop.permute.xlu0 %1524
  %1530 = vrot.lane.b32.xlu0 %v1486, 48
  %v1531 = vpop.permute.xlu0 %1530
  %1532 = vrot.lane.b32.xlu0 %v1487, 48
  %v1533 = vpop.permute.xlu0 %1532
  %1534 = vrot.lane.b32.xlu0 %v1488, 48
  %v1535 = vpop.permute.xlu0 %1534
  %1536 = vrot.lane.b32.xlu0 %v1489, 48
  %v1537 = vpop.permute.xlu0 %1536
  %1542 = vrot.lane.b32.xlu0 %v1486, 64
  %v1543 = vpop.permute.xlu0 %1542
  %1544 = vrot.lane.b32.xlu0 %v1487, 64
  %v1545 = vpop.permute.xlu0 %1544
  %1546 = vrot.lane.b32.xlu0 %v1488, 64
  %v1547 = vpop.permute.xlu0 %1546
  %1548 = vrot.lane.b32.xlu0 %v1489, 64
  %v1549 = vpop.permute.xlu0 %1548
  %1554 = vrot.lane.b32.xlu0 %v1486, 80
  %v1555 = vpop.permute.xlu0 %1554
  %1556 = vrot.lane.b32.xlu0 %v1487, 80
  %v1557 = vpop.permute.xlu0 %1556
  %1558 = vrot.lane.b32.xlu0 %v1488, 80
  %v1559 = vpop.permute.xlu0 %1558
  %1560 = vrot.lane.b32.xlu0 %v1489, 80
  %v1561 = vpop.permute.xlu0 %1560
  %1566 = vrot.lane.b32.xlu0 %v1486, 96
  %v1567 = vpop.permute.xlu0 %1566
  %1568 = vrot.lane.b32.xlu0 %v1487, 96
  %v1569 = vpop.permute.xlu0 %1568
  %1570 = vrot.lane.b32.xlu0 %v1488, 96
  %v1571 = vpop.permute.xlu0 %1570
  %1572 = vrot.lane.b32.xlu0 %v1489, 96
  %v1573 = vpop.permute.xlu0 %1572
  %1578 = vrot.lane.b32.xlu0 %v1486, 112
  %v1579 = vpop.permute.xlu0 %1578
  %1580 = vrot.lane.b32.xlu0 %v1487, 112
  %v1581 = vpop.permute.xlu0 %1580
  %1582 = vrot.lane.b32.xlu0 %v1488, 112
  %v1583 = vpop.permute.xlu0 %1582
  %1584 = vrot.lane.b32.xlu0 %v1489, 112
  %v1585 = vpop.permute.xlu0 %1584
  %v1590 = vsel %vm20, %v1486, %v1507
  %v1591 = vsel %vm20, %v1487, %v1509
  %v1592 = vsel %vm20, %v1488, %v1511
  %v1593 = vsel %vm20, %v1489, %v1513
  %v1594 = vsel %vm102, %v1590, %v1519
  %v1595 = vsel %vm102, %v1591, %v1521
  %v1596 = vsel %vm102, %v1592, %v1523
  %v1597 = vsel %vm102, %v1593, %v1525
  %v1598 = vsel %vm268, %v1594, %v1531
  %v1599 = vsel %vm268, %v1595, %v1533
  %v1600 = vsel %vm268, %v1596, %v1535
  %v1601 = vsel %vm268, %v1597, %v1537
  %v1602 = vsel %vm273, %v1598, %v1543
  %v1603 = vsel %vm273, %v1599, %v1545
  %v1604 = vsel %vm273, %v1600, %v1547
  %v1605 = vsel %vm273, %v1601, %v1549
  %v1606 = vsel %vm278, %v1602, %v1555
  %v1607 = vsel %vm278, %v1603, %v1557
  %v1608 = vsel %vm278, %v1604, %v1559
  %v1609 = vsel %vm278, %v1605, %v1561
  %v1610 = vsel %vm283, %v1606, %v1567
  %v1611 = vsel %vm283, %v1607, %v1569
  %v1612 = vsel %vm283, %v1608, %v1571
  %v1613 = vsel %vm283, %v1609, %v1573
  %v1614 = vsel %vm288, %v1610, %v1579
  %v1615 = vsel %vm288, %v1611, %v1581
  %v1616 = vsel %vm288, %v1612, %v1583
  %v1617 = vsel %vm288, %v1613, %v1585
  %v1618 = vmul.f32 %v1614, %v50
  %v1619 = vmul.f32 %v1615, %v51
  %v1620 = vmul.f32 %v1616, %v52
  %v1621 = vmul.f32 %v1617, %v53
  %v1622 = vsel %vm102, %v1457, 0
  %v1624 = vsel %vm102, %v1460, 0
  %1626 = vmatpush.msra.mxu0 0.0
  %1627 = vmatpush.msra.mxu0 0.0
  %1628 = vmatpush.msra.mxu0 0.0
  %1629 = vmatpush.msra.mxu0 0.0
  %1630 = vmatpush.msra.mxu0 0.0
  %1631 = vmatpush.msra.mxu0 0.0
  %1632 = vmatpush.msra.mxu0 0.0
  %1633 = vmatpush.msra.mxu0 0.0
  %1634 = vmatpush.msra.mxu0 0.0
  %1635 = vmatpush.msra.mxu0 0.0
  %1636 = vmatpush.msra.mxu0 0.0
  %1637 = vmatpush.msra.mxu0 0.0
  %1638 = vmatpush.msra.mxu0 %v1621
  %1639 = vmatpush.msra.mxu0 %v1620
  %1640 = vmatpush.msra.mxu0 %v1619
  %1641 = vmatpush.msra.mxu0 %v1618
  %1642 = vmatmul.f32.gmra.mxu0 %v1622
  %v1643 = vpop.f32.mrf.mxu0
  %v1644 = vadd.f32 %v54, %v1643
  %1645 = vmatmul.f32.gmra.mxu0 %v1624
  %v1646 = vpop.f32.mrf.mxu0
  %v1647 = vadd.f32 %v55, %v1646
  %1648 = vdwg.mxu0
  %1649 = vmax.xlane.f32.xlu0 %v1644
  %v1650 = vpop.xlane.xlu0 %1649
  %1651 = vmax.xlane.f32.xlu0 %v1647
  %v1652 = vpop.xlane.xlu0 %1651
  %v1653 = vsub.f32 %v1644, %v1650
  %v1654 = vsub.f32 %v1647, %v1652
  %v1655 = vmul.f32 %v1653, 1.442695
  %v1656 = vpow.pop %v1655
  %v1657 = vmul.f32 %v1654, 1.442695
  %v1658 = vpow.pop %v1657
  %v1659 = vmul.f32 %v1457, %v351
  %v1660 = vmul.f32 %v1460, %v353
  %v1661 = vmul.f32 %v1457, %v355
  %v1662 = vmul.f32 %v1460, %v357
  %v1663 = vmul.f32 %v1457, %v359
  %v1664 = vmul.f32 %v1460, %v361
  %v1665 = vmul.f32 %v1457, %v363
  %v1666 = vmul.f32 %v1460, %v365
  %v1667 = vmul.f32 %v1457, %v367
  %v1668 = vmul.f32 %v1460, %v369
  %v1669 = vmul.f32 %v1457, %v371
  %v1670 = vmul.f32 %v1460, %v373
  %v1671 = vmul.f32 %v1457, %v375
  %v1672 = vmul.f32 %v1460, %v377
  %v1673 = vmul.f32 %v1457, %v379
  %v1674 = vmul.f32 %v1460, %v381
  %1691 = vrot.lane.b32.xlu0 %v1659, 64
  %v1692 = vpop.permute.xlu0 %1691
  %1693 = vrot.lane.b32.xlu0 %v1660, 64
  %v1694 = vpop.permute.xlu0 %1693
  %1695 = vrot.lane.b32.xlu0 %v1661, 64
  %v1696 = vpop.permute.xlu0 %1695
  %1697 = vrot.lane.b32.xlu0 %v1662, 64
  %v1698 = vpop.permute.xlu0 %1697
  %1699 = vrot.lane.b32.xlu0 %v1663, 64
  %v1700 = vpop.permute.xlu0 %1699
  %1701 = vrot.lane.b32.xlu0 %v1664, 64
  %v1702 = vpop.permute.xlu0 %1701
  %1703 = vrot.lane.b32.xlu0 %v1665, 64
  %v1704 = vpop.permute.xlu0 %1703
  %1705 = vrot.lane.b32.xlu0 %v1666, 64
  %v1706 = vpop.permute.xlu0 %1705
  %1707 = vrot.lane.b32.xlu0 %v1667, 64
  %v1708 = vpop.permute.xlu0 %1707
  %1709 = vrot.lane.b32.xlu0 %v1668, 64
  %v1710 = vpop.permute.xlu0 %1709
  %1711 = vrot.lane.b32.xlu0 %v1669, 64
  %v1712 = vpop.permute.xlu0 %1711
  %1713 = vrot.lane.b32.xlu0 %v1670, 64
  %v1714 = vpop.permute.xlu0 %1713
  %1715 = vrot.lane.b32.xlu0 %v1671, 64
  %v1716 = vpop.permute.xlu0 %1715
  %1717 = vrot.lane.b32.xlu0 %v1672, 64
  %v1718 = vpop.permute.xlu0 %1717
  %1719 = vrot.lane.b32.xlu0 %v1673, 64
  %v1720 = vpop.permute.xlu0 %1719
  %1721 = vrot.lane.b32.xlu0 %v1674, 64
  %v1722 = vpop.permute.xlu0 %1721
  %v1739 = vsel %vm102, %v1692, %v479
  %v1740 = vsel %vm102, %v1694, %v481
  %v1741 = vsel %vm102, %v1696, %v483
  %v1742 = vsel %vm102, %v1698, %v485
  %v1743 = vsel %vm102, %v1700, %v487
  %v1744 = vsel %vm102, %v1702, %v489
  %v1745 = vsel %vm102, %v1704, %v491
  %v1746 = vsel %vm102, %v1706, %v493
  %v1747 = vsel %vm102, %v1708, %v495
  %v1748 = vsel %vm102, %v1710, %v497
  %v1749 = vsel %vm102, %v1712, %v499
  %v1750 = vsel %vm102, %v1714, %v501
  %v1751 = vsel %vm102, %v1716, %v503
  %v1752 = vsel %vm102, %v1718, %v505
  %v1753 = vsel %vm102, %v1720, %v507
  %v1754 = vsel %vm102, %v1722, %v509
  %1755 = vmatpush.msra.mxu0 %v1754
  %1756 = vmatpush.msra.mxu0 %v1753
  %1757 = vmatpush.msra.mxu0 %v1752
  %1758 = vmatpush.msra.mxu0 %v1751
  %1759 = vmatpush.msra.mxu0 %v1750
  %1760 = vmatpush.msra.mxu0 %v1749
  %1761 = vmatpush.msra.mxu0 %v1748
  %1762 = vmatpush.msra.mxu0 %v1747
  %1763 = vmatpush.msra.mxu0 %v1746
  %1764 = vmatpush.msra.mxu0 %v1745
  %1765 = vmatpush.msra.mxu0 %v1744
  %1766 = vmatpush.msra.mxu0 %v1743
  %1767 = vmatpush.msra.mxu0 %v1742
  %1768 = vmatpush.msra.mxu0 %v1741
  %1769 = vmatpush.msra.mxu0 %v1740
  %1770 = vmatpush.msra.mxu0 %v1739
  %1771 = vmatmul.f32.gmra.mxu0 %v1656
  %v1772 = vpop.f32.mrf.mxu0
  %v1773 = vadd.f32 0.0, %v1772
  %1774 = vmatmul.f32.gmra.mxu0 %v1658
  %v1775 = vpop.f32.mrf.mxu0
  %v1776 = vadd.f32 0.0, %v1775
  %1777 = vdwg.mxu0
  %1780 = vrot.lane.b32.xlu0 %v1773, 96
  %v1781 = vpop.permute.xlu0 %1780
  %1782 = vrot.lane.b32.xlu0 %v1776, 96
  %v1783 = vpop.permute.xlu0 %1782
  %v1786 = vrcp.pop %v1781
  %v1787 = vmul.f32 %v1781, %v1786
  %v1788 = vsub.f32 1.0, %v1787
  %v1789 = vmul.f32 %v1786, %v1788
  %v1790 = vadd.f32 %v1786, %v1789
  %vm1791 = vweird.f32 %v1781
  %vm1792 = vweird.f32 %v1786
  %vm1793 = vmor %vm1791, %vm1792
  %v1794 = vsel %vm1793, %v1786, %v1790
  %v1795 = vand.u32 2147483647, %v1781
  %vm1796 = vcmp.eq.f32.partialorder %v1795, 8.507059e+37
  %v1797 = vand.u32 %v1781, 2147483648
  %v1798 = vor.u32 1.1754944e-38, %v1797
  %v1799 = vsel %vm1796, %v1798, %v1794
  %v1800 = vmul.f32 %v1773, %v1799
  %v1801 = vrcp.pop %v1783
  %v1802 = vmul.f32 %v1783, %v1801
  %v1803 = vsub.f32 1.0, %v1802
  %v1804 = vmul.f32 %v1801, %v1803
  %v1805 = vadd.f32 %v1801, %v1804
  %vm1806 = vweird.f32 %v1783
  %vm1807 = vweird.f32 %v1801
  %vm1808 = vmor %vm1806, %vm1807
  %v1809 = vsel %vm1808, %v1801, %v1805
  %v1810 = vand.u32 2147483647, %v1783
  %vm1811 = vcmp.eq.f32.partialorder %v1810, 8.507059e+37
  %v1812 = vand.u32 %v1783, 2147483648
  %v1813 = vor.u32 1.1754944e-38, %v1812
  %v1814 = vsel %vm1811, %v1813, %v1809
  %v1815 = vmul.f32 %v1776, %v1814
  %v1816 = vperm.slane %v1411, 1
  %v1818 = vsel %vm102, %v1800, 0
  %v1821 = vsel %vm102, %v1815, 0
  %1823 = vmatpush.msra.mxu0 0.0
  %1824 = vmatpush.msra.mxu0 0.0
  %1825 = vmatpush.msra.mxu0 0.0
  %1826 = vmatpush.msra.mxu0 0.0
  %1827 = vmatpush.msra.mxu0 0.0
  %1828 = vmatpush.msra.mxu0 0.0
  %1829 = vmatpush.msra.mxu0 0.0
  %1830 = vmatpush.msra.mxu0 0.0
  %1831 = vmatpush.msra.mxu0 0.0
  %1832 = vmatpush.msra.mxu0 0.0
  %1833 = vmatpush.msra.mxu0 0.0
  %1834 = vmatpush.msra.mxu0 0.0
  %1835 = vmatpush.msra.mxu0 %v1415
  %1836 = vmatpush.msra.mxu0 %v1414
  %1837 = vmatpush.msra.mxu0 %v1413
  %1838 = vmatpush.msra.mxu0 %v1412
  %1839 = vmatmul.f32.gmra.mxu0 %v1818
  %v1840 = vpop.f32.mrf.mxu0
  %v1841 = vadd.f32 %v1816, %v1840
  %1842 = vmatmul.f32.gmra.mxu0 %v1821
  %v1843 = vpop.f32.mrf.mxu0
  %v1844 = vadd.f32 %v1816, %v1843
  %1845 = vdwg.mxu0
  %v1846 = vadd.f32 %v1401, %v1841
  %v1847 = vadd.f32 %v1402, %v1844
  %v1848 = vsel %vm102, %v1846, 0.0
  %1849 = vadd.xlane.f32.xlu0 %v1848
  %v1850 = vpop.xlane.xlu0 %1849
  %v1851 = vsel %vm102, %v1847, 0.0
  %1852 = vadd.xlane.f32.xlu0 %v1851
  %v1853 = vpop.xlane.xlu0 %1852
  %v1854 = vmul.f32 %v1850, %v647
  %v1855 = vmul.f32 %v1853, %v647
  %v1856 = vsub.f32 %v1846, %v1854
  %v1857 = vsub.f32 %v1847, %v1855
  %v1858 = vmul.f32 %v1856, %v1856
  %v1859 = vmul.f32 %v1857, %v1857
  %v1860 = vsel %vm102, %v1858, 0.0
  %1861 = vadd.xlane.f32.xlu0 %v1860
  %v1862 = vpop.xlane.xlu0 %1861
  %v1863 = vsel %vm102, %v1859, 0.0
  %1864 = vadd.xlane.f32.xlu0 %v1863
  %v1865 = vpop.xlane.xlu0 %1864
  %v1866 = vmul.f32 %v1862, %v647
  %v1867 = vmul.f32 %v1865, %v647
  %v1868 = vadd.f32 %v1866, 1e-05
  %v1869 = vadd.f32 %v1867, 1e-05
  %v1870 = vrsqrt.pop %v1868
  %v1871 = vmul.f32 %v1870, %v1868
  %v1872 = vmul.f32 %v1871, %v1870
  %v1873 = vmul.f32 0.5, %v1872
  %v1874 = vsub.f32 1.5, %v1873
  %v1875 = vmul.f32 %v1870, %v1874
  %vm1876 = vweird.f32 %v1868
  %vm1877 = vweird.f32 %v1870
  %vm1878 = vmor %vm1876, %vm1877
  %v1879 = vsel %vm1878, %v1870, %v1875
  %v1880 = vrsqrt.pop %v1869
  %v1881 = vmul.f32 %v1880, %v1869
  %v1882 = vmul.f32 %v1881, %v1880
  %v1883 = vmul.f32 0.5, %v1882
  %v1884 = vsub.f32 1.5, %v1883
  %v1885 = vmul.f32 %v1880, %v1884
  %vm1886 = vweird.f32 %v1869
  %vm1887 = vweird.f32 %v1880
  %vm1888 = vmor %vm1886, %vm1887
  %v1889 = vsel %vm1888, %v1880, %v1885
  %v1890 = vmul.f32 %v1856, %v1879
  %v1891 = vmul.f32 %v1857, %v1889
  %v1892 = vperm.slane %v1411, 2
  %v1893 = vmul.f32 %v1890, %v1892
  %v1894 = vmul.f32 %v1891, %v1892
  %v1895 = vperm.slane %v1411, 3
  %v1896 = vadd.f32 %v1893, %v1895
  %v1897 = vadd.f32 %v1894, %v1895
  %v1898 = vperm.slane %v1411, 4
  %v1900 = vsel %vm102, %v1896, 0
  %v1903 = vsel %vm102, %v1897, 0
  %1905 = vmatpush.msra.mxu0 0.0
  %1906 = vmatpush.msra.mxu0 0.0
  %1907 = vmatpush.msra.mxu0 0.0
  %1908 = vmatpush.msra.mxu0 0.0
  %1909 = vmatpush.msra.mxu0 0.0
  %1910 = vmatpush.msra.mxu0 0.0
  %1911 = vmatpush.msra.mxu0 0.0
  %1912 = vmatpush.msra.mxu0 0.0
  %1913 = vmatpush.msra.mxu0 0.0
  %1914 = vmatpush.msra.mxu0 0.0
  %1915 = vmatpush.msra.mxu0 0.0
  %1916 = vmatpush.msra.mxu0 0.0
  %1917 = vmatpush.msra.mxu0 %v1410
  %1918 = vmatpush.msra.mxu0 %v1409
  %1919 = vmatpush.msra.mxu0 %v1408
  %1920 = vmatpush.msra.mxu0 %v1407
  %1921 = vmatmul.f32.gmra.mxu0 %v1900
  %v1922 = vpop.f32.mrf.mxu0
  %v1923 = vadd.f32 %v1898, %v1922
  %1924 = vmatmul.f32.gmra.mxu0 %v1903
  %v1925 = vpop.f32.mrf.mxu0
  %v1926 = vadd.f32 %v1898, %v1925
  %1927 = vdwg.mxu0
  %v1928 = vmax.f32 %v1923, 0.0
  %v1929 = vmax.f32 %v1926, 0.0
  %v1930 = vperm.slane %v1411, 5
  %1931 = vmatpush.msra.mxu0 %v1431
  %1932 = vmatpush.msra.mxu0 %v1430
  %1933 = vmatpush.msra.mxu0 %v1429
  %1934 = vmatpush.msra.mxu0 %v1428
  %1935 = vmatpush.msra.mxu0 %v1427
  %1936 = vmatpush.msra.mxu0 %v1426
  %1937 = vmatpush.msra.mxu0 %v1425
  %1938 = vmatpush.msra.mxu0 %v1424
  %1939 = vmatpush.msra.mxu0 %v1423
  %1940 = vmatpush.msra.mxu0 %v1422
  %1941 = vmatpush.msra.mxu0 %v1421
  %1942 = vmatpush.msra.mxu0 %v1420
  %1943 = vmatpush.msra.mxu0 %v1419
  %1944 = vmatpush.msra.mxu0 %v1418
  %1945 = vmatpush.msra.mxu0 %v1417
  %1946 = vmatpush.msra.mxu0 %v1416
  %1947 = vmatmul.f32.gmra.mxu0 %v1928
  %v1948 = vpop.f32.mrf.mxu0
  %v1949 = vadd.f32 %v1930, %v1948
  %1950 = vmatmul.f32.gmra.mxu0 %v1929
  %v1951 = vpop.f32.mrf.mxu0
  %v1952 = vadd.f32 %v1930, %v1951
  %1953 = vdwg.mxu0
  %v1954 = vadd.f32 %v1896, %v1949
  %v1955 = vadd.f32 %v1897, %v1952
  %v1956 = vsel %vm102, %v1954, 0.0
  %1957 = vadd.xlane.f32.xlu0 %v1956
  %v1958 = vpop.xlane.xlu0 %1957
  %v1959 = vsel %vm102, %v1955, 0.0
  %1960 = vadd.xlane.f32.xlu0 %v1959
  %v1961 = vpop.xlane.xlu0 %1960
  %v1962 = vmul.f32 %v1958, %v647
  %v1963 = vmul.f32 %v1961, %v647
  %v1964 = vsub.f32 %v1954, %v1962
  %v1965 = vsub.f32 %v1955, %v1963
  %v1966 = vmul.f32 %v1964, %v1964
  %v1967 = vmul.f32 %v1965, %v1965
  %v1968 = vsel %vm102, %v1966, 0.0
  %1969 = vadd.xlane.f32.xlu0 %v1968
  %v1970 = vpop.xlane.xlu0 %1969
  %v1971 = vsel %vm102, %v1967, 0.0
  %1972 = vadd.xlane.f32.xlu0 %v1971
  %v1973 = vpop.xlane.xlu0 %1972
  %v1974 = vmul.f32 %v1970, %v647
  %v1975 = vmul.f32 %v1973, %v647
  %v1976 = vadd.f32 %v1974, 1e-05
  %v1977 = vadd.f32 %v1975, 1e-05
  %v1978 = vrsqrt.pop %v1976
  %v1979 = vmul.f32 %v1978, %v1976
  %v1980 = vmul.f32 %v1979, %v1978
  %v1981 = vmul.f32 0.5, %v1980
  %v1982 = vsub.f32 1.5, %v1981
  %v1983 = vmul.f32 %v1978, %v1982
  %vm1984 = vweird.f32 %v1976
  %vm1985 = vweird.f32 %v1978
  %vm1986 = vmor %vm1984, %vm1985
  %v1987 = vsel %vm1986, %v1978, %v1983
  %v1988 = vrsqrt.pop %v1977
  %v1989 = vmul.f32 %v1988, %v1977
  %v1990 = vmul.f32 %v1989, %v1988
  %v1991 = vmul.f32 0.5, %v1990
  %v1992 = vsub.f32 1.5, %v1991
  %v1993 = vmul.f32 %v1988, %v1992
  %vm1994 = vweird.f32 %v1977
  %vm1995 = vweird.f32 %v1988
  %vm1996 = vmor %vm1994, %vm1995
  %v1997 = vsel %vm1996, %v1988, %v1993
  %v1998 = vmul.f32 %v1964, %v1987
  %v1999 = vmul.f32 %v1965, %v1997
  %v2000 = vperm.slane %v1411, 6
  %v2001 = vmul.f32 %v1998, %v2000
  %v2002 = vmul.f32 %v1999, %v2000
  %v2003 = vperm.slane %v1411, 7
  %v2004 = vadd.f32 %v2001, %v2003
  %v2005 = vadd.f32 %v2002, %v2003
  %v2006 = vld [vmem:[%s1 + $0x90] sm:$0xff]
  %v2007 = vld [vmem:[%s1 + $0x98] sm:$0xff]
  %v2008 = vld [vmem:[%s1 + $0xa0] sm:$0xff]
  %v2009 = vld [vmem:[%s1 + $0xa8] sm:$0xff]
  %v2010 = vld [vmem:[%s1 + $0x150] sm:$0xff]
  %v2011 = vld [vmem:[%s1 + $0x158] sm:$0xff]
  %v2012 = vld [vmem:[%s1 + $0x160] sm:$0xff]
  %v2013 = vld [vmem:[%s1 + $0x168] sm:$0xff]
  %v2014 = vld [vmem:[%s1 + $0x1c8] sm:$0xff]
  %v2015 = vld [vmem:[%s2 + $0x100] sm:$0xff]
  %v2016 = vld [vmem:[%s2 + $0x108] sm:$0xff]
  %v2017 = vld [vmem:[%s2 + $0x110] sm:$0xff]
  %v2018 = vld [vmem:[%s2 + $0x118] sm:$0xff]
  %v2019 = vld [vmem:[%s2 + $0x2e0] sm:$0xff]
  %v2020 = vld [vmem:[%s2 + $0x2e8] sm:$0xff]
  %v2021 = vld [vmem:[%s2 + $0x2f0] sm:$0xff]
  %v2022 = vld [vmem:[%s2 + $0x2f8] sm:$0xff]
  %v2023 = vld [vmem:[%s2 + $0x300] sm:$0xff]
  %v2024 = vld [vmem:[%s2 + $0x308] sm:$0xff]
  %v2025 = vld [vmem:[%s2 + $0x310] sm:$0xff]
  %v2026 = vld [vmem:[%s2 + $0x318] sm:$0xff]
  %v2027 = vld [vmem:[%s2 + $0x320] sm:$0xff]
  %v2028 = vld [vmem:[%s2 + $0x328] sm:$0xff]
  %v2029 = vld [vmem:[%s2 + $0x330] sm:$0xff]
  %v2030 = vld [vmem:[%s2 + $0x338] sm:$0xff]
  %v2031 = vld [vmem:[%s2 + $0x340] sm:$0xff]
  %v2032 = vld [vmem:[%s2 + $0x348] sm:$0xff]
  %v2033 = vld [vmem:[%s2 + $0x350] sm:$0xff]
  %v2034 = vld [vmem:[%s2 + $0x358] sm:$0xff]
  %v2035 = vperm.slane %v2014, 0
  %v2037 = vsel %vm102, %v2004, 0
  %v2040 = vsel %vm102, %v2005, 0
  %2042 = vmatpush.msra.mxu0 0.0
  %2043 = vmatpush.msra.mxu0 0.0
  %2044 = vmatpush.msra.mxu0 0.0
  %2045 = vmatpush.msra.mxu0 0.0
  %2046 = vmatpush.msra.mxu0 0.0
  %2047 = vmatpush.msra.mxu0 0.0
  %2048 = vmatpush.msra.mxu0 0.0
  %2049 = vmatpush.msra.mxu0 0.0
  %2050 = vmatpush.msra.mxu0 0.0
  %2051 = vmatpush.msra.mxu0 0.0
  %2052 = vmatpush.msra.mxu0 0.0
  %2053 = vmatpush.msra.mxu0 0.0
  %2054 = vmatpush.msra.mxu0 %v2009
  %2055 = vmatpush.msra.mxu0 %v2008
  %2056 = vmatpush.msra.mxu0 %v2007
  %2057 = vmatpush.msra.mxu0 %v2006
  %2058 = vmatmul.f32.gmra.mxu0 %v2037
  %v2059 = vpop.f32.mrf.mxu0
  %v2060 = vadd.f32 %v2035, %v2059
  %2061 = vmatmul.f32.gmra.mxu0 %v2040
  %v2062 = vpop.f32.mrf.mxu0
  %v2063 = vadd.f32 %v2035, %v2062
  %2064 = vdwg.mxu0
  %2067 = vrot.lane.b32.xlu0 %v2060, 96
  %v2068 = vpop.permute.xlu0 %2067
  %2069 = vrot.lane.b32.xlu0 %v2063, 96
  %v2070 = vpop.permute.xlu0 %2069
  %2073 = vxpose.xlu0.b32.start [1/16] %v2068, 128
  %2074 = vxpose.xlu0.b32.cont [2/16] %v2070, 128
  %2075 = vxpose.xlu0.b32.cont [3/16] 0.0, 128
  %2076 = vxpose.xlu0.b32.cont [4/16] 0.0, 128
  %2077 = vxpose.xlu0.b32.cont [5/16] 0.0, 128
  %2078 = vxpose.xlu0.b32.cont [6/16] 0.0, 128
  %2079 = vxpose.xlu0.b32.cont [7/16] 0.0, 128
  %2080 = vxpose.xlu0.b32.cont [8/16] 0.0, 128
  %2081 = vxpose.xlu0.b32.cont [9/16] 0.0, 128
  %2082 = vxpose.xlu0.b32.cont [10/16] 0.0, 128
  %2083 = vxpose.xlu0.b32.cont [11/16] 0.0, 128
  %2084 = vxpose.xlu0.b32.cont [12/16] 0.0, 128
  %2085 = vxpose.xlu0.b32.cont [13/16] 0.0, 128
  %2086 = vxpose.xlu0.b32.cont [14/16] 0.0, 128
  %2087 = vxpose.xlu0.b32.cont [15/16] 0.0, 128
  %2088 = vxpose.xlu0.b32.end [16/16] 0.0, 128
  %v2089 = vpop.trf.xlu0
  %v2090 = vpop.trf.xlu0
  %v2091 = vpop.trf.xlu0
  %v2092 = vpop.trf.xlu0
  %v2093 = vpop.trf.xlu0
  %v2094 = vpop.trf.xlu0
  %v2095 = vpop.trf.xlu0
  %v2096 = vpop.trf.xlu0
  %v2097 = vpop.trf.xlu0
  %v2098 = vpop.trf.xlu0
  %v2099 = vpop.trf.xlu0
  %v2100 = vpop.trf.xlu0
  %v2101 = vpop.trf.xlu0
  %v2102 = vpop.trf.xlu0
  %v2103 = vpop.trf.xlu0
  %v2104 = vpop.trf.xlu0
  %2109 = vrot.lane.b32.xlu0 %v2089, 16
  %v2110 = vpop.permute.xlu0 %2109
  %2111 = vrot.lane.b32.xlu0 %v2090, 16
  %v2112 = vpop.permute.xlu0 %2111
  %2113 = vrot.lane.b32.xlu0 %v2091, 16
  %v2114 = vpop.permute.xlu0 %2113
  %2115 = vrot.lane.b32.xlu0 %v2092, 16
  %v2116 = vpop.permute.xlu0 %2115
  %2121 = vrot.lane.b32.xlu0 %v2089, 32
  %v2122 = vpop.permute.xlu0 %2121
  %2123 = vrot.lane.b32.xlu0 %v2090, 32
  %v2124 = vpop.permute.xlu0 %2123
  %2125 = vrot.lane.b32.xlu0 %v2091, 32
  %v2126 = vpop.permute.xlu0 %2125
  %2127 = vrot.lane.b32.xlu0 %v2092, 32
  %v2128 = vpop.permute.xlu0 %2127
  %2133 = vrot.lane.b32.xlu0 %v2089, 48
  %v2134 = vpop.permute.xlu0 %2133
  %2135 = vrot.lane.b32.xlu0 %v2090, 48
  %v2136 = vpop.permute.xlu0 %2135
  %2137 = vrot.lane.b32.xlu0 %v2091, 48
  %v2138 = vpop.permute.xlu0 %2137
  %2139 = vrot.lane.b32.xlu0 %v2092, 48
  %v2140 = vpop.permute.xlu0 %2139
  %2145 = vrot.lane.b32.xlu0 %v2089, 64
  %v2146 = vpop.permute.xlu0 %2145
  %2147 = vrot.lane.b32.xlu0 %v2090, 64
  %v2148 = vpop.permute.xlu0 %2147
  %2149 = vrot.lane.b32.xlu0 %v2091, 64
  %v2150 = vpop.permute.xlu0 %2149
  %2151 = vrot.lane.b32.xlu0 %v2092, 64
  %v2152 = vpop.permute.xlu0 %2151
  %2157 = vrot.lane.b32.xlu0 %v2089, 80
  %v2158 = vpop.permute.xlu0 %2157
  %2159 = vrot.lane.b32.xlu0 %v2090, 80
  %v2160 = vpop.permute.xlu0 %2159
  %2161 = vrot.lane.b32.xlu0 %v2091, 80
  %v2162 = vpop.permute.xlu0 %2161
  %2163 = vrot.lane.b32.xlu0 %v2092, 80
  %v2164 = vpop.permute.xlu0 %2163
  %2169 = vrot.lane.b32.xlu0 %v2089, 96
  %v2170 = vpop.permute.xlu0 %2169
  %2171 = vrot.lane.b32.xlu0 %v2090, 96
  %v2172 = vpop.permute.xlu0 %2171
  %2173 = vrot.lane.b32.xlu0 %v2091, 96
  %v2174 = vpop.permute.xlu0 %2173
  %2175 = vrot.lane.b32.xlu0 %v2092, 96
  %v2176 = vpop.permute.xlu0 %2175
  %2181 = vrot.lane.b32.xlu0 %v2089, 112
  %v2182 = vpop.permute.xlu0 %2181
  %2183 = vrot.lane.b32.xlu0 %v2090, 112
  %v2184 = vpop.permute.xlu0 %2183
  %2185 = vrot.lane.b32.xlu0 %v2091, 112
  %v2186 = vpop.permute.xlu0 %2185
  %2187 = vrot.lane.b32.xlu0 %v2092, 112
  %v2188 = vpop.permute.xlu0 %2187
  %v2193 = vsel %vm20, %v2089, %v2110
  %v2194 = vsel %vm20, %v2090, %v2112
  %v2195 = vsel %vm20, %v2091, %v2114
  %v2196 = vsel %vm20, %v2092, %v2116
  %v2197 = vsel %vm102, %v2193, %v2122
  %v2198 = vsel %vm102, %v2194, %v2124
  %v2199 = vsel %vm102, %v2195, %v2126
  %v2200 = vsel %vm102, %v2196, %v2128
  %v2201 = vsel %vm268, %v2197, %v2134
  %v2202 = vsel %vm268, %v2198, %v2136
  %v2203 = vsel %vm268, %v2199, %v2138
  %v2204 = vsel %vm268, %v2200, %v2140
  %v2205 = vsel %vm273, %v2201, %v2146
  %v2206 = vsel %vm273, %v2202, %v2148
  %v2207 = vsel %vm273, %v2203, %v2150
  %v2208 = vsel %vm273, %v2204, %v2152
  %v2209 = vsel %vm278, %v2205, %v2158
  %v2210 = vsel %vm278, %v2206, %v2160
  %v2211 = vsel %vm278, %v2207, %v2162
  %v2212 = vsel %vm278, %v2208, %v2164
  %v2213 = vsel %vm283, %v2209, %v2170
  %v2214 = vsel %vm283, %v2210, %v2172
  %v2215 = vsel %vm283, %v2211, %v2174
  %v2216 = vsel %vm283, %v2212, %v2176
  %v2217 = vsel %vm288, %v2213, %v2182
  %v2218 = vsel %vm288, %v2214, %v2184
  %v2219 = vsel %vm288, %v2215, %v2186
  %v2220 = vsel %vm288, %v2216, %v2188
  %v2221 = vmul.f32 %v2217, %v50
  %v2222 = vmul.f32 %v2218, %v51
  %v2223 = vmul.f32 %v2219, %v52
  %v2224 = vmul.f32 %v2220, %v53
  %v2225 = vsel %vm102, %v2060, 0
  %v2227 = vsel %vm102, %v2063, 0
  %2229 = vmatpush.msra.mxu0 0.0
  %2230 = vmatpush.msra.mxu0 0.0
  %2231 = vmatpush.msra.mxu0 0.0
  %2232 = vmatpush.msra.mxu0 0.0
  %2233 = vmatpush.msra.mxu0 0.0
  %2234 = vmatpush.msra.mxu0 0.0
  %2235 = vmatpush.msra.mxu0 0.0
  %2236 = vmatpush.msra.mxu0 0.0
  %2237 = vmatpush.msra.mxu0 0.0
  %2238 = vmatpush.msra.mxu0 0.0
  %2239 = vmatpush.msra.mxu0 0.0
  %2240 = vmatpush.msra.mxu0 0.0
  %2241 = vmatpush.msra.mxu0 %v2224
  %2242 = vmatpush.msra.mxu0 %v2223
  %2243 = vmatpush.msra.mxu0 %v2222
  %2244 = vmatpush.msra.mxu0 %v2221
  %2245 = vmatmul.f32.gmra.mxu0 %v2225
  %v2246 = vpop.f32.mrf.mxu0
  %v2247 = vadd.f32 %v54, %v2246
  %2248 = vmatmul.f32.gmra.mxu0 %v2227
  %v2249 = vpop.f32.mrf.mxu0
  %v2250 = vadd.f32 %v55, %v2249
  %2251 = vdwg.mxu0
  %2252 = vmax.xlane.f32.xlu0 %v2247
  %v2253 = vpop.xlane.xlu0 %2252
  %2254 = vmax.xlane.f32.xlu0 %v2250
  %v2255 = vpop.xlane.xlu0 %2254
  %v2256 = vsub.f32 %v2247, %v2253
  %v2257 = vsub.f32 %v2250, %v2255
  %v2258 = vmul.f32 %v2256, 1.442695
  %v2259 = vpow.pop %v2258
  %v2260 = vmul.f32 %v2257, 1.442695
  %v2261 = vpow.pop %v2260
  %v2262 = vmul.f32 %v2060, %v351
  %v2263 = vmul.f32 %v2063, %v353
  %v2264 = vmul.f32 %v2060, %v355
  %v2265 = vmul.f32 %v2063, %v357
  %v2266 = vmul.f32 %v2060, %v359
  %v2267 = vmul.f32 %v2063, %v361
  %v2268 = vmul.f32 %v2060, %v363
  %v2269 = vmul.f32 %v2063, %v365
  %v2270 = vmul.f32 %v2060, %v367
  %v2271 = vmul.f32 %v2063, %v369
  %v2272 = vmul.f32 %v2060, %v371
  %v2273 = vmul.f32 %v2063, %v373
  %v2274 = vmul.f32 %v2060, %v375
  %v2275 = vmul.f32 %v2063, %v377
  %v2276 = vmul.f32 %v2060, %v379
  %v2277 = vmul.f32 %v2063, %v381
  %2294 = vrot.lane.b32.xlu0 %v2262, 64
  %v2295 = vpop.permute.xlu0 %2294
  %2296 = vrot.lane.b32.xlu0 %v2263, 64
  %v2297 = vpop.permute.xlu0 %2296
  %2298 = vrot.lane.b32.xlu0 %v2264, 64
  %v2299 = vpop.permute.xlu0 %2298
  %2300 = vrot.lane.b32.xlu0 %v2265, 64
  %v2301 = vpop.permute.xlu0 %2300
  %2302 = vrot.lane.b32.xlu0 %v2266, 64
  %v2303 = vpop.permute.xlu0 %2302
  %2304 = vrot.lane.b32.xlu0 %v2267, 64
  %v2305 = vpop.permute.xlu0 %2304
  %2306 = vrot.lane.b32.xlu0 %v2268, 64
  %v2307 = vpop.permute.xlu0 %2306
  %2308 = vrot.lane.b32.xlu0 %v2269, 64
  %v2309 = vpop.permute.xlu0 %2308
  %2310 = vrot.lane.b32.xlu0 %v2270, 64
  %v2311 = vpop.permute.xlu0 %2310
  %2312 = vrot.lane.b32.xlu0 %v2271, 64
  %v2313 = vpop.permute.xlu0 %2312
  %2314 = vrot.lane.b32.xlu0 %v2272, 64
  %v2315 = vpop.permute.xlu0 %2314
  %2316 = vrot.lane.b32.xlu0 %v2273, 64
  %v2317 = vpop.permute.xlu0 %2316
  %2318 = vrot.lane.b32.xlu0 %v2274, 64
  %v2319 = vpop.permute.xlu0 %2318
  %2320 = vrot.lane.b32.xlu0 %v2275, 64
  %v2321 = vpop.permute.xlu0 %2320
  %2322 = vrot.lane.b32.xlu0 %v2276, 64
  %v2323 = vpop.permute.xlu0 %2322
  %2324 = vrot.lane.b32.xlu0 %v2277, 64
  %v2325 = vpop.permute.xlu0 %2324
  %v2342 = vsel %vm102, %v2295, %v479
  %v2343 = vsel %vm102, %v2297, %v481
  %v2344 = vsel %vm102, %v2299, %v483
  %v2345 = vsel %vm102, %v2301, %v485
  %v2346 = vsel %vm102, %v2303, %v487
  %v2347 = vsel %vm102, %v2305, %v489
  %v2348 = vsel %vm102, %v2307, %v491
  %v2349 = vsel %vm102, %v2309, %v493
  %v2350 = vsel %vm102, %v2311, %v495
  %v2351 = vsel %vm102, %v2313, %v497
  %v2352 = vsel %vm102, %v2315, %v499
  %v2353 = vsel %vm102, %v2317, %v501
  %v2354 = vsel %vm102, %v2319, %v503
  %v2355 = vsel %vm102, %v2321, %v505
  %v2356 = vsel %vm102, %v2323, %v507
  %v2357 = vsel %vm102, %v2325, %v509
  %2358 = vmatpush.msra.mxu0 %v2357
  %2359 = vmatpush.msra.mxu0 %v2356
  %2360 = vmatpush.msra.mxu0 %v2355
  %2361 = vmatpush.msra.mxu0 %v2354
  %2362 = vmatpush.msra.mxu0 %v2353
  %2363 = vmatpush.msra.mxu0 %v2352
  %2364 = vmatpush.msra.mxu0 %v2351
  %2365 = vmatpush.msra.mxu0 %v2350
  %2366 = vmatpush.msra.mxu0 %v2349
  %2367 = vmatpush.msra.mxu0 %v2348
  %2368 = vmatpush.msra.mxu0 %v2347
  %2369 = vmatpush.msra.mxu0 %v2346
  %2370 = vmatpush.msra.mxu0 %v2345
  %2371 = vmatpush.msra.mxu0 %v2344
  %2372 = vmatpush.msra.mxu0 %v2343
  %2373 = vmatpush.msra.mxu0 %v2342
  %2374 = vmatmul.f32.gmra.mxu0 %v2259
  %v2375 = vpop.f32.mrf.mxu0
  %v2376 = vadd.f32 0.0, %v2375
  %2377 = vmatmul.f32.gmra.mxu0 %v2261
  %v2378 = vpop.f32.mrf.mxu0
  %v2379 = vadd.f32 0.0, %v2378
  %2380 = vdwg.mxu0
  %2383 = vrot.lane.b32.xlu0 %v2376, 96
  %v2384 = vpop.permute.xlu0 %2383
  %2385 = vrot.lane.b32.xlu0 %v2379, 96
  %v2386 = vpop.permute.xlu0 %2385
  %v2389 = vrcp.pop %v2384
  %v2390 = vmul.f32 %v2384, %v2389
  %v2391 = vsub.f32 1.0, %v2390
  %v2392 = vmul.f32 %v2389, %v2391
  %v2393 = vadd.f32 %v2389, %v2392
  %vm2394 = vweird.f32 %v2384
  %vm2395 = vweird.f32 %v2389
  %vm2396 = vmor %vm2394, %vm2395
  %v2397 = vsel %vm2396, %v2389, %v2393
  %v2398 = vand.u32 2147483647, %v2384
  %vm2399 = vcmp.eq.f32.partialorder %v2398, 8.507059e+37
  %v2400 = vand.u32 %v2384, 2147483648
  %v2401 = vor.u32 1.1754944e-38, %v2400
  %v2402 = vsel %vm2399, %v2401, %v2397
  %v2403 = vmul.f32 %v2376, %v2402
  %v2404 = vrcp.pop %v2386
  %v2405 = vmul.f32 %v2386, %v2404
  %v2406 = vsub.f32 1.0, %v2405
  %v2407 = vmul.f32 %v2404, %v2406
  %v2408 = vadd.f32 %v2404, %v2407
  %vm2409 = vweird.f32 %v2386
  %vm2410 = vweird.f32 %v2404
  %vm2411 = vmor %vm2409, %vm2410
  %v2412 = vsel %vm2411, %v2404, %v2408
  %v2413 = vand.u32 2147483647, %v2386
  %vm2414 = vcmp.eq.f32.partialorder %v2413, 8.507059e+37
  %v2415 = vand.u32 %v2386, 2147483648
  %v2416 = vor.u32 1.1754944e-38, %v2415
  %v2417 = vsel %vm2414, %v2416, %v2412
  %v2418 = vmul.f32 %v2379, %v2417
  %v2419 = vperm.slane %v2014, 1
  %v2421 = vsel %vm102, %v2403, 0
  %v2424 = vsel %vm102, %v2418, 0
  %2426 = vmatpush.msra.mxu0 0.0
  %2427 = vmatpush.msra.mxu0 0.0
  %2428 = vmatpush.msra.mxu0 0.0
  %2429 = vmatpush.msra.mxu0 0.0
  %2430 = vmatpush.msra.mxu0 0.0
  %2431 = vmatpush.msra.mxu0 0.0
  %2432 = vmatpush.msra.mxu0 0.0
  %2433 = vmatpush.msra.mxu0 0.0
  %2434 = vmatpush.msra.mxu0 0.0
  %2435 = vmatpush.msra.mxu0 0.0
  %2436 = vmatpush.msra.mxu0 0.0
  %2437 = vmatpush.msra.mxu0 0.0
  %2438 = vmatpush.msra.mxu0 %v2018
  %2439 = vmatpush.msra.mxu0 %v2017
  %2440 = vmatpush.msra.mxu0 %v2016
  %2441 = vmatpush.msra.mxu0 %v2015
  %2442 = vmatmul.f32.gmra.mxu0 %v2421
  %v2443 = vpop.f32.mrf.mxu0
  %v2444 = vadd.f32 %v2419, %v2443
  %2445 = vmatmul.f32.gmra.mxu0 %v2424
  %v2446 = vpop.f32.mrf.mxu0
  %v2447 = vadd.f32 %v2419, %v2446
  %2448 = vdwg.mxu0
  %v2449 = vadd.f32 %v2004, %v2444
  %v2450 = vadd.f32 %v2005, %v2447
  %v2451 = vsel %vm102, %v2449, 0.0
  %2452 = vadd.xlane.f32.xlu0 %v2451
  %v2453 = vpop.xlane.xlu0 %2452
  %v2454 = vsel %vm102, %v2450, 0.0
  %2455 = vadd.xlane.f32.xlu0 %v2454
  %v2456 = vpop.xlane.xlu0 %2455
  %v2457 = vmul.f32 %v2453, %v647
  %v2458 = vmul.f32 %v2456, %v647
  %v2459 = vsub.f32 %v2449, %v2457
  %v2460 = vsub.f32 %v2450, %v2458
  %v2461 = vmul.f32 %v2459, %v2459
  %v2462 = vmul.f32 %v2460, %v2460
  %v2463 = vsel %vm102, %v2461, 0.0
  %2464 = vadd.xlane.f32.xlu0 %v2463
  %v2465 = vpop.xlane.xlu0 %2464
  %v2466 = vsel %vm102, %v2462, 0.0
  %2467 = vadd.xlane.f32.xlu0 %v2466
  %v2468 = vpop.xlane.xlu0 %2467
  %v2469 = vmul.f32 %v2465, %v647
  %v2470 = vmul.f32 %v2468, %v647
  %v2471 = vadd.f32 %v2469, 1e-05
  %v2472 = vadd.f32 %v2470, 1e-05
  %v2473 = vrsqrt.pop %v2471
  %v2474 = vmul.f32 %v2473, %v2471
  %v2475 = vmul.f32 %v2474, %v2473
  %v2476 = vmul.f32 0.5, %v2475
  %v2477 = vsub.f32 1.5, %v2476
  %v2478 = vmul.f32 %v2473, %v2477
  %vm2479 = vweird.f32 %v2471
  %vm2480 = vweird.f32 %v2473
  %vm2481 = vmor %vm2479, %vm2480
  %v2482 = vsel %vm2481, %v2473, %v2478
  %v2483 = vrsqrt.pop %v2472
  %v2484 = vmul.f32 %v2483, %v2472
  %v2485 = vmul.f32 %v2484, %v2483
  %v2486 = vmul.f32 0.5, %v2485
  %v2487 = vsub.f32 1.5, %v2486
  %v2488 = vmul.f32 %v2483, %v2487
  %vm2489 = vweird.f32 %v2472
  %vm2490 = vweird.f32 %v2483
  %vm2491 = vmor %vm2489, %vm2490
  %v2492 = vsel %vm2491, %v2483, %v2488
  %v2493 = vmul.f32 %v2459, %v2482
  %v2494 = vmul.f32 %v2460, %v2492
  %v2495 = vperm.slane %v2014, 2
  %v2496 = vmul.f32 %v2493, %v2495
  %v2497 = vmul.f32 %v2494, %v2495
  %v2498 = vperm.slane %v2014, 3
  %v2499 = vadd.f32 %v2496, %v2498
  %v2500 = vadd.f32 %v2497, %v2498
  %v2501 = vperm.slane %v2014, 4
  %v2503 = vsel %vm102, %v2499, 0
  %v2506 = vsel %vm102, %v2500, 0
  %2508 = vmatpush.msra.mxu0 0.0
  %2509 = vmatpush.msra.mxu0 0.0
  %2510 = vmatpush.msra.mxu0 0.0
  %2511 = vmatpush.msra.mxu0 0.0
  %2512 = vmatpush.msra.mxu0 0.0
  %2513 = vmatpush.msra.mxu0 0.0
  %2514 = vmatpush.msra.mxu0 0.0
  %2515 = vmatpush.msra.mxu0 0.0
  %2516 = vmatpush.msra.mxu0 0.0
  %2517 = vmatpush.msra.mxu0 0.0
  %2518 = vmatpush.msra.mxu0 0.0
  %2519 = vmatpush.msra.mxu0 0.0
  %2520 = vmatpush.msra.mxu0 %v2013
  %2521 = vmatpush.msra.mxu0 %v2012
  %2522 = vmatpush.msra.mxu0 %v2011
  %2523 = vmatpush.msra.mxu0 %v2010
  %2524 = vmatmul.f32.gmra.mxu0 %v2503
  %v2525 = vpop.f32.mrf.mxu0
  %v2526 = vadd.f32 %v2501, %v2525
  %2527 = vmatmul.f32.gmra.mxu0 %v2506
  %v2528 = vpop.f32.mrf.mxu0
  %v2529 = vadd.f32 %v2501, %v2528
  %2530 = vdwg.mxu0
  %v2531 = vmax.f32 %v2526, 0.0
  %v2532 = vmax.f32 %v2529, 0.0
  %v2533 = vperm.slane %v2014, 5
  %2534 = vmatpush.msra.mxu0 %v2034
  %2535 = vmatpush.msra.mxu0 %v2033
  %2536 = vmatpush.msra.mxu0 %v2032
  %2537 = vmatpush.msra.mxu0 %v2031
  %2538 = vmatpush.msra.mxu0 %v2030
  %2539 = vmatpush.msra.mxu0 %v2029
  %2540 = vmatpush.msra.mxu0 %v2028
  %2541 = vmatpush.msra.mxu0 %v2027
  %2542 = vmatpush.msra.mxu0 %v2026
  %2543 = vmatpush.msra.mxu0 %v2025
  %2544 = vmatpush.msra.mxu0 %v2024
  %2545 = vmatpush.msra.mxu0 %v2023
  %2546 = vmatpush.msra.mxu0 %v2022
  %2547 = vmatpush.msra.mxu0 %v2021
  %2548 = vmatpush.msra.mxu0 %v2020
  %2549 = vmatpush.msra.mxu0 %v2019
  %2550 = vmatmul.f32.gmra.mxu0 %v2531
  %v2551 = vpop.f32.mrf.mxu0
  %v2552 = vadd.f32 %v2533, %v2551
  %2553 = vmatmul.f32.gmra.mxu0 %v2532
  %v2554 = vpop.f32.mrf.mxu0
  %v2555 = vadd.f32 %v2533, %v2554
  %2556 = vdwg.mxu0
  %v2557 = vadd.f32 %v2499, %v2552
  %v2558 = vadd.f32 %v2500, %v2555
  %v2559 = vsel %vm102, %v2557, 0.0
  %2560 = vadd.xlane.f32.xlu0 %v2559
  %v2561 = vpop.xlane.xlu0 %2560
  %v2562 = vsel %vm102, %v2558, 0.0
  %2563 = vadd.xlane.f32.xlu0 %v2562
  %v2564 = vpop.xlane.xlu0 %2563
  %v2565 = vmul.f32 %v2561, %v647
  %v2566 = vmul.f32 %v2564, %v647
  %v2567 = vsub.f32 %v2557, %v2565
  %v2568 = vsub.f32 %v2558, %v2566
  %v2569 = vmul.f32 %v2567, %v2567
  %v2570 = vmul.f32 %v2568, %v2568
  %v2571 = vsel %vm102, %v2569, 0.0
  %2572 = vadd.xlane.f32.xlu0 %v2571
  %v2573 = vpop.xlane.xlu0 %2572
  %v2574 = vsel %vm102, %v2570, 0.0
  %2575 = vadd.xlane.f32.xlu0 %v2574
  %v2576 = vpop.xlane.xlu0 %2575
  %v2577 = vmul.f32 %v2573, %v647
  %v2578 = vmul.f32 %v2576, %v647
  %v2579 = vadd.f32 %v2577, 1e-05
  %v2580 = vadd.f32 %v2578, 1e-05
  %v2581 = vrsqrt.pop %v2579
  %v2582 = vmul.f32 %v2581, %v2579
  %v2583 = vmul.f32 %v2582, %v2581
  %v2584 = vmul.f32 0.5, %v2583
  %v2585 = vsub.f32 1.5, %v2584
  %v2586 = vmul.f32 %v2581, %v2585
  %vm2587 = vweird.f32 %v2579
  %vm2588 = vweird.f32 %v2581
  %vm2589 = vmor %vm2587, %vm2588
  %v2590 = vsel %vm2589, %v2581, %v2586
  %v2591 = vrsqrt.pop %v2580
  %v2592 = vmul.f32 %v2591, %v2580
  %v2593 = vmul.f32 %v2592, %v2591
  %v2594 = vmul.f32 0.5, %v2593
  %v2595 = vsub.f32 1.5, %v2594
  %v2596 = vmul.f32 %v2591, %v2595
  %vm2597 = vweird.f32 %v2580
  %vm2598 = vweird.f32 %v2591
  %vm2599 = vmor %vm2597, %vm2598
  %v2600 = vsel %vm2599, %v2591, %v2596
  %v2601 = vmul.f32 %v2567, %v2590
  %v2602 = vmul.f32 %v2568, %v2600
  %v2603 = vperm.slane %v2014, 6
  %v2604 = vmul.f32 %v2601, %v2603
  %v2605 = vmul.f32 %v2602, %v2603
  %v2606 = vperm.slane %v2014, 7
  %v2607 = vadd.f32 %v2604, %v2606
  %v2608 = vadd.f32 %v2605, %v2606
  %v2609 = vld [vmem:[%s1 + $0xb0] sm:$0xff]
  %v2610 = vld [vmem:[%s1 + $0xb8] sm:$0xff]
  %v2611 = vld [vmem:[%s1 + $0xc0] sm:$0xff]
  %v2612 = vld [vmem:[%s1 + $0xc8] sm:$0xff]
  %v2613 = vld [vmem:[%s1 + $0x170] sm:$0xff]
  %v2614 = vld [vmem:[%s1 + $0x178] sm:$0xff]
  %v2615 = vld [vmem:[%s1 + $0x180] sm:$0xff]
  %v2616 = vld [vmem:[%s1 + $0x188] sm:$0xff]
  %v2617 = vld [vmem:[%s1 + $0x1d0] sm:$0xff]
  %v2618 = vld [vmem:[%s2 + $0x120] sm:$0xff]
  %v2619 = vld [vmem:[%s2 + $0x128] sm:$0xff]
  %v2620 = vld [vmem:[%s2 + $0x130] sm:$0xff]
  %v2621 = vld [vmem:[%s2 + $0x138] sm:$0xff]
  %v2622 = vld [vmem:[%s2 + $0x360] sm:$0xff]
  %v2623 = vld [vmem:[%s2 + $0x368] sm:$0xff]
  %v2624 = vld [vmem:[%s2 + $0x370] sm:$0xff]
  %v2625 = vld [vmem:[%s2 + $0x378] sm:$0xff]
  %v2626 = vld [vmem:[%s2 + $0x380] sm:$0xff]
  %v2627 = vld [vmem:[%s2 + $0x388] sm:$0xff]
  %v2628 = vld [vmem:[%s2 + $0x390] sm:$0xff]
  %v2629 = vld [vmem:[%s2 + $0x398] sm:$0xff]
  %v2630 = vld [vmem:[%s2 + $0x3a0] sm:$0xff]
  %v2631 = vld [vmem:[%s2 + $0x3a8] sm:$0xff]
  %v2632 = vld [vmem:[%s2 + $0x3b0] sm:$0xff]
  %v2633 = vld [vmem:[%s2 + $0x3b8] sm:$0xff]
  %v2634 = vld [vmem:[%s2 + $0x3c0] sm:$0xff]
  %v2635 = vld [vmem:[%s2 + $0x3c8] sm:$0xff]
  %v2636 = vld [vmem:[%s2 + $0x3d0] sm:$0xff]
  %v2637 = vld [vmem:[%s2 + $0x3d8] sm:$0xff]
  %v2638 = vperm.slane %v2617, 0
  %v2640 = vsel %vm102, %v2607, 0
  %v2643 = vsel %vm102, %v2608, 0
  %2645 = vmatpush.msra.mxu0 0.0
  %2646 = vmatpush.msra.mxu0 0.0
  %2647 = vmatpush.msra.mxu0 0.0
  %2648 = vmatpush.msra.mxu0 0.0
  %2649 = vmatpush.msra.mxu0 0.0
  %2650 = vmatpush.msra.mxu0 0.0
  %2651 = vmatpush.msra.mxu0 0.0
  %2652 = vmatpush.msra.mxu0 0.0
  %2653 = vmatpush.msra.mxu0 0.0
  %2654 = vmatpush.msra.mxu0 0.0
  %2655 = vmatpush.msra.mxu0 0.0
  %2656 = vmatpush.msra.mxu0 0.0
  %2657 = vmatpush.msra.mxu0 %v2612
  %2658 = vmatpush.msra.mxu0 %v2611
  %2659 = vmatpush.msra.mxu0 %v2610
  %2660 = vmatpush.msra.mxu0 %v2609
  %2661 = vmatmul.f32.gmra.mxu0 %v2640
  %v2662 = vpop.f32.mrf.mxu0
  %v2663 = vadd.f32 %v2638, %v2662
  %2664 = vmatmul.f32.gmra.mxu0 %v2643
  %v2665 = vpop.f32.mrf.mxu0
  %v2666 = vadd.f32 %v2638, %v2665
  %2667 = vdwg.mxu0
  %2670 = vrot.lane.b32.xlu0 %v2663, 96
  %v2671 = vpop.permute.xlu0 %2670
  %2672 = vrot.lane.b32.xlu0 %v2666, 96
  %v2673 = vpop.permute.xlu0 %2672
  %2676 = vxpose.xlu0.b32.start [1/16] %v2671, 128
  %2677 = vxpose.xlu0.b32.cont [2/16] %v2673, 128
  %2678 = vxpose.xlu0.b32.cont [3/16] 0.0, 128
  %2679 = vxpose.xlu0.b32.cont [4/16] 0.0, 128
  %2680 = vxpose.xlu0.b32.cont [5/16] 0.0, 128
  %2681 = vxpose.xlu0.b32.cont [6/16] 0.0, 128
  %2682 = vxpose.xlu0.b32.cont [7/16] 0.0, 128
  %2683 = vxpose.xlu0.b32.cont [8/16] 0.0, 128
  %2684 = vxpose.xlu0.b32.cont [9/16] 0.0, 128
  %2685 = vxpose.xlu0.b32.cont [10/16] 0.0, 128
  %2686 = vxpose.xlu0.b32.cont [11/16] 0.0, 128
  %2687 = vxpose.xlu0.b32.cont [12/16] 0.0, 128
  %2688 = vxpose.xlu0.b32.cont [13/16] 0.0, 128
  %2689 = vxpose.xlu0.b32.cont [14/16] 0.0, 128
  %2690 = vxpose.xlu0.b32.cont [15/16] 0.0, 128
  %2691 = vxpose.xlu0.b32.end [16/16] 0.0, 128
  %v2692 = vpop.trf.xlu0
  %v2693 = vpop.trf.xlu0
  %v2694 = vpop.trf.xlu0
  %v2695 = vpop.trf.xlu0
  %v2696 = vpop.trf.xlu0
  %v2697 = vpop.trf.xlu0
  %v2698 = vpop.trf.xlu0
  %v2699 = vpop.trf.xlu0
  %v2700 = vpop.trf.xlu0
  %v2701 = vpop.trf.xlu0
  %v2702 = vpop.trf.xlu0
  %v2703 = vpop.trf.xlu0
  %v2704 = vpop.trf.xlu0
  %v2705 = vpop.trf.xlu0
  %v2706 = vpop.trf.xlu0
  %v2707 = vpop.trf.xlu0
  %2712 = vrot.lane.b32.xlu0 %v2692, 16
  %v2713 = vpop.permute.xlu0 %2712
  %2714 = vrot.lane.b32.xlu0 %v2693, 16
  %v2715 = vpop.permute.xlu0 %2714
  %2716 = vrot.lane.b32.xlu0 %v2694, 16
  %v2717 = vpop.permute.xlu0 %2716
  %2718 = vrot.lane.b32.xlu0 %v2695, 16
  %v2719 = vpop.permute.xlu0 %2718
  %2724 = vrot.lane.b32.xlu0 %v2692, 32
  %v2725 = vpop.permute.xlu0 %2724
  %2726 = vrot.lane.b32.xlu0 %v2693, 32
  %v2727 = vpop.permute.xlu0 %2726
  %2728 = vrot.lane.b32.xlu0 %v2694, 32
  %v2729 = vpop.permute.xlu0 %2728
  %2730 = vrot.lane.b32.xlu0 %v2695, 32
  %v2731 = vpop.permute.xlu0 %2730
  %2736 = vrot.lane.b32.xlu0 %v2692, 48
  %v2737 = vpop.permute.xlu0 %2736
  %2738 = vrot.lane.b32.xlu0 %v2693, 48
  %v2739 = vpop.permute.xlu0 %2738
  %2740 = vrot.lane.b32.xlu0 %v2694, 48
  %v2741 = vpop.permute.xlu0 %2740
  %2742 = vrot.lane.b32.xlu0 %v2695, 48
  %v2743 = vpop.permute.xlu0 %2742
  %2748 = vrot.lane.b32.xlu0 %v2692, 64
  %v2749 = vpop.permute.xlu0 %2748
  %2750 = vrot.lane.b32.xlu0 %v2693, 64
  %v2751 = vpop.permute.xlu0 %2750
  %2752 = vrot.lane.b32.xlu0 %v2694, 64
  %v2753 = vpop.permute.xlu0 %2752
  %2754 = vrot.lane.b32.xlu0 %v2695, 64
  %v2755 = vpop.permute.xlu0 %2754
  %2760 = vrot.lane.b32.xlu0 %v2692, 80
  %v2761 = vpop.permute.xlu0 %2760
  %2762 = vrot.lane.b32.xlu0 %v2693, 80
  %v2763 = vpop.permute.xlu0 %2762
  %2764 = vrot.lane.b32.xlu0 %v2694, 80
  %v2765 = vpop.permute.xlu0 %2764
  %2766 = vrot.lane.b32.xlu0 %v2695, 80
  %v2767 = vpop.permute.xlu0 %2766
  %2772 = vrot.lane.b32.xlu0 %v2692, 96
  %v2773 = vpop.permute.xlu0 %2772
  %2774 = vrot.lane.b32.xlu0 %v2693, 96
  %v2775 = vpop.permute.xlu0 %2774
  %2776 = vrot.lane.b32.xlu0 %v2694, 96
  %v2777 = vpop.permute.xlu0 %2776
  %2778 = vrot.lane.b32.xlu0 %v2695, 96
  %v2779 = vpop.permute.xlu0 %2778
  %2784 = vrot.lane.b32.xlu0 %v2692, 112
  %v2785 = vpop.permute.xlu0 %2784
  %2786 = vrot.lane.b32.xlu0 %v2693, 112
  %v2787 = vpop.permute.xlu0 %2786
  %2788 = vrot.lane.b32.xlu0 %v2694, 112
  %v2789 = vpop.permute.xlu0 %2788
  %2790 = vrot.lane.b32.xlu0 %v2695, 112
  %v2791 = vpop.permute.xlu0 %2790
  %v2796 = vsel %vm20, %v2692, %v2713
  %v2797 = vsel %vm20, %v2693, %v2715
  %v2798 = vsel %vm20, %v2694, %v2717
  %v2799 = vsel %vm20, %v2695, %v2719
  %v2800 = vsel %vm102, %v2796, %v2725
  %v2801 = vsel %vm102, %v2797, %v2727
  %v2802 = vsel %vm102, %v2798, %v2729
  %v2803 = vsel %vm102, %v2799, %v2731
  %v2804 = vsel %vm268, %v2800, %v2737
  %v2805 = vsel %vm268, %v2801, %v2739
  %v2806 = vsel %vm268, %v2802, %v2741
  %v2807 = vsel %vm268, %v2803, %v2743
  %v2808 = vsel %vm273, %v2804, %v2749
  %v2809 = vsel %vm273, %v2805, %v2751
  %v2810 = vsel %vm273, %v2806, %v2753
  %v2811 = vsel %vm273, %v2807, %v2755
  %v2812 = vsel %vm278, %v2808, %v2761
  %v2813 = vsel %vm278, %v2809, %v2763
  %v2814 = vsel %vm278, %v2810, %v2765
  %v2815 = vsel %vm278, %v2811, %v2767
  %v2816 = vsel %vm283, %v2812, %v2773
  %v2817 = vsel %vm283, %v2813, %v2775
  %v2818 = vsel %vm283, %v2814, %v2777
  %v2819 = vsel %vm283, %v2815, %v2779
  %v2820 = vsel %vm288, %v2816, %v2785
  %v2821 = vsel %vm288, %v2817, %v2787
  %v2822 = vsel %vm288, %v2818, %v2789
  %v2823 = vsel %vm288, %v2819, %v2791
  %v2824 = vmul.f32 %v2820, %v50
  %v2825 = vmul.f32 %v2821, %v51
  %v2826 = vmul.f32 %v2822, %v52
  %v2827 = vmul.f32 %v2823, %v53
  %v2828 = vsel %vm102, %v2663, 0
  %v2830 = vsel %vm102, %v2666, 0
  %2832 = vmatpush.msra.mxu0 0.0
  %2833 = vmatpush.msra.mxu0 0.0
  %2834 = vmatpush.msra.mxu0 0.0
  %2835 = vmatpush.msra.mxu0 0.0
  %2836 = vmatpush.msra.mxu0 0.0
  %2837 = vmatpush.msra.mxu0 0.0
  %2838 = vmatpush.msra.mxu0 0.0
  %2839 = vmatpush.msra.mxu0 0.0
  %2840 = vmatpush.msra.mxu0 0.0
  %2841 = vmatpush.msra.mxu0 0.0
  %2842 = vmatpush.msra.mxu0 0.0
  %2843 = vmatpush.msra.mxu0 0.0
  %2844 = vmatpush.msra.mxu0 %v2827
  %2845 = vmatpush.msra.mxu0 %v2826
  %2846 = vmatpush.msra.mxu0 %v2825
  %2847 = vmatpush.msra.mxu0 %v2824
  %2848 = vmatmul.f32.gmra.mxu0 %v2828
  %v2849 = vpop.f32.mrf.mxu0
  %v2850 = vadd.f32 %v54, %v2849
  %2851 = vmatmul.f32.gmra.mxu0 %v2830
  %v2852 = vpop.f32.mrf.mxu0
  %v2853 = vadd.f32 %v55, %v2852
  %2854 = vdwg.mxu0
  %2855 = vmax.xlane.f32.xlu0 %v2850
  %v2856 = vpop.xlane.xlu0 %2855
  %2857 = vmax.xlane.f32.xlu0 %v2853
  %v2858 = vpop.xlane.xlu0 %2857
  %v2859 = vsub.f32 %v2850, %v2856
  %v2860 = vsub.f32 %v2853, %v2858
  %v2861 = vmul.f32 %v2859, 1.442695
  %v2862 = vpow.pop %v2861
  %v2863 = vmul.f32 %v2860, 1.442695
  %v2864 = vpow.pop %v2863
  %v2865 = vmul.f32 %v2663, %v351
  %v2866 = vmul.f32 %v2666, %v353
  %v2867 = vmul.f32 %v2663, %v355
  %v2868 = vmul.f32 %v2666, %v357
  %v2869 = vmul.f32 %v2663, %v359
  %v2870 = vmul.f32 %v2666, %v361
  %v2871 = vmul.f32 %v2663, %v363
  %v2872 = vmul.f32 %v2666, %v365
  %v2873 = vmul.f32 %v2663, %v367
  %v2874 = vmul.f32 %v2666, %v369
  %v2875 = vmul.f32 %v2663, %v371
  %v2876 = vmul.f32 %v2666, %v373
  %v2877 = vmul.f32 %v2663, %v375
  %v2878 = vmul.f32 %v2666, %v377
  %v2879 = vmul.f32 %v2663, %v379
  %v2880 = vmul.f32 %v2666, %v381
  %2897 = vrot.lane.b32.xlu0 %v2865, 64
  %v2898 = vpop.permute.xlu0 %2897
  %2899 = vrot.lane.b32.xlu0 %v2866, 64
  %v2900 = vpop.permute.xlu0 %2899
  %2901 = vrot.lane.b32.xlu0 %v2867, 64
  %v2902 = vpop.permute.xlu0 %2901
  %2903 = vrot.lane.b32.xlu0 %v2868, 64
  %v2904 = vpop.permute.xlu0 %2903
  %2905 = vrot.lane.b32.xlu0 %v2869, 64
  %v2906 = vpop.permute.xlu0 %2905
  %2907 = vrot.lane.b32.xlu0 %v2870, 64
  %v2908 = vpop.permute.xlu0 %2907
  %2909 = vrot.lane.b32.xlu0 %v2871, 64
  %v2910 = vpop.permute.xlu0 %2909
  %2911 = vrot.lane.b32.xlu0 %v2872, 64
  %v2912 = vpop.permute.xlu0 %2911
  %2913 = vrot.lane.b32.xlu0 %v2873, 64
  %v2914 = vpop.permute.xlu0 %2913
  %2915 = vrot.lane.b32.xlu0 %v2874, 64
  %v2916 = vpop.permute.xlu0 %2915
  %2917 = vrot.lane.b32.xlu0 %v2875, 64
  %v2918 = vpop.permute.xlu0 %2917
  %2919 = vrot.lane.b32.xlu0 %v2876, 64
  %v2920 = vpop.permute.xlu0 %2919
  %2921 = vrot.lane.b32.xlu0 %v2877, 64
  %v2922 = vpop.permute.xlu0 %2921
  %2923 = vrot.lane.b32.xlu0 %v2878, 64
  %v2924 = vpop.permute.xlu0 %2923
  %2925 = vrot.lane.b32.xlu0 %v2879, 64
  %v2926 = vpop.permute.xlu0 %2925
  %2927 = vrot.lane.b32.xlu0 %v2880, 64
  %v2928 = vpop.permute.xlu0 %2927
  %v2945 = vsel %vm102, %v2898, %v479
  %v2946 = vsel %vm102, %v2900, %v481
  %v2947 = vsel %vm102, %v2902, %v483
  %v2948 = vsel %vm102, %v2904, %v485
  %v2949 = vsel %vm102, %v2906, %v487
  %v2950 = vsel %vm102, %v2908, %v489
  %v2951 = vsel %vm102, %v2910, %v491
  %v2952 = vsel %vm102, %v2912, %v493
  %v2953 = vsel %vm102, %v2914, %v495
  %v2954 = vsel %vm102, %v2916, %v497
  %v2955 = vsel %vm102, %v2918, %v499
  %v2956 = vsel %vm102, %v2920, %v501
  %v2957 = vsel %vm102, %v2922, %v503
  %v2958 = vsel %vm102, %v2924, %v505
  %v2959 = vsel %vm102, %v2926, %v507
  %v2960 = vsel %vm102, %v2928, %v509
  %2961 = vmatpush.msra.mxu0 %v2960
  %2962 = vmatpush.msra.mxu0 %v2959
  %2963 = vmatpush.msra.mxu0 %v2958
  %2964 = vmatpush.msra.mxu0 %v2957
  %2965 = vmatpush.msra.mxu0 %v2956
  %2966 = vmatpush.msra.mxu0 %v2955
  %2967 = vmatpush.msra.mxu0 %v2954
  %2968 = vmatpush.msra.mxu0 %v2953
  %2969 = vmatpush.msra.mxu0 %v2952
  %2970 = vmatpush.msra.mxu0 %v2951
  %2971 = vmatpush.msra.mxu0 %v2950
  %2972 = vmatpush.msra.mxu0 %v2949
  %2973 = vmatpush.msra.mxu0 %v2948
  %2974 = vmatpush.msra.mxu0 %v2947
  %2975 = vmatpush.msra.mxu0 %v2946
  %2976 = vmatpush.msra.mxu0 %v2945
  %2977 = vmatmul.f32.gmra.mxu0 %v2862
  %v2978 = vpop.f32.mrf.mxu0
  %v2979 = vadd.f32 0.0, %v2978
  %2980 = vmatmul.f32.gmra.mxu0 %v2864
  %v2981 = vpop.f32.mrf.mxu0
  %v2982 = vadd.f32 0.0, %v2981
  %2983 = vdwg.mxu0
  %2986 = vrot.lane.b32.xlu0 %v2979, 96
  %v2987 = vpop.permute.xlu0 %2986
  %2988 = vrot.lane.b32.xlu0 %v2982, 96
  %v2989 = vpop.permute.xlu0 %2988
  %v2992 = vrcp.pop %v2987
  %v2993 = vmul.f32 %v2987, %v2992
  %v2994 = vsub.f32 1.0, %v2993
  %v2995 = vmul.f32 %v2992, %v2994
  %v2996 = vadd.f32 %v2992, %v2995
  %vm2997 = vweird.f32 %v2987
  %vm2998 = vweird.f32 %v2992
  %vm2999 = vmor %vm2997, %vm2998
  %v3000 = vsel %vm2999, %v2992, %v2996
  %v3001 = vand.u32 2147483647, %v2987
  %vm3002 = vcmp.eq.f32.partialorder %v3001, 8.507059e+37
  %v3003 = vand.u32 %v2987, 2147483648
  %v3004 = vor.u32 1.1754944e-38, %v3003
  %v3005 = vsel %vm3002, %v3004, %v3000
  %v3006 = vmul.f32 %v2979, %v3005
  %v3007 = vrcp.pop %v2989
  %v3008 = vmul.f32 %v2989, %v3007
  %v3009 = vsub.f32 1.0, %v3008
  %v3010 = vmul.f32 %v3007, %v3009
  %v3011 = vadd.f32 %v3007, %v3010
  %vm3012 = vweird.f32 %v2989
  %vm3013 = vweird.f32 %v3007
  %vm3014 = vmor %vm3012, %vm3013
  %v3015 = vsel %vm3014, %v3007, %v3011
  %v3016 = vand.u32 2147483647, %v2989
  %vm3017 = vcmp.eq.f32.partialorder %v3016, 8.507059e+37
  %v3018 = vand.u32 %v2989, 2147483648
  %v3019 = vor.u32 1.1754944e-38, %v3018
  %v3020 = vsel %vm3017, %v3019, %v3015
  %v3021 = vmul.f32 %v2982, %v3020
  %v3022 = vperm.slane %v2617, 1
  %v3024 = vsel %vm102, %v3006, 0
  %v3027 = vsel %vm102, %v3021, 0
  %3029 = vmatpush.msra.mxu0 0.0
  %3030 = vmatpush.msra.mxu0 0.0
  %3031 = vmatpush.msra.mxu0 0.0
  %3032 = vmatpush.msra.mxu0 0.0
  %3033 = vmatpush.msra.mxu0 0.0
  %3034 = vmatpush.msra.mxu0 0.0
  %3035 = vmatpush.msra.mxu0 0.0
  %3036 = vmatpush.msra.mxu0 0.0
  %3037 = vmatpush.msra.mxu0 0.0
  %3038 = vmatpush.msra.mxu0 0.0
  %3039 = vmatpush.msra.mxu0 0.0
  %3040 = vmatpush.msra.mxu0 0.0
  %3041 = vmatpush.msra.mxu0 %v2621
  %3042 = vmatpush.msra.mxu0 %v2620
  %3043 = vmatpush.msra.mxu0 %v2619
  %3044 = vmatpush.msra.mxu0 %v2618
  %3045 = vmatmul.f32.gmra.mxu0 %v3024
  %v3046 = vpop.f32.mrf.mxu0
  %v3047 = vadd.f32 %v3022, %v3046
  %3048 = vmatmul.f32.gmra.mxu0 %v3027
  %v3049 = vpop.f32.mrf.mxu0
  %v3050 = vadd.f32 %v3022, %v3049
  %3051 = vdwg.mxu0
  %v3052 = vadd.f32 %v2607, %v3047
  %v3053 = vadd.f32 %v2608, %v3050
  %v3054 = vsel %vm102, %v3052, 0.0
  %3055 = vadd.xlane.f32.xlu0 %v3054
  %v3056 = vpop.xlane.xlu0 %3055
  %v3057 = vsel %vm102, %v3053, 0.0
  %3058 = vadd.xlane.f32.xlu0 %v3057
  %v3059 = vpop.xlane.xlu0 %3058
  %v3060 = vmul.f32 %v3056, %v647
  %v3061 = vmul.f32 %v3059, %v647
  %v3062 = vsub.f32 %v3052, %v3060
  %v3063 = vsub.f32 %v3053, %v3061
  %v3064 = vmul.f32 %v3062, %v3062
  %v3065 = vmul.f32 %v3063, %v3063
  %v3066 = vsel %vm102, %v3064, 0.0
  %3067 = vadd.xlane.f32.xlu0 %v3066
  %v3068 = vpop.xlane.xlu0 %3067
  %v3069 = vsel %vm102, %v3065, 0.0
  %3070 = vadd.xlane.f32.xlu0 %v3069
  %v3071 = vpop.xlane.xlu0 %3070
  %v3072 = vmul.f32 %v3068, %v647
  %v3073 = vmul.f32 %v3071, %v647
  %v3074 = vadd.f32 %v3072, 1e-05
  %v3075 = vadd.f32 %v3073, 1e-05
  %v3076 = vrsqrt.pop %v3074
  %v3077 = vmul.f32 %v3076, %v3074
  %v3078 = vmul.f32 %v3077, %v3076
  %v3079 = vmul.f32 0.5, %v3078
  %v3080 = vsub.f32 1.5, %v3079
  %v3081 = vmul.f32 %v3076, %v3080
  %vm3082 = vweird.f32 %v3074
  %vm3083 = vweird.f32 %v3076
  %vm3084 = vmor %vm3082, %vm3083
  %v3085 = vsel %vm3084, %v3076, %v3081
  %v3086 = vrsqrt.pop %v3075
  %v3087 = vmul.f32 %v3086, %v3075
  %v3088 = vmul.f32 %v3087, %v3086
  %v3089 = vmul.f32 0.5, %v3088
  %v3090 = vsub.f32 1.5, %v3089
  %v3091 = vmul.f32 %v3086, %v3090
  %vm3092 = vweird.f32 %v3075
  %vm3093 = vweird.f32 %v3086
  %vm3094 = vmor %vm3092, %vm3093
  %v3095 = vsel %vm3094, %v3086, %v3091
  %v3096 = vmul.f32 %v3062, %v3085
  %v3097 = vmul.f32 %v3063, %v3095
  %v3098 = vperm.slane %v2617, 2
  %v3099 = vmul.f32 %v3096, %v3098
  %v3100 = vmul.f32 %v3097, %v3098
  %v3101 = vperm.slane %v2617, 3
  %v3102 = vadd.f32 %v3099, %v3101
  %v3103 = vadd.f32 %v3100, %v3101
  %v3104 = vperm.slane %v2617, 4
  %v3106 = vsel %vm102, %v3102, 0
  %v3109 = vsel %vm102, %v3103, 0
  %3111 = vmatpush.msra.mxu0 0.0
  %3112 = vmatpush.msra.mxu0 0.0
  %3113 = vmatpush.msra.mxu0 0.0
  %3114 = vmatpush.msra.mxu0 0.0
  %3115 = vmatpush.msra.mxu0 0.0
  %3116 = vmatpush.msra.mxu0 0.0
  %3117 = vmatpush.msra.mxu0 0.0
  %3118 = vmatpush.msra.mxu0 0.0
  %3119 = vmatpush.msra.mxu0 0.0
  %3120 = vmatpush.msra.mxu0 0.0
  %3121 = vmatpush.msra.mxu0 0.0
  %3122 = vmatpush.msra.mxu0 0.0
  %3123 = vmatpush.msra.mxu0 %v2616
  %3124 = vmatpush.msra.mxu0 %v2615
  %3125 = vmatpush.msra.mxu0 %v2614
  %3126 = vmatpush.msra.mxu0 %v2613
  %3127 = vmatmul.f32.gmra.mxu0 %v3106
  %v3128 = vpop.f32.mrf.mxu0
  %v3129 = vadd.f32 %v3104, %v3128
  %3130 = vmatmul.f32.gmra.mxu0 %v3109
  %v3131 = vpop.f32.mrf.mxu0
  %v3132 = vadd.f32 %v3104, %v3131
  %3133 = vdwg.mxu0
  %v3134 = vmax.f32 %v3129, 0.0
  %v3135 = vmax.f32 %v3132, 0.0
  %v3136 = vperm.slane %v2617, 5
  %3137 = vmatpush.msra.mxu0 %v2637
  %3138 = vmatpush.msra.mxu0 %v2636
  %3139 = vmatpush.msra.mxu0 %v2635
  %3140 = vmatpush.msra.mxu0 %v2634
  %3141 = vmatpush.msra.mxu0 %v2633
  %3142 = vmatpush.msra.mxu0 %v2632
  %3143 = vmatpush.msra.mxu0 %v2631
  %3144 = vmatpush.msra.mxu0 %v2630
  %3145 = vmatpush.msra.mxu0 %v2629
  %3146 = vmatpush.msra.mxu0 %v2628
  %3147 = vmatpush.msra.mxu0 %v2627
  %3148 = vmatpush.msra.mxu0 %v2626
  %3149 = vmatpush.msra.mxu0 %v2625
  %3150 = vmatpush.msra.mxu0 %v2624
  %3151 = vmatpush.msra.mxu0 %v2623
  %3152 = vmatpush.msra.mxu0 %v2622
  %3153 = vmatmul.f32.gmra.mxu0 %v3134
  %v3154 = vpop.f32.mrf.mxu0
  %v3155 = vadd.f32 %v3136, %v3154
  %3156 = vmatmul.f32.gmra.mxu0 %v3135
  %v3157 = vpop.f32.mrf.mxu0
  %v3158 = vadd.f32 %v3136, %v3157
  %3159 = vdwg.mxu0
  %v3160 = vadd.f32 %v3102, %v3155
  %v3161 = vadd.f32 %v3103, %v3158
  %v3162 = vsel %vm102, %v3160, 0.0
  %3163 = vadd.xlane.f32.xlu0 %v3162
  %v3164 = vpop.xlane.xlu0 %3163
  %v3165 = vsel %vm102, %v3161, 0.0
  %3166 = vadd.xlane.f32.xlu0 %v3165
  %v3167 = vpop.xlane.xlu0 %3166
  %v3168 = vmul.f32 %v3164, %v647
  %v3169 = vmul.f32 %v3167, %v647
  %v3170 = vsub.f32 %v3160, %v3168
  %v3171 = vsub.f32 %v3161, %v3169
  %v3172 = vmul.f32 %v3170, %v3170
  %v3173 = vmul.f32 %v3171, %v3171
  %v3174 = vsel %vm102, %v3172, 0.0
  %3175 = vadd.xlane.f32.xlu0 %v3174
  %v3176 = vpop.xlane.xlu0 %3175
  %v3177 = vsel %vm102, %v3173, 0.0
  %3178 = vadd.xlane.f32.xlu0 %v3177
  %v3179 = vpop.xlane.xlu0 %3178
  %v3180 = vmul.f32 %v3176, %v647
  %v3181 = vmul.f32 %v3179, %v647
  %v3182 = vadd.f32 %v3180, 1e-05
  %v3183 = vadd.f32 %v3181, 1e-05
  %v3184 = vrsqrt.pop %v3182
  %v3185 = vmul.f32 %v3184, %v3182
  %v3186 = vmul.f32 %v3185, %v3184
  %v3187 = vmul.f32 0.5, %v3186
  %v3188 = vsub.f32 1.5, %v3187
  %v3189 = vmul.f32 %v3184, %v3188
  %vm3190 = vweird.f32 %v3182
  %vm3191 = vweird.f32 %v3184
  %vm3192 = vmor %vm3190, %vm3191
  %v3193 = vsel %vm3192, %v3184, %v3189
  %v3194 = vrsqrt.pop %v3183
  %v3195 = vmul.f32 %v3194, %v3183
  %v3196 = vmul.f32 %v3195, %v3194
  %v3197 = vmul.f32 0.5, %v3196
  %v3198 = vsub.f32 1.5, %v3197
  %v3199 = vmul.f32 %v3194, %v3198
  %vm3200 = vweird.f32 %v3183
  %vm3201 = vweird.f32 %v3194
  %vm3202 = vmor %vm3200, %vm3201
  %v3203 = vsel %vm3202, %v3194, %v3199
  %v3204 = vmul.f32 %v3170, %v3193
  %v3205 = vmul.f32 %v3171, %v3203
  %v3206 = vperm.slane %v2617, 6
  %v3207 = vmul.f32 %v3204, %v3206
  %v3208 = vmul.f32 %v3205, %v3206
  %v3209 = vperm.slane %v2617, 7
  %v3210 = vadd.f32 %v3207, %v3209
  %v3211 = vadd.f32 %v3208, %v3209
  %v3212 = vld [vmem:[%s1 + $0xd0] sm:$0xff]
  %v3213 = vld [vmem:[%s1 + $0xd8] sm:$0xff]
  %v3214 = vld [vmem:[%s1 + $0xe0] sm:$0xff]
  %v3215 = vld [vmem:[%s1 + $0xe8] sm:$0xff]
  %v3216 = vld [vmem:[%s1 + $0x190] sm:$0xff]
  %v3217 = vld [vmem:[%s1 + $0x198] sm:$0xff]
  %v3218 = vld [vmem:[%s1 + $0x1a0] sm:$0xff]
  %v3219 = vld [vmem:[%s1 + $0x1a8] sm:$0xff]
  %v3220 = vld [vmem:[%s1 + $0x1d8] sm:$0xff]
  %v3221 = vld [vmem:[%s2 + $0x140] sm:$0xff]
  %v3222 = vld [vmem:[%s2 + $0x148] sm:$0xff]
  %v3223 = vld [vmem:[%s2 + $0x150] sm:$0xff]
  %v3224 = vld [vmem:[%s2 + $0x158] sm:$0xff]
  %v3225 = vld [vmem:[%s2 + $0x3e0] sm:$0xff]
  %v3226 = vld [vmem:[%s2 + $0x3e8] sm:$0xff]
  %v3227 = vld [vmem:[%s2 + $0x3f0] sm:$0xff]
  %v3228 = vld [vmem:[%s2 + $0x3f8] sm:$0xff]
  %v3229 = vld [vmem:[%s2 + $0x400] sm:$0xff]
  %v3230 = vld [vmem:[%s2 + $0x408] sm:$0xff]
  %v3231 = vld [vmem:[%s2 + $0x410] sm:$0xff]
  %v3232 = vld [vmem:[%s2 + $0x418] sm:$0xff]
  %v3233 = vld [vmem:[%s2 + $0x420] sm:$0xff]
  %v3234 = vld [vmem:[%s2 + $0x428] sm:$0xff]
  %v3235 = vld [vmem:[%s2 + $0x430] sm:$0xff]
  %v3236 = vld [vmem:[%s2 + $0x438] sm:$0xff]
  %v3237 = vld [vmem:[%s2 + $0x440] sm:$0xff]
  %v3238 = vld [vmem:[%s2 + $0x448] sm:$0xff]
  %v3239 = vld [vmem:[%s2 + $0x450] sm:$0xff]
  %v3240 = vld [vmem:[%s2 + $0x458] sm:$0xff]
  %v3241 = vperm.slane %v3220, 0
  %v3243 = vsel %vm102, %v3210, 0
  %v3246 = vsel %vm102, %v3211, 0
  %3248 = vmatpush.msra.mxu0 0.0
  %3249 = vmatpush.msra.mxu0 0.0
  %3250 = vmatpush.msra.mxu0 0.0
  %3251 = vmatpush.msra.mxu0 0.0
  %3252 = vmatpush.msra.mxu0 0.0
  %3253 = vmatpush.msra.mxu0 0.0
  %3254 = vmatpush.msra.mxu0 0.0
  %3255 = vmatpush.msra.mxu0 0.0
  %3256 = vmatpush.msra.mxu0 0.0
  %3257 = vmatpush.msra.mxu0 0.0
  %3258 = vmatpush.msra.mxu0 0.0
  %3259 = vmatpush.msra.mxu0 0.0
  %3260 = vmatpush.msra.mxu0 %v3215
  %3261 = vmatpush.msra.mxu0 %v3214
  %3262 = vmatpush.msra.mxu0 %v3213
  %3263 = vmatpush.msra.mxu0 %v3212
  %3264 = vmatmul.f32.gmra.mxu0 %v3243
  %v3265 = vpop.f32.mrf.mxu0
  %v3266 = vadd.f32 %v3241, %v3265
  %3267 = vmatmul.f32.gmra.mxu0 %v3246
  %v3268 = vpop.f32.mrf.mxu0
  %v3269 = vadd.f32 %v3241, %v3268
  %3270 = vdwg.mxu0
  %3273 = vrot.lane.b32.xlu0 %v3266, 96
  %v3274 = vpop.permute.xlu0 %3273
  %3275 = vrot.lane.b32.xlu0 %v3269, 96
  %v3276 = vpop.permute.xlu0 %3275
  %3279 = vxpose.xlu0.b32.start [1/16] %v3274, 128
  %3280 = vxpose.xlu0.b32.cont [2/16] %v3276, 128
  %3281 = vxpose.xlu0.b32.cont [3/16] 0.0, 128
  %3282 = vxpose.xlu0.b32.cont [4/16] 0.0, 128
  %3283 = vxpose.xlu0.b32.cont [5/16] 0.0, 128
  %3284 = vxpose.xlu0.b32.cont [6/16] 0.0, 128
  %3285 = vxpose.xlu0.b32.cont [7/16] 0.0, 128
  %3286 = vxpose.xlu0.b32.cont [8/16] 0.0, 128
  %3287 = vxpose.xlu0.b32.cont [9/16] 0.0, 128
  %3288 = vxpose.xlu0.b32.cont [10/16] 0.0, 128
  %3289 = vxpose.xlu0.b32.cont [11/16] 0.0, 128
  %3290 = vxpose.xlu0.b32.cont [12/16] 0.0, 128
  %3291 = vxpose.xlu0.b32.cont [13/16] 0.0, 128
  %3292 = vxpose.xlu0.b32.cont [14/16] 0.0, 128
  %3293 = vxpose.xlu0.b32.cont [15/16] 0.0, 128
  %3294 = vxpose.xlu0.b32.end [16/16] 0.0, 128
  %v3295 = vpop.trf.xlu0
  %v3296 = vpop.trf.xlu0
  %v3297 = vpop.trf.xlu0
  %v3298 = vpop.trf.xlu0
  %v3299 = vpop.trf.xlu0
  %v3300 = vpop.trf.xlu0
  %v3301 = vpop.trf.xlu0
  %v3302 = vpop.trf.xlu0
  %v3303 = vpop.trf.xlu0
  %v3304 = vpop.trf.xlu0
  %v3305 = vpop.trf.xlu0
  %v3306 = vpop.trf.xlu0
  %v3307 = vpop.trf.xlu0
  %v3308 = vpop.trf.xlu0
  %v3309 = vpop.trf.xlu0
  %v3310 = vpop.trf.xlu0
  %3315 = vrot.lane.b32.xlu0 %v3295, 16
  %v3316 = vpop.permute.xlu0 %3315
  %3317 = vrot.lane.b32.xlu0 %v3296, 16
  %v3318 = vpop.permute.xlu0 %3317
  %3319 = vrot.lane.b32.xlu0 %v3297, 16
  %v3320 = vpop.permute.xlu0 %3319
  %3321 = vrot.lane.b32.xlu0 %v3298, 16
  %v3322 = vpop.permute.xlu0 %3321
  %3327 = vrot.lane.b32.xlu0 %v3295, 32
  %v3328 = vpop.permute.xlu0 %3327
  %3329 = vrot.lane.b32.xlu0 %v3296, 32
  %v3330 = vpop.permute.xlu0 %3329
  %3331 = vrot.lane.b32.xlu0 %v3297, 32
  %v3332 = vpop.permute.xlu0 %3331
  %3333 = vrot.lane.b32.xlu0 %v3298, 32
  %v3334 = vpop.permute.xlu0 %3333
  %3339 = vrot.lane.b32.xlu0 %v3295, 48
  %v3340 = vpop.permute.xlu0 %3339
  %3341 = vrot.lane.b32.xlu0 %v3296, 48
  %v3342 = vpop.permute.xlu0 %3341
  %3343 = vrot.lane.b32.xlu0 %v3297, 48
  %v3344 = vpop.permute.xlu0 %3343
  %3345 = vrot.lane.b32.xlu0 %v3298, 48
  %v3346 = vpop.permute.xlu0 %3345
  %3351 = vrot.lane.b32.xlu0 %v3295, 64
  %v3352 = vpop.permute.xlu0 %3351
  %3353 = vrot.lane.b32.xlu0 %v3296, 64
  %v3354 = vpop.permute.xlu0 %3353
  %3355 = vrot.lane.b32.xlu0 %v3297, 64
  %v3356 = vpop.permute.xlu0 %3355
  %3357 = vrot.lane.b32.xlu0 %v3298, 64
  %v3358 = vpop.permute.xlu0 %3357
  %3363 = vrot.lane.b32.xlu0 %v3295, 80
  %v3364 = vpop.permute.xlu0 %3363
  %3365 = vrot.lane.b32.xlu0 %v3296, 80
  %v3366 = vpop.permute.xlu0 %3365
  %3367 = vrot.lane.b32.xlu0 %v3297, 80
  %v3368 = vpop.permute.xlu0 %3367
  %3369 = vrot.lane.b32.xlu0 %v3298, 80
  %v3370 = vpop.permute.xlu0 %3369
  %3375 = vrot.lane.b32.xlu0 %v3295, 96
  %v3376 = vpop.permute.xlu0 %3375
  %3377 = vrot.lane.b32.xlu0 %v3296, 96
  %v3378 = vpop.permute.xlu0 %3377
  %3379 = vrot.lane.b32.xlu0 %v3297, 96
  %v3380 = vpop.permute.xlu0 %3379
  %3381 = vrot.lane.b32.xlu0 %v3298, 96
  %v3382 = vpop.permute.xlu0 %3381
  %3387 = vrot.lane.b32.xlu0 %v3295, 112
  %v3388 = vpop.permute.xlu0 %3387
  %3389 = vrot.lane.b32.xlu0 %v3296, 112
  %v3390 = vpop.permute.xlu0 %3389
  %3391 = vrot.lane.b32.xlu0 %v3297, 112
  %v3392 = vpop.permute.xlu0 %3391
  %3393 = vrot.lane.b32.xlu0 %v3298, 112
  %v3394 = vpop.permute.xlu0 %3393
  %v3399 = vsel %vm20, %v3295, %v3316
  %v3400 = vsel %vm20, %v3296, %v3318
  %v3401 = vsel %vm20, %v3297, %v3320
  %v3402 = vsel %vm20, %v3298, %v3322
  %v3403 = vsel %vm102, %v3399, %v3328
  %v3404 = vsel %vm102, %v3400, %v3330
  %v3405 = vsel %vm102, %v3401, %v3332
  %v3406 = vsel %vm102, %v3402, %v3334
  %v3407 = vsel %vm268, %v3403, %v3340
  %v3408 = vsel %vm268, %v3404, %v3342
  %v3409 = vsel %vm268, %v3405, %v3344
  %v3410 = vsel %vm268, %v3406, %v3346
  %v3411 = vsel %vm273, %v3407, %v3352
  %v3412 = vsel %vm273, %v3408, %v3354
  %v3413 = vsel %vm273, %v3409, %v3356
  %v3414 = vsel %vm273, %v3410, %v3358
  %v3415 = vsel %vm278, %v3411, %v3364
  %v3416 = vsel %vm278, %v3412, %v3366
  %v3417 = vsel %vm278, %v3413, %v3368
  %v3418 = vsel %vm278, %v3414, %v3370
  %v3419 = vsel %vm283, %v3415, %v3376
  %v3420 = vsel %vm283, %v3416, %v3378
  %v3421 = vsel %vm283, %v3417, %v3380
  %v3422 = vsel %vm283, %v3418, %v3382
  %v3423 = vsel %vm288, %v3419, %v3388
  %v3424 = vsel %vm288, %v3420, %v3390
  %v3425 = vsel %vm288, %v3421, %v3392
  %v3426 = vsel %vm288, %v3422, %v3394
  %v3427 = vmul.f32 %v3423, %v50
  %v3428 = vmul.f32 %v3424, %v51
  %v3429 = vmul.f32 %v3425, %v52
  %v3430 = vmul.f32 %v3426, %v53
  %v3431 = vsel %vm102, %v3266, 0
  %v3433 = vsel %vm102, %v3269, 0
  %3435 = vmatpush.msra.mxu0 0.0
  %3436 = vmatpush.msra.mxu0 0.0
  %3437 = vmatpush.msra.mxu0 0.0
  %3438 = vmatpush.msra.mxu0 0.0
  %3439 = vmatpush.msra.mxu0 0.0
  %3440 = vmatpush.msra.mxu0 0.0
  %3441 = vmatpush.msra.mxu0 0.0
  %3442 = vmatpush.msra.mxu0 0.0
  %3443 = vmatpush.msra.mxu0 0.0
  %3444 = vmatpush.msra.mxu0 0.0
  %3445 = vmatpush.msra.mxu0 0.0
  %3446 = vmatpush.msra.mxu0 0.0
  %3447 = vmatpush.msra.mxu0 %v3430
  %3448 = vmatpush.msra.mxu0 %v3429
  %3449 = vmatpush.msra.mxu0 %v3428
  %3450 = vmatpush.msra.mxu0 %v3427
  %3451 = vmatmul.f32.gmra.mxu0 %v3431
  %v3452 = vpop.f32.mrf.mxu0
  %v3453 = vadd.f32 %v54, %v3452
  %3454 = vmatmul.f32.gmra.mxu0 %v3433
  %v3455 = vpop.f32.mrf.mxu0
  %v3456 = vadd.f32 %v55, %v3455
  %3457 = vdwg.mxu0
  %3458 = vmax.xlane.f32.xlu0 %v3453
  %v3459 = vpop.xlane.xlu0 %3458
  %3460 = vmax.xlane.f32.xlu0 %v3456
  %v3461 = vpop.xlane.xlu0 %3460
  %v3462 = vsub.f32 %v3453, %v3459
  %v3463 = vsub.f32 %v3456, %v3461
  %v3464 = vmul.f32 %v3462, 1.442695
  %v3465 = vpow.pop %v3464
  %v3466 = vmul.f32 %v3463, 1.442695
  %v3467 = vpow.pop %v3466
  %v3468 = vmul.f32 %v3266, %v351
  %v3469 = vmul.f32 %v3269, %v353
  %v3470 = vmul.f32 %v3266, %v355
  %v3471 = vmul.f32 %v3269, %v357
  %v3472 = vmul.f32 %v3266, %v359
  %v3473 = vmul.f32 %v3269, %v361
  %v3474 = vmul.f32 %v3266, %v363
  %v3475 = vmul.f32 %v3269, %v365
  %v3476 = vmul.f32 %v3266, %v367
  %v3477 = vmul.f32 %v3269, %v369
  %v3478 = vmul.f32 %v3266, %v371
  %v3479 = vmul.f32 %v3269, %v373
  %v3480 = vmul.f32 %v3266, %v375
  %v3481 = vmul.f32 %v3269, %v377
  %v3482 = vmul.f32 %v3266, %v379
  %v3483 = vmul.f32 %v3269, %v381
  %3500 = vrot.lane.b32.xlu0 %v3468, 64
  %v3501 = vpop.permute.xlu0 %3500
  %3502 = vrot.lane.b32.xlu0 %v3469, 64
  %v3503 = vpop.permute.xlu0 %3502
  %3504 = vrot.lane.b32.xlu0 %v3470, 64
  %v3505 = vpop.permute.xlu0 %3504
  %3506 = vrot.lane.b32.xlu0 %v3471, 64
  %v3507 = vpop.permute.xlu0 %3506
  %3508 = vrot.lane.b32.xlu0 %v3472, 64
  %v3509 = vpop.permute.xlu0 %3508
  %3510 = vrot.lane.b32.xlu0 %v3473, 64
  %v3511 = vpop.permute.xlu0 %3510
  %3512 = vrot.lane.b32.xlu0 %v3474, 64
  %v3513 = vpop.permute.xlu0 %3512
  %3514 = vrot.lane.b32.xlu0 %v3475, 64
  %v3515 = vpop.permute.xlu0 %3514
  %3516 = vrot.lane.b32.xlu0 %v3476, 64
  %v3517 = vpop.permute.xlu0 %3516
  %3518 = vrot.lane.b32.xlu0 %v3477, 64
  %v3519 = vpop.permute.xlu0 %3518
  %3520 = vrot.lane.b32.xlu0 %v3478, 64
  %v3521 = vpop.permute.xlu0 %3520
  %3522 = vrot.lane.b32.xlu0 %v3479, 64
  %v3523 = vpop.permute.xlu0 %3522
  %3524 = vrot.lane.b32.xlu0 %v3480, 64
  %v3525 = vpop.permute.xlu0 %3524
  %3526 = vrot.lane.b32.xlu0 %v3481, 64
  %v3527 = vpop.permute.xlu0 %3526
  %3528 = vrot.lane.b32.xlu0 %v3482, 64
  %v3529 = vpop.permute.xlu0 %3528
  %3530 = vrot.lane.b32.xlu0 %v3483, 64
  %v3531 = vpop.permute.xlu0 %3530
  %v3548 = vsel %vm102, %v3501, %v479
  %v3549 = vsel %vm102, %v3503, %v481
  %v3550 = vsel %vm102, %v3505, %v483
  %v3551 = vsel %vm102, %v3507, %v485
  %v3552 = vsel %vm102, %v3509, %v487
  %v3553 = vsel %vm102, %v3511, %v489
  %v3554 = vsel %vm102, %v3513, %v491
  %v3555 = vsel %vm102, %v3515, %v493
  %v3556 = vsel %vm102, %v3517, %v495
  %v3557 = vsel %vm102, %v3519, %v497
  %v3558 = vsel %vm102, %v3521, %v499
  %v3559 = vsel %vm102, %v3523, %v501
  %v3560 = vsel %vm102, %v3525, %v503
  %v3561 = vsel %vm102, %v3527, %v505
  %v3562 = vsel %vm102, %v3529, %v507
  %v3563 = vsel %vm102, %v3531, %v509
  %3564 = vmatpush.msra.mxu0 %v3563
  %3565 = vmatpush.msra.mxu0 %v3562
  %3566 = vmatpush.msra.mxu0 %v3561
  %3567 = vmatpush.msra.mxu0 %v3560
  %3568 = vmatpush.msra.mxu0 %v3559
  %3569 = vmatpush.msra.mxu0 %v3558
  %3570 = vmatpush.msra.mxu0 %v3557
  %3571 = vmatpush.msra.mxu0 %v3556
  %3572 = vmatpush.msra.mxu0 %v3555
  %3573 = vmatpush.msra.mxu0 %v3554
  %3574 = vmatpush.msra.mxu0 %v3553
  %3575 = vmatpush.msra.mxu0 %v3552
  %3576 = vmatpush.msra.mxu0 %v3551
  %3577 = vmatpush.msra.mxu0 %v3550
  %3578 = vmatpush.msra.mxu0 %v3549
  %3579 = vmatpush.msra.mxu0 %v3548
  %3580 = vmatmul.f32.gmra.mxu0 %v3465
  %v3581 = vpop.f32.mrf.mxu0
  %v3582 = vadd.f32 0.0, %v3581
  %3583 = vmatmul.f32.gmra.mxu0 %v3467
  %v3584 = vpop.f32.mrf.mxu0
  %v3585 = vadd.f32 0.0, %v3584
  %3586 = vdwg.mxu0
  %3589 = vrot.lane.b32.xlu0 %v3582, 96
  %v3590 = vpop.permute.xlu0 %3589
  %3591 = vrot.lane.b32.xlu0 %v3585, 96
  %v3592 = vpop.permute.xlu0 %3591
  %v3595 = vrcp.pop %v3590
  %v3596 = vmul.f32 %v3590, %v3595
  %v3597 = vsub.f32 1.0, %v3596
  %v3598 = vmul.f32 %v3595, %v3597
  %v3599 = vadd.f32 %v3595, %v3598
  %vm3600 = vweird.f32 %v3590
  %vm3601 = vweird.f32 %v3595
  %vm3602 = vmor %vm3600, %vm3601
  %v3603 = vsel %vm3602, %v3595, %v3599
  %v3604 = vand.u32 2147483647, %v3590
  %vm3605 = vcmp.eq.f32.partialorder %v3604, 8.507059e+37
  %v3606 = vand.u32 %v3590, 2147483648
  %v3607 = vor.u32 1.1754944e-38, %v3606
  %v3608 = vsel %vm3605, %v3607, %v3603
  %v3609 = vmul.f32 %v3582, %v3608
  %v3610 = vrcp.pop %v3592
  %v3611 = vmul.f32 %v3592, %v3610
  %v3612 = vsub.f32 1.0, %v3611
  %v3613 = vmul.f32 %v3610, %v3612
  %v3614 = vadd.f32 %v3610, %v3613
  %vm3615 = vweird.f32 %v3592
  %vm3616 = vweird.f32 %v3610
  %vm3617 = vmor %vm3615, %vm3616
  %v3618 = vsel %vm3617, %v3610, %v3614
  %v3619 = vand.u32 2147483647, %v3592
  %vm3620 = vcmp.eq.f32.partialorder %v3619, 8.507059e+37
  %v3621 = vand.u32 %v3592, 2147483648
  %v3622 = vor.u32 1.1754944e-38, %v3621
  %v3623 = vsel %vm3620, %v3622, %v3618
  %v3624 = vmul.f32 %v3585, %v3623
  %v3625 = vperm.slane %v3220, 1
  %v3627 = vsel %vm102, %v3609, 0
  %v3630 = vsel %vm102, %v3624, 0
  %3632 = vmatpush.msra.mxu0 0.0
  %3633 = vmatpush.msra.mxu0 0.0
  %3634 = vmatpush.msra.mxu0 0.0
  %3635 = vmatpush.msra.mxu0 0.0
  %3636 = vmatpush.msra.mxu0 0.0
  %3637 = vmatpush.msra.mxu0 0.0
  %3638 = vmatpush.msra.mxu0 0.0
  %3639 = vmatpush.msra.mxu0 0.0
  %3640 = vmatpush.msra.mxu0 0.0
  %3641 = vmatpush.msra.mxu0 0.0
  %3642 = vmatpush.msra.mxu0 0.0
  %3643 = vmatpush.msra.mxu0 0.0
  %3644 = vmatpush.msra.mxu0 %v3224
  %3645 = vmatpush.msra.mxu0 %v3223
  %3646 = vmatpush.msra.mxu0 %v3222
  %3647 = vmatpush.msra.mxu0 %v3221
  %3648 = vmatmul.f32.gmra.mxu0 %v3627
  %v3649 = vpop.f32.mrf.mxu0
  %v3650 = vadd.f32 %v3625, %v3649
  %3651 = vmatmul.f32.gmra.mxu0 %v3630
  %v3652 = vpop.f32.mrf.mxu0
  %v3653 = vadd.f32 %v3625, %v3652
  %3654 = vdwg.mxu0
  %v3655 = vadd.f32 %v3210, %v3650
  %v3656 = vadd.f32 %v3211, %v3653
  %v3657 = vsel %vm102, %v3655, 0.0
  %3658 = vadd.xlane.f32.xlu0 %v3657
  %v3659 = vpop.xlane.xlu0 %3658
  %v3660 = vsel %vm102, %v3656, 0.0
  %3661 = vadd.xlane.f32.xlu0 %v3660
  %v3662 = vpop.xlane.xlu0 %3661
  %v3663 = vmul.f32 %v3659, %v647
  %v3664 = vmul.f32 %v3662, %v647
  %v3665 = vsub.f32 %v3655, %v3663
  %v3666 = vsub.f32 %v3656, %v3664
  %v3667 = vmul.f32 %v3665, %v3665
  %v3668 = vmul.f32 %v3666, %v3666
  %v3669 = vsel %vm102, %v3667, 0.0
  %3670 = vadd.xlane.f32.xlu0 %v3669
  %v3671 = vpop.xlane.xlu0 %3670
  %v3672 = vsel %vm102, %v3668, 0.0
  %3673 = vadd.xlane.f32.xlu0 %v3672
  %v3674 = vpop.xlane.xlu0 %3673
  %v3675 = vmul.f32 %v3671, %v647
  %v3676 = vmul.f32 %v3674, %v647
  %v3677 = vadd.f32 %v3675, 1e-05
  %v3678 = vadd.f32 %v3676, 1e-05
  %v3679 = vrsqrt.pop %v3677
  %v3680 = vmul.f32 %v3679, %v3677
  %v3681 = vmul.f32 %v3680, %v3679
  %v3682 = vmul.f32 0.5, %v3681
  %v3683 = vsub.f32 1.5, %v3682
  %v3684 = vmul.f32 %v3679, %v3683
  %vm3685 = vweird.f32 %v3677
  %vm3686 = vweird.f32 %v3679
  %vm3687 = vmor %vm3685, %vm3686
  %v3688 = vsel %vm3687, %v3679, %v3684
  %v3689 = vrsqrt.pop %v3678
  %v3690 = vmul.f32 %v3689, %v3678
  %v3691 = vmul.f32 %v3690, %v3689
  %v3692 = vmul.f32 0.5, %v3691
  %v3693 = vsub.f32 1.5, %v3692
  %v3694 = vmul.f32 %v3689, %v3693
  %vm3695 = vweird.f32 %v3678
  %vm3696 = vweird.f32 %v3689
  %vm3697 = vmor %vm3695, %vm3696
  %v3698 = vsel %vm3697, %v3689, %v3694
  %v3699 = vmul.f32 %v3665, %v3688
  %v3700 = vmul.f32 %v3666, %v3698
  %v3701 = vperm.slane %v3220, 2
  %v3702 = vmul.f32 %v3699, %v3701
  %v3703 = vmul.f32 %v3700, %v3701
  %v3704 = vperm.slane %v3220, 3
  %v3705 = vadd.f32 %v3702, %v3704
  %v3706 = vadd.f32 %v3703, %v3704
  %v3707 = vperm.slane %v3220, 4
  %v3709 = vsel %vm102, %v3705, 0
  %v3712 = vsel %vm102, %v3706, 0
  %3714 = vmatpush.msra.mxu0 0.0
  %3715 = vmatpush.msra.mxu0 0.0
  %3716 = vmatpush.msra.mxu0 0.0
  %3717 = vmatpush.msra.mxu0 0.0
  %3718 = vmatpush.msra.mxu0 0.0
  %3719 = vmatpush.msra.mxu0 0.0
  %3720 = vmatpush.msra.mxu0 0.0
  %3721 = vmatpush.msra.mxu0 0.0
  %3722 = vmatpush.msra.mxu0 0.0
  %3723 = vmatpush.msra.mxu0 0.0
  %3724 = vmatpush.msra.mxu0 0.0
  %3725 = vmatpush.msra.mxu0 0.0
  %3726 = vmatpush.msra.mxu0 %v3219
  %3727 = vmatpush.msra.mxu0 %v3218
  %3728 = vmatpush.msra.mxu0 %v3217
  %3729 = vmatpush.msra.mxu0 %v3216
  %3730 = vmatmul.f32.gmra.mxu0 %v3709
  %v3731 = vpop.f32.mrf.mxu0
  %v3732 = vadd.f32 %v3707, %v3731
  %3733 = vmatmul.f32.gmra.mxu0 %v3712
  %v3734 = vpop.f32.mrf.mxu0
  %v3735 = vadd.f32 %v3707, %v3734
  %3736 = vdwg.mxu0
  %v3737 = vmax.f32 %v3732, 0.0
  %v3738 = vmax.f32 %v3735, 0.0
  %v3739 = vperm.slane %v3220, 5
  %3740 = vmatpush.msra.mxu0 %v3240
  %3741 = vmatpush.msra.mxu0 %v3239
  %3742 = vmatpush.msra.mxu0 %v3238
  %3743 = vmatpush.msra.mxu0 %v3237
  %3744 = vmatpush.msra.mxu0 %v3236
  %3745 = vmatpush.msra.mxu0 %v3235
  %3746 = vmatpush.msra.mxu0 %v3234
  %3747 = vmatpush.msra.mxu0 %v3233
  %3748 = vmatpush.msra.mxu0 %v3232
  %3749 = vmatpush.msra.mxu0 %v3231
  %3750 = vmatpush.msra.mxu0 %v3230
  %3751 = vmatpush.msra.mxu0 %v3229
  %3752 = vmatpush.msra.mxu0 %v3228
  %3753 = vmatpush.msra.mxu0 %v3227
  %3754 = vmatpush.msra.mxu0 %v3226
  %3755 = vmatpush.msra.mxu0 %v3225
  %3756 = vmatmul.f32.gmra.mxu0 %v3737
  %v3757 = vpop.f32.mrf.mxu0
  %v3758 = vadd.f32 %v3739, %v3757
  %3759 = vmatmul.f32.gmra.mxu0 %v3738
  %v3760 = vpop.f32.mrf.mxu0
  %v3761 = vadd.f32 %v3739, %v3760
  %3762 = vdwg.mxu0
  %v3763 = vadd.f32 %v3705, %v3758
  %v3764 = vadd.f32 %v3706, %v3761
  %v3765 = vsel %vm102, %v3763, 0.0
  %3766 = vadd.xlane.f32.xlu0 %v3765
  %v3767 = vpop.xlane.xlu0 %3766
  %v3768 = vsel %vm102, %v3764, 0.0
  %3769 = vadd.xlane.f32.xlu0 %v3768
  %v3770 = vpop.xlane.xlu0 %3769
  %v3771 = vmul.f32 %v3767, %v647
  %v3772 = vmul.f32 %v3770, %v647
  %v3773 = vsub.f32 %v3763, %v3771
  %v3774 = vsub.f32 %v3764, %v3772
  %v3775 = vmul.f32 %v3773, %v3773
  %v3776 = vmul.f32 %v3774, %v3774
  %v3777 = vsel %vm102, %v3775, 0.0
  %3778 = vadd.xlane.f32.xlu0 %v3777
  %v3779 = vpop.xlane.xlu0 %3778
  %v3780 = vsel %vm102, %v3776, 0.0
  %3781 = vadd.xlane.f32.xlu0 %v3780
  %v3782 = vpop.xlane.xlu0 %3781
  %v3783 = vmul.f32 %v3779, %v647
  %v3784 = vmul.f32 %v3782, %v647
  %v3785 = vadd.f32 %v3783, 1e-05
  %v3786 = vadd.f32 %v3784, 1e-05
  %v3787 = vrsqrt.pop %v3785
  %v3788 = vmul.f32 %v3787, %v3785
  %v3789 = vmul.f32 %v3788, %v3787
  %v3790 = vmul.f32 0.5, %v3789
  %v3791 = vsub.f32 1.5, %v3790
  %v3792 = vmul.f32 %v3787, %v3791
  %vm3793 = vweird.f32 %v3785
  %vm3794 = vweird.f32 %v3787
  %vm3795 = vmor %vm3793, %vm3794
  %v3796 = vsel %vm3795, %v3787, %v3792
  %v3797 = vrsqrt.pop %v3786
  %v3798 = vmul.f32 %v3797, %v3786
  %v3799 = vmul.f32 %v3798, %v3797
  %v3800 = vmul.f32 0.5, %v3799
  %v3801 = vsub.f32 1.5, %v3800
  %v3802 = vmul.f32 %v3797, %v3801
  %vm3803 = vweird.f32 %v3786
  %vm3804 = vweird.f32 %v3797
  %vm3805 = vmor %vm3803, %vm3804
  %v3806 = vsel %vm3805, %v3797, %v3802
  %v3807 = vmul.f32 %v3773, %v3796
  %v3808 = vmul.f32 %v3774, %v3806
  %v3809 = vperm.slane %v3220, 6
  %v3810 = vmul.f32 %v3807, %v3809
  %v3811 = vmul.f32 %v3808, %v3809
  %v3812 = vperm.slane %v3220, 7
  %v3813 = vadd.f32 %v3810, %v3812
  %v3814 = vadd.f32 %v3811, %v3812
  %v3815 = vld [vmem:[%s1 + $0x1e0] sm:$0xff]
  %v3816 = vld [vmem:[%s1 + $0x1e8] sm:$0xff]
  %v3817 = vld [vmem:[%s1 + $0x1f0] sm:$0xff]
  %v3818 = vld [vmem:[%s1 + $0x1f8] sm:$0xff]
  %v3819 = vld [vmem:[%s1 + $0x200] sm:$0xff]
  %v3820 = vld [vmem:[%s2 + $0x460] sm:$0xff]
  %v3821 = vld [vmem:[%s2 + $0x468] sm:$0xff]
  %v3822 = vld [vmem:[%s2 + $0x470] sm:$0xff]
  %v3823 = vld [vmem:[%s2 + $0x478] sm:$0xff]
  %v3824 = vld [vmem:[%s2 + $0x480] sm:$0xff]
  %v3825 = vld [vmem:[%s2 + $0x488] sm:$0xff]
  %v3826 = vld [vmem:[%s2 + $0x490] sm:$0xff]
  %v3827 = vld [vmem:[%s2 + $0x498] sm:$0xff]
  %v3828 = vld [vmem:[%s2 + $0x4a0] sm:$0xff]
  %v3829 = vld [vmem:[%s2 + $0x4a8] sm:$0xff]
  %v3830 = vld [vmem:[%s2 + $0x4b0] sm:$0xff]
  %v3831 = vld [vmem:[%s2 + $0x4b8] sm:$0xff]
  %v3832 = vld [vmem:[%s2 + $0x4c0] sm:$0xff]
  %v3833 = vld [vmem:[%s2 + $0x4c8] sm:$0xff]
  %v3834 = vld [vmem:[%s2 + $0x4d0] sm:$0xff]
  %v3835 = vld [vmem:[%s2 + $0x4d8] sm:$0xff]
  %v3836 = vperm.slane %v3819, 0
  %v3838 = vsel %vm102, %v3813, 0
  %v3841 = vsel %vm102, %v3814, 0
  %3843 = vmatpush.msra.mxu0 0.0
  %3844 = vmatpush.msra.mxu0 0.0
  %3845 = vmatpush.msra.mxu0 0.0
  %3846 = vmatpush.msra.mxu0 0.0
  %3847 = vmatpush.msra.mxu0 0.0
  %3848 = vmatpush.msra.mxu0 0.0
  %3849 = vmatpush.msra.mxu0 0.0
  %3850 = vmatpush.msra.mxu0 0.0
  %3851 = vmatpush.msra.mxu0 0.0
  %3852 = vmatpush.msra.mxu0 0.0
  %3853 = vmatpush.msra.mxu0 0.0
  %3854 = vmatpush.msra.mxu0 0.0
  %3855 = vmatpush.msra.mxu0 %v3818
  %3856 = vmatpush.msra.mxu0 %v3817
  %3857 = vmatpush.msra.mxu0 %v3816
  %3858 = vmatpush.msra.mxu0 %v3815
  %3859 = vmatmul.f32.gmra.mxu0 %v3838
  %v3860 = vpop.f32.mrf.mxu0
  %v3861 = vadd.f32 %v3836, %v3860
  %3862 = vmatmul.f32.gmra.mxu0 %v3841
  %v3863 = vpop.f32.mrf.mxu0
  %v3864 = vadd.f32 %v3836, %v3863
  %3865 = vdwg.mxu0
  %v3866 = vperm.slane %v3819, 1
  %3867 = vmatpush.msra.mxu0 %v3835
  %3868 = vmatpush.msra.mxu0 %v3834
  %3869 = vmatpush.msra.mxu0 %v3833
  %3870 = vmatpush.msra.mxu0 %v3832
  %3871 = vmatpush.msra.mxu0 %v3831
  %3872 = vmatpush.msra.mxu0 %v3830
  %3873 = vmatpush.msra.mxu0 %v3829
  %3874 = vmatpush.msra.mxu0 %v3828
  %3875 = vmatpush.msra.mxu0 %v3827
  %3876 = vmatpush.msra.mxu0 %v3826
  %3877 = vmatpush.msra.mxu0 %v3825
  %3878 = vmatpush.msra.mxu0 %v3824
  %3879 = vmatpush.msra.mxu0 %v3823
  %3880 = vmatpush.msra.mxu0 %v3822
  %3881 = vmatpush.msra.mxu0 %v3821
  %3882 = vmatpush.msra.mxu0 %v3820
  %3883 = vmatmul.f32.gmra.mxu0 %v3861
  %v3884 = vpop.f32.mrf.mxu0
  %v3885 = vadd.f32 %v3866, %v3884
  %3886 = vmatmul.f32.gmra.mxu0 %v3864
  %v3887 = vpop.f32.mrf.mxu0
  %v3888 = vadd.f32 %v3866, %v3887
  %3889 = vdwg.mxu0
  %vm3890 = vcmask 15360
  %3891 = vst.msk [vmem:[%s3] sm:$0xff] %vm3890, %v3885
  %3892 = vst.msk [vmem:[%s3 + $0x8] sm:$0xff] %vm3890, %v3888
  // Predicated region
  $region14: #{time_series_transformer.1} parent=0 // pred_check
    _
  $region15: #{time_series_transformer.1} parent=0 // pred_check_branch
    %3894 = sbr.rel (0) target = $region17
  $region16: #{time_series_transformer.1} parent=0 // pred_region
    _
  $region17: #{time_series_transformer.1} parent=0 // pred_fallthru
    _
  // Predicated region
  $region18: #{time_series_transformer.1} parent=0 // pred_check
    _
  $region19: #{time_series_transformer.1} parent=0 // pred_check_branch
    %3896 = sbr.rel (0) target = $region21
  $region20: #{time_series_transformer.1} parent=0 // pred_region
    _
  $region21: #{time_series_transformer.1} parent=0 // pred_fallthru
    _

</llo_original>
